<compile_context>
chip_gen: v7x
topology: tpu7x:2x2x1
jax: 0.10.0
libtpu: 0.0.40
codegen_flags: <defaults>
</compile_context>

<pallas_src>
import functools

import jax
import jax.numpy as jnp
from jax.experimental import pallas as pl
from jax.experimental.pallas import tpu as pltpu

HP = 128  # padded hidden size (lane-aligned)


def _lstm_kernel(x_ref, w_ref, misc_ref, out_ref, *, B, T, I, Hp):
    G = 4 * Hp
    f32 = jnp.float32

    # Zero-cost static Ref views into the bf16 matmul-weight slab (no loads here;
    # avoids materializing hoisted whole-array copies of the large weights).
    whh0 = w_ref.at[0 * Hp:1 * Hp, :]        # (Hp, 4Hp) bf16
    wih1 = w_ref.at[1 * Hp:2 * Hp, :]        # (Hp, 4Hp) bf16
    whh1 = w_ref.at[2 * Hp:3 * Hp, :]        # (Hp, 4Hp) bf16

    # Small f32 parameters: hoist once (a handful of vregs), biases pre-broadcast.
    wih0 = misc_ref[0:I, :]                                   # (I, 4Hp)
    b0b = jnp.broadcast_to(misc_ref[I:I + 1, :], (B, G))      # hoisted broadcast
    b1b = jnp.broadcast_to(misc_ref[I + 1:I + 2, :], (B, G))
    wfc = misc_ref[I + 2:I + 3, 0:Hp]                         # (1, Hp)
    bfc = misc_ref[I + 3:I + 4, 0:1]                          # (1, 1)

    def gate_act(g):
        # Hp multiple of 128 -> lane-aligned static slices (free views).
        i = jax.nn.sigmoid(g[:, 0 * Hp:1 * Hp])
        f = jax.nn.sigmoid(g[:, 1 * Hp:2 * Hp])
        c = jnp.tanh(g[:, 2 * Hp:3 * Hp])
        o = jax.nn.sigmoid(g[:, 3 * Hp:4 * Hp])
        return i, f, c, o

    h0 = jnp.zeros((B, Hp), f32)
    c0 = jnp.zeros((B, Hp), f32)
    h1 = jnp.zeros((B, Hp), f32)
    c1 = jnp.zeros((B, Hp), f32)
    h0b = h0.astype(jnp.bfloat16)
    h1b = h1.astype(jnp.bfloat16)

    # Recurrence: fully-unrolled static time loop (T is small & static).
    for t in range(T):
        # Layer-0 input projection: tiny input size -> pure VPU broadcast-multiply,
        # computed in-loop (off the critical path; no vregs pinned across steps).
        x_t = x_ref[t]                                        # (B, I), static index
        g0 = b0b
        for i in range(I):
            g0 = g0 + x_t[:, i:i + 1] * wih0[i:i + 1, :]      # (B,1)*(1,4Hp)

        # Layer 0: recurrent matmul (bf16 operands, f32 accumulate).
        g0 = g0 + jnp.dot(h0b, whh0[...], preferred_element_type=f32)
        i0, f0, gg0, o0 = gate_act(g0)
        c0 = f0 * c0 + i0 * gg0
        h0 = o0 * jnp.tanh(c0)
        h0b = h0.astype(jnp.bfloat16)

        # Layer 1: two accumulated matmuls (no per-step concat).
        g1 = (b1b
              + jnp.dot(h0b, wih1[...], preferred_element_type=f32)
              + jnp.dot(h1b, whh1[...], preferred_element_type=f32))
        i1, f1, gg1, o1 = gate_act(g1)
        c1 = f1 * c1 + i1 * gg1
        h1 = o1 * jnp.tanh(c1)
        h1b = h1.astype(jnp.bfloat16)

    # FC on last timestep's top-layer hidden: VPU multiply + lane reduce (f32).
    out = jnp.sum(h1 * wfc, axis=-1, keepdims=True) + bfc
    out_ref[...] = out.astype(out_ref.dtype)


def lstm_model_forward(x, packed, *, hidden_pad=HP):
    """x: (B, T, I) float32.  Returns (B, 1) float32."""
    B, T, I = x.shape
    w_slab, misc = packed

    # Time-major layout so each per-step read is a clean leading-dim index.
    x_tm = jnp.transpose(x, (1, 0, 2))                        # (T, B, I)

    kernel = functools.partial(_lstm_kernel, B=B, T=T, I=I, Hp=hidden_pad)
    vmem = pl.BlockSpec(memory_space=pltpu.MemorySpace.VMEM)

    # Single invocation, no grid: 3 input DMAs (x + 2 slabs), all < 1 MiB total.
    return pl.pallas_call(
        kernel,
        out_shape=jax.ShapeDtypeStruct((B, 1), jnp.float32),
        in_specs=[vmem, vmem, vmem],
        out_specs=vmem,
    )(x_tm, w_slab, misc)


def init_raw_params(key, input_size, hidden_size):
    """Deterministic params matching PyTorch LSTM shapes (gate order i, f, g, o)."""
    H = hidden_size
    ks = jax.random.split(key, 10)
    u = lambda k, shape: jax.random.uniform(k, shape, jnp.float32,
                                            minval=-0.2, maxval=0.2)
    w_ih0 = u(ks[0], (4 * H, input_size))
    w_hh0 = u(ks[1], (4 * H, H))
    b_ih0 = u(ks[2], (4 * H,))
    b_hh0 = u(ks[3], (4 * H,))
    w_ih1 = u(ks[4], (4 * H, H))
    w_hh1 = u(ks[5], (4 * H, H))
    b_ih1 = u(ks[6], (4 * H,))
    b_hh1 = u(ks[7], (4 * H,))
    w_fc = u(ks[8], (1, H))
    b_fc = u(ks[9], (1,))
    return (w_ih0, w_hh0, b_ih0, b_hh0, w_ih1, w_hh1, b_ih1, b_hh1, w_fc, b_fc)


def pack_params(raw, hidden_size, hidden_pad=HP):
    """Pack all parameters into two slabs (one DMA each).

    Slab 1 (bf16, (3*Hp, 4*Hp)): rows [0:Hp]=whh0, [Hp:2Hp]=wih1, [2Hp:3Hp]=whh1,
      each transposed to (K, 4Hp) with per-gate zero-padding H -> Hp.
    Slab 2 (f32, (8, 4*Hp)): rows [0:I]=wih0, [I]=b_ih0+b_hh0, [I+1]=b_ih1+b_hh1,
      [I+2, :Hp]=w_fc, [I+3, 0]=b_fc.
    """
    (w_ih0, w_hh0, b_ih0, b_hh0,
     w_ih1, w_hh1, b_ih1, b_hh1, w_fc, b_fc) = raw
    H, Hp = hidden_size, hidden_pad
    I = w_ih0.shape[1]
    G = 4 * Hp

    def pad_gate_cols(w_t):  # (rows, 4H) -> (rows, 4Hp), gate-blocked, zero pad
        rows = w_t.shape[0]
        out = jnp.zeros((rows, G), jnp.float32)
        for k in range(4):
            out = out.at[:, k * Hp:k * Hp + H].set(w_t[:, k * H:(k + 1) * H])
        return out

    def pad_rows(w, rows_to):  # (r, c) -> (rows_to, c), zero pad
        return jnp.zeros((rows_to, w.shape[1]), jnp.float32).at[:w.shape[0]].set(w)

    whh0_p = pad_rows(pad_gate_cols(w_hh0.T), Hp)                     # (Hp, 4Hp)
    wih1_p = pad_rows(pad_gate_cols(w_ih1.T), Hp)                     # (Hp, 4Hp)
    whh1_p = pad_rows(pad_gate_cols(w_hh1.T), Hp)                     # (Hp, 4Hp)
    w_slab = jnp.concatenate([whh0_p, wih1_p, whh1_p],
                             axis=0).astype(jnp.bfloat16)             # (3Hp, 4Hp)

    rows = I + 4
    rows_padded = ((rows + 7) // 8) * 8
    misc = jnp.zeros((rows_padded, G), jnp.float32)
    misc = misc.at[0:I, :].set(pad_gate_cols(w_ih0.T))                # (I, 4Hp)
    misc = misc.at[I, :].set(pad_gate_cols((b_ih0 + b_hh0)[None, :])[0])
    misc = misc.at[I + 1, :].set(pad_gate_cols((b_ih1 + b_hh1)[None, :])[0])
    misc = misc.at[I + 2, :H].set(w_fc[0])
    misc = misc.at[I + 3, 0].set(b_fc[0])

    return w_slab, misc


def reference_forward(x, raw, hidden_size):
    """Pure-JAX f32 reference matching PyTorch nn.LSTM + Linear semantics."""
    (w_ih0, w_hh0, b_ih0, b_hh0,
     w_ih1, w_hh1, b_ih1, b_hh1, w_fc, b_fc) = raw
    B, T, I = x.shape
    H = hidden_size

    def cell(x_t, h, c, w_ih, w_hh, b_ih, b_hh):
        g = x_t @ w_ih.T + b_ih + h @ w_hh.T + b_hh
        i = jax.nn.sigmoid(g[:, 0 * H:1 * H])
        f = jax.nn.sigmoid(g[:, 1 * H:2 * H])
        gg = jnp.tanh(g[:, 2 * H:3 * H])
        o = jax.nn.sigmoid(g[:, 3 * H:4 * H])
        c = f * c + i * gg
        h = o * jnp.tanh(c)
        return h, c

    h0 = jnp.zeros((B, H), jnp.float32)
    c0 = jnp.zeros((B, H), jnp.float32)
    h1 = jnp.zeros((B, H), jnp.float32)
    c1 = jnp.zeros((B, H), jnp.float32)
    for t in range(T):
        h0, c0 = cell(x[:, t, :], h0, c0, w_ih0, w_hh0, b_ih0, b_hh0)
        h1, c1 = cell(h0, h1, c1, w_ih1, w_hh1, b_ih1, b_hh1)
    return h1 @ w_fc.T + b_fc


if __name__ == "__main__":
    INPUT_SIZE = 1
    HIDDEN_SIZE = 50   # module default
    BATCH = 2
    SEQ = 8

    key = jax.random.PRNGKey(0)
    k_x, k_p = jax.random.split(key)
    x = jax.random.normal(k_x, (BATCH, SEQ, INPUT_SIZE), jnp.float32)

    raw = init_raw_params(k_p, INPUT_SIZE, HIDDEN_SIZE)
    packed = pack_params(raw, HIDDEN_SIZE, HP)

    out = lstm_model_forward(x, packed, hidden_pad=HP)
    out = jax.block_until_ready(out)

    ref = reference_forward(x, raw, HIDDEN_SIZE)
    assert out.shape == (BATCH, 1)
    # Tolerance relaxed vs. the pure-f32 version because the recurrent matmuls now
    # use bf16 operands (f32 accumulation) per the perf review.
    assert jnp.allclose(out, ref, atol=3e-2, rtol=3e-2), (out, ref)

    print("KERNEL_OK")
</pallas_src>

<mosaic_0001>
module attributes {stable_mosaic.version = 11 : i64} {
  func.func @_lstm_kernel(%arg0: memref<8x2x1xf32, #tpu.memory_space<vmem>>, %arg1: memref<384x512xbf16, #tpu.memory_space<vmem>>, %arg2: memref<8x512xf32, #tpu.memory_space<vmem>>, %arg3: memref<2x1xf32, #tpu.memory_space<vmem>>) attributes {dimension_semantics = [], scalar_prefetch = 0 : i64, scratch_operands = 0 : i64, tpu.core_type = #tpu.core_type<tc>} {
    %c0 = arith.constant 0 : index
    %c0_0 = arith.constant 0 : index
    %0 = vector.load %arg2[%c0, %c0_0] : memref<8x512xf32, #tpu.memory_space<vmem>>, vector<1x512xf32>
    %c1 = arith.constant 1 : index
    %c0_1 = arith.constant 0 : index
    %1 = vector.load %arg2[%c1, %c0_1] : memref<8x512xf32, #tpu.memory_space<vmem>>, vector<1x512xf32>
    %2 = vector.shape_cast %1 : vector<1x512xf32> to vector<1x512xf32>
    %3 = vector.broadcast %2 : vector<1x512xf32> to vector<2x512xf32>
    %c2 = arith.constant 2 : index
    %c0_2 = arith.constant 0 : index
    %4 = vector.load %arg2[%c2, %c0_2] : memref<8x512xf32, #tpu.memory_space<vmem>>, vector<1x512xf32>
    %5 = vector.shape_cast %4 : vector<1x512xf32> to vector<1x512xf32>
    %6 = vector.broadcast %5 : vector<1x512xf32> to vector<2x512xf32>
    %c3 = arith.constant 3 : index
    %c0_3 = arith.constant 0 : index
    %7 = vector.load %arg2[%c3, %c0_3] : memref<8x512xf32, #tpu.memory_space<vmem>>, vector<1x128xf32>
    %c4 = arith.constant 4 : index
    %c0_4 = arith.constant 0 : index
    %8 = vector.load %arg2[%c4, %c0_4] : memref<8x512xf32, #tpu.memory_space<vmem>>, vector<1x1xf32>
    %cst = arith.constant 0.000000e+00 : f32
    %9 = vector.broadcast %cst : f32 to vector<2x128xf32>
    %cst_5 = arith.constant 0.000000e+00 : f32
    %10 = vector.broadcast %cst_5 : f32 to vector<2x128xf32>
    %cst_6 = arith.constant 0.000000e+00 : f32
    %11 = vector.broadcast %cst_6 : f32 to vector<2x128xf32>
    %cst_7 = arith.constant 0.000000e+00 : f32
    %12 = vector.broadcast %cst_7 : f32 to vector<2x128xf32>
    %13 = arith.truncf %9 : vector<2x128xf32> to vector<2x128xbf16>
    %14 = arith.truncf %11 : vector<2x128xf32> to vector<2x128xbf16>
    %c0_8 = arith.constant 0 : index
    %c0_9 = arith.constant 0 : index
    %c0_10 = arith.constant 0 : index
    %15 = vector.load %arg0[%c0_8, %c0_9, %c0_10] : memref<8x2x1xf32, #tpu.memory_space<vmem>>, vector<1x2x1xf32>
    %16 = vector.shape_cast %15 : vector<1x2x1xf32> to vector<2x1xf32>
    %17 = vector.broadcast %16 : vector<2x1xf32> to vector<2x512xf32>
    %18 = vector.broadcast %0 : vector<1x512xf32> to vector<2x512xf32>
    %19 = arith.mulf %17, %18 : vector<2x512xf32>
    %20 = arith.addf %3, %19 : vector<2x512xf32>
    %c0_11 = arith.constant 0 : index
    %c0_12 = arith.constant 0 : index
    %21 = vector.load %arg1[%c0_11, %c0_12] : memref<384x512xbf16, #tpu.memory_space<vmem>>, vector<128x512xbf16>
    %cst_13 = arith.constant dense<0.000000e+00> : vector<2x512xf32>
    %22 = tpu.matmul %13, %21, %cst_13 {dimension_numbers = #tpu.dot_dimension_numbers<[1], [0], [0], [1], [0, 0, 1, 1], [], []>} : vector<2x128xbf16>, vector<128x512xbf16>, vector<2x512xf32> -> vector<2x512xf32>
    %23 = arith.addf %20, %22 : vector<2x512xf32>
    %24 = vector.extract_strided_slice %23 {offsets = [0, 0], sizes = [2, 128], strides = [1, 1]} : vector<2x512xf32> to vector<2x128xf32>
    %25 = arith.negf %24 : vector<2x128xf32>
    %26 = math.exp %25 : vector<2x128xf32>
    %cst_14 = arith.constant 1.000000e+00 : f32
    %27 = vector.broadcast %cst_14 : f32 to vector<2x128xf32>
    %28 = arith.addf %27, %26 : vector<2x128xf32>
    %29 = arith.divf %27, %28 : vector<2x128xf32>
    %30 = vector.extract_strided_slice %23 {offsets = [0, 128], sizes = [2, 128], strides = [1, 1]} : vector<2x512xf32> to vector<2x128xf32>
    %31 = arith.negf %30 : vector<2x128xf32>
    %32 = math.exp %31 : vector<2x128xf32>
    %cst_15 = arith.constant 1.000000e+00 : f32
    %33 = vector.broadcast %cst_15 : f32 to vector<2x128xf32>
    %34 = arith.addf %33, %32 : vector<2x128xf32>
    %35 = arith.divf %33, %34 : vector<2x128xf32>
    %36 = vector.extract_strided_slice %23 {offsets = [0, 256], sizes = [2, 128], strides = [1, 1]} : vector<2x512xf32> to vector<2x128xf32>
    %37 = math.tanh %36 : vector<2x128xf32>
    %38 = vector.extract_strided_slice %23 {offsets = [0, 384], sizes = [2, 128], strides = [1, 1]} : vector<2x512xf32> to vector<2x128xf32>
    %39 = arith.negf %38 : vector<2x128xf32>
    %40 = math.exp %39 : vector<2x128xf32>
    %cst_16 = arith.constant 1.000000e+00 : f32
    %41 = vector.broadcast %cst_16 : f32 to vector<2x128xf32>
    %42 = arith.addf %41, %40 : vector<2x128xf32>
    %43 = arith.divf %41, %42 : vector<2x128xf32>
    %44 = arith.mulf %35, %10 : vector<2x128xf32>
    %45 = arith.mulf %29, %37 : vector<2x128xf32>
    %46 = arith.addf %44, %45 : vector<2x128xf32>
    %47 = math.tanh %46 : vector<2x128xf32>
    %48 = arith.mulf %43, %47 : vector<2x128xf32>
    %49 = arith.truncf %48 : vector<2x128xf32> to vector<2x128xbf16>
    %c128 = arith.constant 128 : index
    %c0_17 = arith.constant 0 : index
    %50 = vector.load %arg1[%c128, %c0_17] : memref<384x512xbf16, #tpu.memory_space<vmem>>, vector<128x512xbf16>
    %cst_18 = arith.constant dense<0.000000e+00> : vector<2x512xf32>
    %51 = tpu.matmul %49, %50, %cst_18 {dimension_numbers = #tpu.dot_dimension_numbers<[1], [0], [0], [1], [0, 0, 1, 1], [], []>} : vector<2x128xbf16>, vector<128x512xbf16>, vector<2x512xf32> -> vector<2x512xf32>
    %52 = arith.addf %6, %51 : vector<2x512xf32>
    %c256 = arith.constant 256 : index
    %c0_19 = arith.constant 0 : index
    %53 = vector.load %arg1[%c256, %c0_19] : memref<384x512xbf16, #tpu.memory_space<vmem>>, vector<128x512xbf16>
    %cst_20 = arith.constant dense<0.000000e+00> : vector<2x512xf32>
    %54 = tpu.matmul %14, %53, %cst_20 {dimension_numbers = #tpu.dot_dimension_numbers<[1], [0], [0], [1], [0, 0, 1, 1], [], []>} : vector<2x128xbf16>, vector<128x512xbf16>, vector<2x512xf32> -> vector<2x512xf32>
    %55 = arith.addf %52, %54 : vector<2x512xf32>
    %56 = vector.extract_strided_slice %55 {offsets = [0, 0], sizes = [2, 128], strides = [1, 1]} : vector<2x512xf32> to vector<2x128xf32>
    %57 = arith.negf %56 : vector<2x128xf32>
    %58 = math.exp %57 : vector<2x128xf32>
    %cst_21 = arith.constant 1.000000e+00 : f32
    %59 = vector.broadcast %cst_21 : f32 to vector<2x128xf32>
    %60 = arith.addf %59, %58 : vector<2x128xf32>
    %61 = arith.divf %59, %60 : vector<2x128xf32>
    %62 = vector.extract_strided_slice %55 {offsets = [0, 128], sizes = [2, 128], strides = [1, 1]} : vector<2x512xf32> to vector<2x128xf32>
    %63 = arith.negf %62 : vector<2x128xf32>
    %64 = math.exp %63 : vector<2x128xf32>
    %cst_22 = arith.constant 1.000000e+00 : f32
    %65 = vector.broadcast %cst_22 : f32 to vector<2x128xf32>
    %66 = arith.addf %65, %64 : vector<2x128xf32>
    %67 = arith.divf %65, %66 : vector<2x128xf32>
    %68 = vector.extract_strided_slice %55 {offsets = [0, 256], sizes = [2, 128], strides = [1, 1]} : vector<2x512xf32> to vector<2x128xf32>
    %69 = math.tanh %68 : vector<2x128xf32>
    %70 = vector.extract_strided_slice %55 {offsets = [0, 384], sizes = [2, 128], strides = [1, 1]} : vector<2x512xf32> to vector<2x128xf32>
    %71 = arith.negf %70 : vector<2x128xf32>
    %72 = math.exp %71 : vector<2x128xf32>
    %cst_23 = arith.constant 1.000000e+00 : f32
    %73 = vector.broadcast %cst_23 : f32 to vector<2x128xf32>
    %74 = arith.addf %73, %72 : vector<2x128xf32>
    %75 = arith.divf %73, %74 : vector<2x128xf32>
    %76 = arith.mulf %67, %12 : vector<2x128xf32>
    %77 = arith.mulf %61, %69 : vector<2x128xf32>
    %78 = arith.addf %76, %77 : vector<2x128xf32>
    %79 = math.tanh %78 : vector<2x128xf32>
    %80 = arith.mulf %75, %79 : vector<2x128xf32>
    %81 = arith.truncf %80 : vector<2x128xf32> to vector<2x128xbf16>
    %c1_24 = arith.constant 1 : index
    %c0_25 = arith.constant 0 : index
    %c0_26 = arith.constant 0 : index
    %82 = vector.load %arg0[%c1_24, %c0_25, %c0_26] : memref<8x2x1xf32, #tpu.memory_space<vmem>>, vector<1x2x1xf32>
    %83 = vector.shape_cast %82 : vector<1x2x1xf32> to vector<2x1xf32>
    %84 = vector.broadcast %83 : vector<2x1xf32> to vector<2x512xf32>
    %85 = vector.broadcast %0 : vector<1x512xf32> to vector<2x512xf32>
    %86 = arith.mulf %84, %85 : vector<2x512xf32>
    %87 = arith.addf %3, %86 : vector<2x512xf32>
    %c0_27 = arith.constant 0 : index
    %c0_28 = arith.constant 0 : index
    %88 = vector.load %arg1[%c0_27, %c0_28] : memref<384x512xbf16, #tpu.memory_space<vmem>>, vector<128x512xbf16>
    %cst_29 = arith.constant dense<0.000000e+00> : vector<2x512xf32>
    %89 = tpu.matmul %49, %88, %cst_29 {dimension_numbers = #tpu.dot_dimension_numbers<[1], [0], [0], [1], [0, 0, 1, 1], [], []>} : vector<2x128xbf16>, vector<128x512xbf16>, vector<2x512xf32> -> vector<2x512xf32>
    %90 = arith.addf %87, %89 : vector<2x512xf32>
    %91 = vector.extract_strided_slice %90 {offsets = [0, 0], sizes = [2, 128], strides = [1, 1]} : vector<2x512xf32> to vector<2x128xf32>
    %92 = arith.negf %91 : vector<2x128xf32>
    %93 = math.exp %92 : vector<2x128xf32>
    %cst_30 = arith.constant 1.000000e+00 : f32
    %94 = vector.broadcast %cst_30 : f32 to vector<2x128xf32>
    %95 = arith.addf %94, %93 : vector<2x128xf32>
    %96 = arith.divf %94, %95 : vector<2x128xf32>
    %97 = vector.extract_strided_slice %90 {offsets = [0, 128], sizes = [2, 128], strides = [1, 1]} : vector<2x512xf32> to vector<2x128xf32>
    %98 = arith.negf %97 : vector<2x128xf32>
    %99 = math.exp %98 : vector<2x128xf32>
    %cst_31 = arith.constant 1.000000e+00 : f32
    %100 = vector.broadcast %cst_31 : f32 to vector<2x128xf32>
    %101 = arith.addf %100, %99 : vector<2x128xf32>
    %102 = arith.divf %100, %101 : vector<2x128xf32>
    %103 = vector.extract_strided_slice %90 {offsets = [0, 256], sizes = [2, 128], strides = [1, 1]} : vector<2x512xf32> to vector<2x128xf32>
    %104 = math.tanh %103 : vector<2x128xf32>
    %105 = vector.extract_strided_slice %90 {offsets = [0, 384], sizes = [2, 128], strides = [1, 1]} : vector<2x512xf32> to vector<2x128xf32>
    %106 = arith.negf %105 : vector<2x128xf32>
    %107 = math.exp %106 : vector<2x128xf32>
    %cst_32 = arith.constant 1.000000e+00 : f32
    %108 = vector.broadcast %cst_32 : f32 to vector<2x128xf32>
    %109 = arith.addf %108, %107 : vector<2x128xf32>
    %110 = arith.divf %108, %109 : vector<2x128xf32>
    %111 = arith.mulf %102, %46 : vector<2x128xf32>
    %112 = arith.mulf %96, %104 : vector<2x128xf32>
    %113 = arith.addf %111, %112 : vector<2x128xf32>
    %114 = math.tanh %113 : vector<2x128xf32>
    %115 = arith.mulf %110, %114 : vector<2x128xf32>
    %116 = arith.truncf %115 : vector<2x128xf32> to vector<2x128xbf16>
    %c128_33 = arith.constant 128 : index
    %c0_34 = arith.constant 0 : index
    %117 = vector.load %arg1[%c128_33, %c0_34] : memref<384x512xbf16, #tpu.memory_space<vmem>>, vector<128x512xbf16>
    %cst_35 = arith.constant dense<0.000000e+00> : vector<2x512xf32>
    %118 = tpu.matmul %116, %117, %cst_35 {dimension_numbers = #tpu.dot_dimension_numbers<[1], [0], [0], [1], [0, 0, 1, 1], [], []>} : vector<2x128xbf16>, vector<128x512xbf16>, vector<2x512xf32> -> vector<2x512xf32>
    %119 = arith.addf %6, %118 : vector<2x512xf32>
    %c256_36 = arith.constant 256 : index
    %c0_37 = arith.constant 0 : index
    %120 = vector.load %arg1[%c256_36, %c0_37] : memref<384x512xbf16, #tpu.memory_space<vmem>>, vector<128x512xbf16>
    %cst_38 = arith.constant dense<0.000000e+00> : vector<2x512xf32>
    %121 = tpu.matmul %81, %120, %cst_38 {dimension_numbers = #tpu.dot_dimension_numbers<[1], [0], [0], [1], [0, 0, 1, 1], [], []>} : vector<2x128xbf16>, vector<128x512xbf16>, vector<2x512xf32> -> vector<2x512xf32>
    %122 = arith.addf %119, %121 : vector<2x512xf32>
    %123 = vector.extract_strided_slice %122 {offsets = [0, 0], sizes = [2, 128], strides = [1, 1]} : vector<2x512xf32> to vector<2x128xf32>
    %124 = arith.negf %123 : vector<2x128xf32>
    %125 = math.exp %124 : vector<2x128xf32>
    %cst_39 = arith.constant 1.000000e+00 : f32
    %126 = vector.broadcast %cst_39 : f32 to vector<2x128xf32>
    %127 = arith.addf %126, %125 : vector<2x128xf32>
    %128 = arith.divf %126, %127 : vector<2x128xf32>
    %129 = vector.extract_strided_slice %122 {offsets = [0, 128], sizes = [2, 128], strides = [1, 1]} : vector<2x512xf32> to vector<2x128xf32>
    %130 = arith.negf %129 : vector<2x128xf32>
    %131 = math.exp %130 : vector<2x128xf32>
    %cst_40 = arith.constant 1.000000e+00 : f32
    %132 = vector.broadcast %cst_40 : f32 to vector<2x128xf32>
    %133 = arith.addf %132, %131 : vector<2x128xf32>
    %134 = arith.divf %132, %133 : vector<2x128xf32>
    %135 = vector.extract_strided_slice %122 {offsets = [0, 256], sizes = [2, 128], strides = [1, 1]} : vector<2x512xf32> to vector<2x128xf32>
    %136 = math.tanh %135 : vector<2x128xf32>
    %137 = vector.extract_strided_slice %122 {offsets = [0, 384], sizes = [2, 128], strides = [1, 1]} : vector<2x512xf32> to vector<2x128xf32>
    %138 = arith.negf %137 : vector<2x128xf32>
    %139 = math.exp %138 : vector<2x128xf32>
    %cst_41 = arith.constant 1.000000e+00 : f32
    %140 = vector.broadcast %cst_41 : f32 to vector<2x128xf32>
    %141 = arith.addf %140, %139 : vector<2x128xf32>
    %142 = arith.divf %140, %141 : vector<2x128xf32>
    %143 = arith.mulf %134, %78 : vector<2x128xf32>
    %144 = arith.mulf %128, %136 : vector<2x128xf32>
    %145 = arith.addf %143, %144 : vector<2x128xf32>
    %146 = math.tanh %145 : vector<2x128xf32>
    %147 = arith.mulf %142, %146 : vector<2x128xf32>
    %148 = arith.truncf %147 : vector<2x128xf32> to vector<2x128xbf16>
    %c2_42 = arith.constant 2 : index
    %c0_43 = arith.constant 0 : index
    %c0_44 = arith.constant 0 : index
    %149 = vector.load %arg0[%c2_42, %c0_43, %c0_44] : memref<8x2x1xf32, #tpu.memory_space<vmem>>, vector<1x2x1xf32>
    %150 = vector.shape_cast %149 : vector<1x2x1xf32> to vector<2x1xf32>
    %151 = vector.broadcast %150 : vector<2x1xf32> to vector<2x512xf32>
    %152 = vector.broadcast %0 : vector<1x512xf32> to vector<2x512xf32>
    %153 = arith.mulf %151, %152 : vector<2x512xf32>
    %154 = arith.addf %3, %153 : vector<2x512xf32>
    %c0_45 = arith.constant 0 : index
    %c0_46 = arith.constant 0 : index
    %155 = vector.load %arg1[%c0_45, %c0_46] : memref<384x512xbf16, #tpu.memory_space<vmem>>, vector<128x512xbf16>
    %cst_47 = arith.constant dense<0.000000e+00> : vector<2x512xf32>
    %156 = tpu.matmul %116, %155, %cst_47 {dimension_numbers = #tpu.dot_dimension_numbers<[1], [0], [0], [1], [0, 0, 1, 1], [], []>} : vector<2x128xbf16>, vector<128x512xbf16>, vector<2x512xf32> -> vector<2x512xf32>
    %157 = arith.addf %154, %156 : vector<2x512xf32>
    %158 = vector.extract_strided_slice %157 {offsets = [0, 0], sizes = [2, 128], strides = [1, 1]} : vector<2x512xf32> to vector<2x128xf32>
    %159 = arith.negf %158 : vector<2x128xf32>
    %160 = math.exp %159 : vector<2x128xf32>
    %cst_48 = arith.constant 1.000000e+00 : f32
    %161 = vector.broadcast %cst_48 : f32 to vector<2x128xf32>
    %162 = arith.addf %161, %160 : vector<2x128xf32>
    %163 = arith.divf %161, %162 : vector<2x128xf32>
    %164 = vector.extract_strided_slice %157 {offsets = [0, 128], sizes = [2, 128], strides = [1, 1]} : vector<2x512xf32> to vector<2x128xf32>
    %165 = arith.negf %164 : vector<2x128xf32>
    %166 = math.exp %165 : vector<2x128xf32>
    %cst_49 = arith.constant 1.000000e+00 : f32
    %167 = vector.broadcast %cst_49 : f32 to vector<2x128xf32>
    %168 = arith.addf %167, %166 : vector<2x128xf32>
    %169 = arith.divf %167, %168 : vector<2x128xf32>
    %170 = vector.extract_strided_slice %157 {offsets = [0, 256], sizes = [2, 128], strides = [1, 1]} : vector<2x512xf32> to vector<2x128xf32>
    %171 = math.tanh %170 : vector<2x128xf32>
    %172 = vector.extract_strided_slice %157 {offsets = [0, 384], sizes = [2, 128], strides = [1, 1]} : vector<2x512xf32> to vector<2x128xf32>
    %173 = arith.negf %172 : vector<2x128xf32>
    %174 = math.exp %173 : vector<2x128xf32>
    %cst_50 = arith.constant 1.000000e+00 : f32
    %175 = vector.broadcast %cst_50 : f32 to vector<2x128xf32>
    %176 = arith.addf %175, %174 : vector<2x128xf32>
    %177 = arith.divf %175, %176 : vector<2x128xf32>
    %178 = arith.mulf %169, %113 : vector<2x128xf32>
    %179 = arith.mulf %163, %171 : vector<2x128xf32>
    %180 = arith.addf %178, %179 : vector<2x128xf32>
    %181 = math.tanh %180 : vector<2x128xf32>
    %182 = arith.mulf %177, %181 : vector<2x128xf32>
    %183 = arith.truncf %182 : vector<2x128xf32> to vector<2x128xbf16>
    %c128_51 = arith.constant 128 : index
    %c0_52 = arith.constant 0 : index
    %184 = vector.load %arg1[%c128_51, %c0_52] : memref<384x512xbf16, #tpu.memory_space<vmem>>, vector<128x512xbf16>
    %cst_53 = arith.constant dense<0.000000e+00> : vector<2x512xf32>
    %185 = tpu.matmul %183, %184, %cst_53 {dimension_numbers = #tpu.dot_dimension_numbers<[1], [0], [0], [1], [0, 0, 1, 1], [], []>} : vector<2x128xbf16>, vector<128x512xbf16>, vector<2x512xf32> -> vector<2x512xf32>
    %186 = arith.addf %6, %185 : vector<2x512xf32>
    %c256_54 = arith.constant 256 : index
    %c0_55 = arith.constant 0 : index
    %187 = vector.load %arg1[%c256_54, %c0_55] : memref<384x512xbf16, #tpu.memory_space<vmem>>, vector<128x512xbf16>
    %cst_56 = arith.constant dense<0.000000e+00> : vector<2x512xf32>
    %188 = tpu.matmul %148, %187, %cst_56 {dimension_numbers = #tpu.dot_dimension_numbers<[1], [0], [0], [1], [0, 0, 1, 1], [], []>} : vector<2x128xbf16>, vector<128x512xbf16>, vector<2x512xf32> -> vector<2x512xf32>
    %189 = arith.addf %186, %188 : vector<2x512xf32>
    %190 = vector.extract_strided_slice %189 {offsets = [0, 0], sizes = [2, 128], strides = [1, 1]} : vector<2x512xf32> to vector<2x128xf32>
    %191 = arith.negf %190 : vector<2x128xf32>
    %192 = math.exp %191 : vector<2x128xf32>
    %cst_57 = arith.constant 1.000000e+00 : f32
    %193 = vector.broadcast %cst_57 : f32 to vector<2x128xf32>
    %194 = arith.addf %193, %192 : vector<2x128xf32>
    %195 = arith.divf %193, %194 : vector<2x128xf32>
    %196 = vector.extract_strided_slice %189 {offsets = [0, 128], sizes = [2, 128], strides = [1, 1]} : vector<2x512xf32> to vector<2x128xf32>
    %197 = arith.negf %196 : vector<2x128xf32>
    %198 = math.exp %197 : vector<2x128xf32>
    %cst_58 = arith.constant 1.000000e+00 : f32
    %199 = vector.broadcast %cst_58 : f32 to vector<2x128xf32>
    %200 = arith.addf %199, %198 : vector<2x128xf32>
    %201 = arith.divf %199, %200 : vector<2x128xf32>
    %202 = vector.extract_strided_slice %189 {offsets = [0, 256], sizes = [2, 128], strides = [1, 1]} : vector<2x512xf32> to vector<2x128xf32>
    %203 = math.tanh %202 : vector<2x128xf32>
    %204 = vector.extract_strided_slice %189 {offsets = [0, 384], sizes = [2, 128], strides = [1, 1]} : vector<2x512xf32> to vector<2x128xf32>
    %205 = arith.negf %204 : vector<2x128xf32>
    %206 = math.exp %205 : vector<2x128xf32>
    %cst_59 = arith.constant 1.000000e+00 : f32
    %207 = vector.broadcast %cst_59 : f32 to vector<2x128xf32>
    %208 = arith.addf %207, %206 : vector<2x128xf32>
    %209 = arith.divf %207, %208 : vector<2x128xf32>
    %210 = arith.mulf %201, %145 : vector<2x128xf32>
    %211 = arith.mulf %195, %203 : vector<2x128xf32>
    %212 = arith.addf %210, %211 : vector<2x128xf32>
    %213 = math.tanh %212 : vector<2x128xf32>
    %214 = arith.mulf %209, %213 : vector<2x128xf32>
    %215 = arith.truncf %214 : vector<2x128xf32> to vector<2x128xbf16>
    %c3_60 = arith.constant 3 : index
    %c0_61 = arith.constant 0 : index
    %c0_62 = arith.constant 0 : index
    %216 = vector.load %arg0[%c3_60, %c0_61, %c0_62] : memref<8x2x1xf32, #tpu.memory_space<vmem>>, vector<1x2x1xf32>
    %217 = vector.shape_cast %216 : vector<1x2x1xf32> to vector<2x1xf32>
    %218 = vector.broadcast %217 : vector<2x1xf32> to vector<2x512xf32>
    %219 = vector.broadcast %0 : vector<1x512xf32> to vector<2x512xf32>
    %220 = arith.mulf %218, %219 : vector<2x512xf32>
    %221 = arith.addf %3, %220 : vector<2x512xf32>
    %c0_63 = arith.constant 0 : index
    %c0_64 = arith.constant 0 : index
    %222 = vector.load %arg1[%c0_63, %c0_64] : memref<384x512xbf16, #tpu.memory_space<vmem>>, vector<128x512xbf16>
    %cst_65 = arith.constant dense<0.000000e+00> : vector<2x512xf32>
    %223 = tpu.matmul %183, %222, %cst_65 {dimension_numbers = #tpu.dot_dimension_numbers<[1], [0], [0], [1], [0, 0, 1, 1], [], []>} : vector<2x128xbf16>, vector<128x512xbf16>, vector<2x512xf32> -> vector<2x512xf32>
    %224 = arith.addf %221, %223 : vector<2x512xf32>
    %225 = vector.extract_strided_slice %224 {offsets = [0, 0], sizes = [2, 128], strides = [1, 1]} : vector<2x512xf32> to vector<2x128xf32>
    %226 = arith.negf %225 : vector<2x128xf32>
    %227 = math.exp %226 : vector<2x128xf32>
    %cst_66 = arith.constant 1.000000e+00 : f32
    %228 = vector.broadcast %cst_66 : f32 to vector<2x128xf32>
    %229 = arith.addf %228, %227 : vector<2x128xf32>
    %230 = arith.divf %228, %229 : vector<2x128xf32>
    %231 = vector.extract_strided_slice %224 {offsets = [0, 128], sizes = [2, 128], strides = [1, 1]} : vector<2x512xf32> to vector<2x128xf32>
    %232 = arith.negf %231 : vector<2x128xf32>
    %233 = math.exp %232 : vector<2x128xf32>
    %cst_67 = arith.constant 1.000000e+00 : f32
    %234 = vector.broadcast %cst_67 : f32 to vector<2x128xf32>
    %235 = arith.addf %234, %233 : vector<2x128xf32>
    %236 = arith.divf %234, %235 : vector<2x128xf32>
    %237 = vector.extract_strided_slice %224 {offsets = [0, 256], sizes = [2, 128], strides = [1, 1]} : vector<2x512xf32> to vector<2x128xf32>
    %238 = math.tanh %237 : vector<2x128xf32>
    %239 = vector.extract_strided_slice %224 {offsets = [0, 384], sizes = [2, 128], strides = [1, 1]} : vector<2x512xf32> to vector<2x128xf32>
    %240 = arith.negf %239 : vector<2x128xf32>
    %241 = math.exp %240 : vector<2x128xf32>
    %cst_68 = arith.constant 1.000000e+00 : f32
    %242 = vector.broadcast %cst_68 : f32 to vector<2x128xf32>
    %243 = arith.addf %242, %241 : vector<2x128xf32>
    %244 = arith.divf %242, %243 : vector<2x128xf32>
    %245 = arith.mulf %236, %180 : vector<2x128xf32>
    %246 = arith.mulf %230, %238 : vector<2x128xf32>
    %247 = arith.addf %245, %246 : vector<2x128xf32>
    %248 = math.tanh %247 : vector<2x128xf32>
    %249 = arith.mulf %244, %248 : vector<2x128xf32>
    %250 = arith.truncf %249 : vector<2x128xf32> to vector<2x128xbf16>
    %c128_69 = arith.constant 128 : index
    %c0_70 = arith.constant 0 : index
    %251 = vector.load %arg1[%c128_69, %c0_70] : memref<384x512xbf16, #tpu.memory_space<vmem>>, vector<128x512xbf16>
    %cst_71 = arith.constant dense<0.000000e+00> : vector<2x512xf32>
    %252 = tpu.matmul %250, %251, %cst_71 {dimension_numbers = #tpu.dot_dimension_numbers<[1], [0], [0], [1], [0, 0, 1, 1], [], []>} : vector<2x128xbf16>, vector<128x512xbf16>, vector<2x512xf32> -> vector<2x512xf32>
    %253 = arith.addf %6, %252 : vector<2x512xf32>
    %c256_72 = arith.constant 256 : index
    %c0_73 = arith.constant 0 : index
    %254 = vector.load %arg1[%c256_72, %c0_73] : memref<384x512xbf16, #tpu.memory_space<vmem>>, vector<128x512xbf16>
    %cst_74 = arith.constant dense<0.000000e+00> : vector<2x512xf32>
    %255 = tpu.matmul %215, %254, %cst_74 {dimension_numbers = #tpu.dot_dimension_numbers<[1], [0], [0], [1], [0, 0, 1, 1], [], []>} : vector<2x128xbf16>, vector<128x512xbf16>, vector<2x512xf32> -> vector<2x512xf32>
    %256 = arith.addf %253, %255 : vector<2x512xf32>
    %257 = vector.extract_strided_slice %256 {offsets = [0, 0], sizes = [2, 128], strides = [1, 1]} : vector<2x512xf32> to vector<2x128xf32>
    %258 = arith.negf %257 : vector<2x128xf32>
    %259 = math.exp %258 : vector<2x128xf32>
    %cst_75 = arith.constant 1.000000e+00 : f32
    %260 = vector.broadcast %cst_75 : f32 to vector<2x128xf32>
    %261 = arith.addf %260, %259 : vector<2x128xf32>
    %262 = arith.divf %260, %261 : vector<2x128xf32>
    %263 = vector.extract_strided_slice %256 {offsets = [0, 128], sizes = [2, 128], strides = [1, 1]} : vector<2x512xf32> to vector<2x128xf32>
    %264 = arith.negf %263 : vector<2x128xf32>
    %265 = math.exp %264 : vector<2x128xf32>
    %cst_76 = arith.constant 1.000000e+00 : f32
    %266 = vector.broadcast %cst_76 : f32 to vector<2x128xf32>
    %267 = arith.addf %266, %265 : vector<2x128xf32>
    %268 = arith.divf %266, %267 : vector<2x128xf32>
    %269 = vector.extract_strided_slice %256 {offsets = [0, 256], sizes = [2, 128], strides = [1, 1]} : vector<2x512xf32> to vector<2x128xf32>
    %270 = math.tanh %269 : vector<2x128xf32>
    %271 = vector.extract_strided_slice %256 {offsets = [0, 384], sizes = [2, 128], strides = [1, 1]} : vector<2x512xf32> to vector<2x128xf32>
    %272 = arith.negf %271 : vector<2x128xf32>
    %273 = math.exp %272 : vector<2x128xf32>
    %cst_77 = arith.constant 1.000000e+00 : f32
    %274 = vector.broadcast %cst_77 : f32 to vector<2x128xf32>
    %275 = arith.addf %274, %273 : vector<2x128xf32>
    %276 = arith.divf %274, %275 : vector<2x128xf32>
    %277 = arith.mulf %268, %212 : vector<2x128xf32>
    %278 = arith.mulf %262, %270 : vector<2x128xf32>
    %279 = arith.addf %277, %278 : vector<2x128xf32>
    %280 = math.tanh %279 : vector<2x128xf32>
    %281 = arith.mulf %276, %280 : vector<2x128xf32>
    %282 = arith.truncf %281 : vector<2x128xf32> to vector<2x128xbf16>
    %c4_78 = arith.constant 4 : index
    %c0_79 = arith.constant 0 : index
    %c0_80 = arith.constant 0 : index
    %283 = vector.load %arg0[%c4_78, %c0_79, %c0_80] : memref<8x2x1xf32, #tpu.memory_space<vmem>>, vector<1x2x1xf32>
    %284 = vector.shape_cast %283 : vector<1x2x1xf32> to vector<2x1xf32>
    %285 = vector.broadcast %284 : vector<2x1xf32> to vector<2x512xf32>
    %286 = vector.broadcast %0 : vector<1x512xf32> to vector<2x512xf32>
    %287 = arith.mulf %285, %286 : vector<2x512xf32>
    %288 = arith.addf %3, %287 : vector<2x512xf32>
    %c0_81 = arith.constant 0 : index
    %c0_82 = arith.constant 0 : index
    %289 = vector.load %arg1[%c0_81, %c0_82] : memref<384x512xbf16, #tpu.memory_space<vmem>>, vector<128x512xbf16>
    %cst_83 = arith.constant dense<0.000000e+00> : vector<2x512xf32>
    %290 = tpu.matmul %250, %289, %cst_83 {dimension_numbers = #tpu.dot_dimension_numbers<[1], [0], [0], [1], [0, 0, 1, 1], [], []>} : vector<2x128xbf16>, vector<128x512xbf16>, vector<2x512xf32> -> vector<2x512xf32>
    %291 = arith.addf %288, %290 : vector<2x512xf32>
    %292 = vector.extract_strided_slice %291 {offsets = [0, 0], sizes = [2, 128], strides = [1, 1]} : vector<2x512xf32> to vector<2x128xf32>
    %293 = arith.negf %292 : vector<2x128xf32>
    %294 = math.exp %293 : vector<2x128xf32>
    %cst_84 = arith.constant 1.000000e+00 : f32
    %295 = vector.broadcast %cst_84 : f32 to vector<2x128xf32>
    %296 = arith.addf %295, %294 : vector<2x128xf32>
    %297 = arith.divf %295, %296 : vector<2x128xf32>
    %298 = vector.extract_strided_slice %291 {offsets = [0, 128], sizes = [2, 128], strides = [1, 1]} : vector<2x512xf32> to vector<2x128xf32>
    %299 = arith.negf %298 : vector<2x128xf32>
    %300 = math.exp %299 : vector<2x128xf32>
    %cst_85 = arith.constant 1.000000e+00 : f32
    %301 = vector.broadcast %cst_85 : f32 to vector<2x128xf32>
    %302 = arith.addf %301, %300 : vector<2x128xf32>
    %303 = arith.divf %301, %302 : vector<2x128xf32>
    %304 = vector.extract_strided_slice %291 {offsets = [0, 256], sizes = [2, 128], strides = [1, 1]} : vector<2x512xf32> to vector<2x128xf32>
    %305 = math.tanh %304 : vector<2x128xf32>
    %306 = vector.extract_strided_slice %291 {offsets = [0, 384], sizes = [2, 128], strides = [1, 1]} : vector<2x512xf32> to vector<2x128xf32>
    %307 = arith.negf %306 : vector<2x128xf32>
    %308 = math.exp %307 : vector<2x128xf32>
    %cst_86 = arith.constant 1.000000e+00 : f32
    %309 = vector.broadcast %cst_86 : f32 to vector<2x128xf32>
    %310 = arith.addf %309, %308 : vector<2x128xf32>
    %311 = arith.divf %309, %310 : vector<2x128xf32>
    %312 = arith.mulf %303, %247 : vector<2x128xf32>
    %313 = arith.mulf %297, %305 : vector<2x128xf32>
    %314 = arith.addf %312, %313 : vector<2x128xf32>
    %315 = math.tanh %314 : vector<2x128xf32>
    %316 = arith.mulf %311, %315 : vector<2x128xf32>
    %317 = arith.truncf %316 : vector<2x128xf32> to vector<2x128xbf16>
    %c128_87 = arith.constant 128 : index
    %c0_88 = arith.constant 0 : index
    %318 = vector.load %arg1[%c128_87, %c0_88] : memref<384x512xbf16, #tpu.memory_space<vmem>>, vector<128x512xbf16>
    %cst_89 = arith.constant dense<0.000000e+00> : vector<2x512xf32>
    %319 = tpu.matmul %317, %318, %cst_89 {dimension_numbers = #tpu.dot_dimension_numbers<[1], [0], [0], [1], [0, 0, 1, 1], [], []>} : vector<2x128xbf16>, vector<128x512xbf16>, vector<2x512xf32> -> vector<2x512xf32>
    %320 = arith.addf %6, %319 : vector<2x512xf32>
    %c256_90 = arith.constant 256 : index
    %c0_91 = arith.constant 0 : index
    %321 = vector.load %arg1[%c256_90, %c0_91] : memref<384x512xbf16, #tpu.memory_space<vmem>>, vector<128x512xbf16>
    %cst_92 = arith.constant dense<0.000000e+00> : vector<2x512xf32>
    %322 = tpu.matmul %282, %321, %cst_92 {dimension_numbers = #tpu.dot_dimension_numbers<[1], [0], [0], [1], [0, 0, 1, 1], [], []>} : vector<2x128xbf16>, vector<128x512xbf16>, vector<2x512xf32> -> vector<2x512xf32>
    %323 = arith.addf %320, %322 : vector<2x512xf32>
    %324 = vector.extract_strided_slice %323 {offsets = [0, 0], sizes = [2, 128], strides = [1, 1]} : vector<2x512xf32> to vector<2x128xf32>
    %325 = arith.negf %324 : vector<2x128xf32>
    %326 = math.exp %325 : vector<2x128xf32>
    %cst_93 = arith.constant 1.000000e+00 : f32
    %327 = vector.broadcast %cst_93 : f32 to vector<2x128xf32>
    %328 = arith.addf %327, %326 : vector<2x128xf32>
    %329 = arith.divf %327, %328 : vector<2x128xf32>
    %330 = vector.extract_strided_slice %323 {offsets = [0, 128], sizes = [2, 128], strides = [1, 1]} : vector<2x512xf32> to vector<2x128xf32>
    %331 = arith.negf %330 : vector<2x128xf32>
    %332 = math.exp %331 : vector<2x128xf32>
    %cst_94 = arith.constant 1.000000e+00 : f32
    %333 = vector.broadcast %cst_94 : f32 to vector<2x128xf32>
    %334 = arith.addf %333, %332 : vector<2x128xf32>
    %335 = arith.divf %333, %334 : vector<2x128xf32>
    %336 = vector.extract_strided_slice %323 {offsets = [0, 256], sizes = [2, 128], strides = [1, 1]} : vector<2x512xf32> to vector<2x128xf32>
    %337 = math.tanh %336 : vector<2x128xf32>
    %338 = vector.extract_strided_slice %323 {offsets = [0, 384], sizes = [2, 128], strides = [1, 1]} : vector<2x512xf32> to vector<2x128xf32>
    %339 = arith.negf %338 : vector<2x128xf32>
    %340 = math.exp %339 : vector<2x128xf32>
    %cst_95 = arith.constant 1.000000e+00 : f32
    %341 = vector.broadcast %cst_95 : f32 to vector<2x128xf32>
    %342 = arith.addf %341, %340 : vector<2x128xf32>
    %343 = arith.divf %341, %342 : vector<2x128xf32>
    %344 = arith.mulf %335, %279 : vector<2x128xf32>
    %345 = arith.mulf %329, %337 : vector<2x128xf32>
    %346 = arith.addf %344, %345 : vector<2x128xf32>
    %347 = math.tanh %346 : vector<2x128xf32>
    %348 = arith.mulf %343, %347 : vector<2x128xf32>
    %349 = arith.truncf %348 : vector<2x128xf32> to vector<2x128xbf16>
    %c5 = arith.constant 5 : index
    %c0_96 = arith.constant 0 : index
    %c0_97 = arith.constant 0 : index
    %350 = vector.load %arg0[%c5, %c0_96, %c0_97] : memref<8x2x1xf32, #tpu.memory_space<vmem>>, vector<1x2x1xf32>
    %351 = vector.shape_cast %350 : vector<1x2x1xf32> to vector<2x1xf32>
    %352 = vector.broadcast %351 : vector<2x1xf32> to vector<2x512xf32>
    %353 = vector.broadcast %0 : vector<1x512xf32> to vector<2x512xf32>
    %354 = arith.mulf %352, %353 : vector<2x512xf32>
    %355 = arith.addf %3, %354 : vector<2x512xf32>
    %c0_98 = arith.constant 0 : index
    %c0_99 = arith.constant 0 : index
    %356 = vector.load %arg1[%c0_98, %c0_99] : memref<384x512xbf16, #tpu.memory_space<vmem>>, vector<128x512xbf16>
    %cst_100 = arith.constant dense<0.000000e+00> : vector<2x512xf32>
    %357 = tpu.matmul %317, %356, %cst_100 {dimension_numbers = #tpu.dot_dimension_numbers<[1], [0], [0], [1], [0, 0, 1, 1], [], []>} : vector<2x128xbf16>, vector<128x512xbf16>, vector<2x512xf32> -> vector<2x512xf32>
    %358 = arith.addf %355, %357 : vector<2x512xf32>
    %359 = vector.extract_strided_slice %358 {offsets = [0, 0], sizes = [2, 128], strides = [1, 1]} : vector<2x512xf32> to vector<2x128xf32>
    %360 = arith.negf %359 : vector<2x128xf32>
    %361 = math.exp %360 : vector<2x128xf32>
    %cst_101 = arith.constant 1.000000e+00 : f32
    %362 = vector.broadcast %cst_101 : f32 to vector<2x128xf32>
    %363 = arith.addf %362, %361 : vector<2x128xf32>
    %364 = arith.divf %362, %363 : vector<2x128xf32>
    %365 = vector.extract_strided_slice %358 {offsets = [0, 128], sizes = [2, 128], strides = [1, 1]} : vector<2x512xf32> to vector<2x128xf32>
    %366 = arith.negf %365 : vector<2x128xf32>
    %367 = math.exp %366 : vector<2x128xf32>
    %cst_102 = arith.constant 1.000000e+00 : f32
    %368 = vector.broadcast %cst_102 : f32 to vector<2x128xf32>
    %369 = arith.addf %368, %367 : vector<2x128xf32>
    %370 = arith.divf %368, %369 : vector<2x128xf32>
    %371 = vector.extract_strided_slice %358 {offsets = [0, 256], sizes = [2, 128], strides = [1, 1]} : vector<2x512xf32> to vector<2x128xf32>
    %372 = math.tanh %371 : vector<2x128xf32>
    %373 = vector.extract_strided_slice %358 {offsets = [0, 384], sizes = [2, 128], strides = [1, 1]} : vector<2x512xf32> to vector<2x128xf32>
    %374 = arith.negf %373 : vector<2x128xf32>
    %375 = math.exp %374 : vector<2x128xf32>
    %cst_103 = arith.constant 1.000000e+00 : f32
    %376 = vector.broadcast %cst_103 : f32 to vector<2x128xf32>
    %377 = arith.addf %376, %375 : vector<2x128xf32>
    %378 = arith.divf %376, %377 : vector<2x128xf32>
    %379 = arith.mulf %370, %314 : vector<2x128xf32>
    %380 = arith.mulf %364, %372 : vector<2x128xf32>
    %381 = arith.addf %379, %380 : vector<2x128xf32>
    %382 = math.tanh %381 : vector<2x128xf32>
    %383 = arith.mulf %378, %382 : vector<2x128xf32>
    %384 = arith.truncf %383 : vector<2x128xf32> to vector<2x128xbf16>
    %c128_104 = arith.constant 128 : index
    %c0_105 = arith.constant 0 : index
    %385 = vector.load %arg1[%c128_104, %c0_105] : memref<384x512xbf16, #tpu.memory_space<vmem>>, vector<128x512xbf16>
    %cst_106 = arith.constant dense<0.000000e+00> : vector<2x512xf32>
    %386 = tpu.matmul %384, %385, %cst_106 {dimension_numbers = #tpu.dot_dimension_numbers<[1], [0], [0], [1], [0, 0, 1, 1], [], []>} : vector<2x128xbf16>, vector<128x512xbf16>, vector<2x512xf32> -> vector<2x512xf32>
    %387 = arith.addf %6, %386 : vector<2x512xf32>
    %c256_107 = arith.constant 256 : index
    %c0_108 = arith.constant 0 : index
    %388 = vector.load %arg1[%c256_107, %c0_108] : memref<384x512xbf16, #tpu.memory_space<vmem>>, vector<128x512xbf16>
    %cst_109 = arith.constant dense<0.000000e+00> : vector<2x512xf32>
    %389 = tpu.matmul %349, %388, %cst_109 {dimension_numbers = #tpu.dot_dimension_numbers<[1], [0], [0], [1], [0, 0, 1, 1], [], []>} : vector<2x128xbf16>, vector<128x512xbf16>, vector<2x512xf32> -> vector<2x512xf32>
    %390 = arith.addf %387, %389 : vector<2x512xf32>
    %391 = vector.extract_strided_slice %390 {offsets = [0, 0], sizes = [2, 128], strides = [1, 1]} : vector<2x512xf32> to vector<2x128xf32>
    %392 = arith.negf %391 : vector<2x128xf32>
    %393 = math.exp %392 : vector<2x128xf32>
    %cst_110 = arith.constant 1.000000e+00 : f32
    %394 = vector.broadcast %cst_110 : f32 to vector<2x128xf32>
    %395 = arith.addf %394, %393 : vector<2x128xf32>
    %396 = arith.divf %394, %395 : vector<2x128xf32>
    %397 = vector.extract_strided_slice %390 {offsets = [0, 128], sizes = [2, 128], strides = [1, 1]} : vector<2x512xf32> to vector<2x128xf32>
    %398 = arith.negf %397 : vector<2x128xf32>
    %399 = math.exp %398 : vector<2x128xf32>
    %cst_111 = arith.constant 1.000000e+00 : f32
    %400 = vector.broadcast %cst_111 : f32 to vector<2x128xf32>
    %401 = arith.addf %400, %399 : vector<2x128xf32>
    %402 = arith.divf %400, %401 : vector<2x128xf32>
    %403 = vector.extract_strided_slice %390 {offsets = [0, 256], sizes = [2, 128], strides = [1, 1]} : vector<2x512xf32> to vector<2x128xf32>
    %404 = math.tanh %403 : vector<2x128xf32>
    %405 = vector.extract_strided_slice %390 {offsets = [0, 384], sizes = [2, 128], strides = [1, 1]} : vector<2x512xf32> to vector<2x128xf32>
    %406 = arith.negf %405 : vector<2x128xf32>
    %407 = math.exp %406 : vector<2x128xf32>
    %cst_112 = arith.constant 1.000000e+00 : f32
    %408 = vector.broadcast %cst_112 : f32 to vector<2x128xf32>
    %409 = arith.addf %408, %407 : vector<2x128xf32>
    %410 = arith.divf %408, %409 : vector<2x128xf32>
    %411 = arith.mulf %402, %346 : vector<2x128xf32>
    %412 = arith.mulf %396, %404 : vector<2x128xf32>
    %413 = arith.addf %411, %412 : vector<2x128xf32>
    %414 = math.tanh %413 : vector<2x128xf32>
    %415 = arith.mulf %410, %414 : vector<2x128xf32>
    %416 = arith.truncf %415 : vector<2x128xf32> to vector<2x128xbf16>
    %c6 = arith.constant 6 : index
    %c0_113 = arith.constant 0 : index
    %c0_114 = arith.constant 0 : index
    %417 = vector.load %arg0[%c6, %c0_113, %c0_114] : memref<8x2x1xf32, #tpu.memory_space<vmem>>, vector<1x2x1xf32>
    %418 = vector.shape_cast %417 : vector<1x2x1xf32> to vector<2x1xf32>
    %419 = vector.broadcast %418 : vector<2x1xf32> to vector<2x512xf32>
    %420 = vector.broadcast %0 : vector<1x512xf32> to vector<2x512xf32>
    %421 = arith.mulf %419, %420 : vector<2x512xf32>
    %422 = arith.addf %3, %421 : vector<2x512xf32>
    %c0_115 = arith.constant 0 : index
    %c0_116 = arith.constant 0 : index
    %423 = vector.load %arg1[%c0_115, %c0_116] : memref<384x512xbf16, #tpu.memory_space<vmem>>, vector<128x512xbf16>
    %cst_117 = arith.constant dense<0.000000e+00> : vector<2x512xf32>
    %424 = tpu.matmul %384, %423, %cst_117 {dimension_numbers = #tpu.dot_dimension_numbers<[1], [0], [0], [1], [0, 0, 1, 1], [], []>} : vector<2x128xbf16>, vector<128x512xbf16>, vector<2x512xf32> -> vector<2x512xf32>
    %425 = arith.addf %422, %424 : vector<2x512xf32>
    %426 = vector.extract_strided_slice %425 {offsets = [0, 0], sizes = [2, 128], strides = [1, 1]} : vector<2x512xf32> to vector<2x128xf32>
    %427 = arith.negf %426 : vector<2x128xf32>
    %428 = math.exp %427 : vector<2x128xf32>
    %cst_118 = arith.constant 1.000000e+00 : f32
    %429 = vector.broadcast %cst_118 : f32 to vector<2x128xf32>
    %430 = arith.addf %429, %428 : vector<2x128xf32>
    %431 = arith.divf %429, %430 : vector<2x128xf32>
    %432 = vector.extract_strided_slice %425 {offsets = [0, 128], sizes = [2, 128], strides = [1, 1]} : vector<2x512xf32> to vector<2x128xf32>
    %433 = arith.negf %432 : vector<2x128xf32>
    %434 = math.exp %433 : vector<2x128xf32>
    %cst_119 = arith.constant 1.000000e+00 : f32
    %435 = vector.broadcast %cst_119 : f32 to vector<2x128xf32>
    %436 = arith.addf %435, %434 : vector<2x128xf32>
    %437 = arith.divf %435, %436 : vector<2x128xf32>
    %438 = vector.extract_strided_slice %425 {offsets = [0, 256], sizes = [2, 128], strides = [1, 1]} : vector<2x512xf32> to vector<2x128xf32>
    %439 = math.tanh %438 : vector<2x128xf32>
    %440 = vector.extract_strided_slice %425 {offsets = [0, 384], sizes = [2, 128], strides = [1, 1]} : vector<2x512xf32> to vector<2x128xf32>
    %441 = arith.negf %440 : vector<2x128xf32>
    %442 = math.exp %441 : vector<2x128xf32>
    %cst_120 = arith.constant 1.000000e+00 : f32
    %443 = vector.broadcast %cst_120 : f32 to vector<2x128xf32>
    %444 = arith.addf %443, %442 : vector<2x128xf32>
    %445 = arith.divf %443, %444 : vector<2x128xf32>
    %446 = arith.mulf %437, %381 : vector<2x128xf32>
    %447 = arith.mulf %431, %439 : vector<2x128xf32>
    %448 = arith.addf %446, %447 : vector<2x128xf32>
    %449 = math.tanh %448 : vector<2x128xf32>
    %450 = arith.mulf %445, %449 : vector<2x128xf32>
    %451 = arith.truncf %450 : vector<2x128xf32> to vector<2x128xbf16>
    %c128_121 = arith.constant 128 : index
    %c0_122 = arith.constant 0 : index
    %452 = vector.load %arg1[%c128_121, %c0_122] : memref<384x512xbf16, #tpu.memory_space<vmem>>, vector<128x512xbf16>
    %cst_123 = arith.constant dense<0.000000e+00> : vector<2x512xf32>
    %453 = tpu.matmul %451, %452, %cst_123 {dimension_numbers = #tpu.dot_dimension_numbers<[1], [0], [0], [1], [0, 0, 1, 1], [], []>} : vector<2x128xbf16>, vector<128x512xbf16>, vector<2x512xf32> -> vector<2x512xf32>
    %454 = arith.addf %6, %453 : vector<2x512xf32>
    %c256_124 = arith.constant 256 : index
    %c0_125 = arith.constant 0 : index
    %455 = vector.load %arg1[%c256_124, %c0_125] : memref<384x512xbf16, #tpu.memory_space<vmem>>, vector<128x512xbf16>
    %cst_126 = arith.constant dense<0.000000e+00> : vector<2x512xf32>
    %456 = tpu.matmul %416, %455, %cst_126 {dimension_numbers = #tpu.dot_dimension_numbers<[1], [0], [0], [1], [0, 0, 1, 1], [], []>} : vector<2x128xbf16>, vector<128x512xbf16>, vector<2x512xf32> -> vector<2x512xf32>
    %457 = arith.addf %454, %456 : vector<2x512xf32>
    %458 = vector.extract_strided_slice %457 {offsets = [0, 0], sizes = [2, 128], strides = [1, 1]} : vector<2x512xf32> to vector<2x128xf32>
    %459 = arith.negf %458 : vector<2x128xf32>
    %460 = math.exp %459 : vector<2x128xf32>
    %cst_127 = arith.constant 1.000000e+00 : f32
    %461 = vector.broadcast %cst_127 : f32 to vector<2x128xf32>
    %462 = arith.addf %461, %460 : vector<2x128xf32>
    %463 = arith.divf %461, %462 : vector<2x128xf32>
    %464 = vector.extract_strided_slice %457 {offsets = [0, 128], sizes = [2, 128], strides = [1, 1]} : vector<2x512xf32> to vector<2x128xf32>
    %465 = arith.negf %464 : vector<2x128xf32>
    %466 = math.exp %465 : vector<2x128xf32>
    %cst_128 = arith.constant 1.000000e+00 : f32
    %467 = vector.broadcast %cst_128 : f32 to vector<2x128xf32>
    %468 = arith.addf %467, %466 : vector<2x128xf32>
    %469 = arith.divf %467, %468 : vector<2x128xf32>
    %470 = vector.extract_strided_slice %457 {offsets = [0, 256], sizes = [2, 128], strides = [1, 1]} : vector<2x512xf32> to vector<2x128xf32>
    %471 = math.tanh %470 : vector<2x128xf32>
    %472 = vector.extract_strided_slice %457 {offsets = [0, 384], sizes = [2, 128], strides = [1, 1]} : vector<2x512xf32> to vector<2x128xf32>
    %473 = arith.negf %472 : vector<2x128xf32>
    %474 = math.exp %473 : vector<2x128xf32>
    %cst_129 = arith.constant 1.000000e+00 : f32
    %475 = vector.broadcast %cst_129 : f32 to vector<2x128xf32>
    %476 = arith.addf %475, %474 : vector<2x128xf32>
    %477 = arith.divf %475, %476 : vector<2x128xf32>
    %478 = arith.mulf %469, %413 : vector<2x128xf32>
    %479 = arith.mulf %463, %471 : vector<2x128xf32>
    %480 = arith.addf %478, %479 : vector<2x128xf32>
    %481 = math.tanh %480 : vector<2x128xf32>
    %482 = arith.mulf %477, %481 : vector<2x128xf32>
    %483 = arith.truncf %482 : vector<2x128xf32> to vector<2x128xbf16>
    %c7 = arith.constant 7 : index
    %c0_130 = arith.constant 0 : index
    %c0_131 = arith.constant 0 : index
    %484 = vector.load %arg0[%c7, %c0_130, %c0_131] : memref<8x2x1xf32, #tpu.memory_space<vmem>>, vector<1x2x1xf32>
    %485 = vector.shape_cast %484 : vector<1x2x1xf32> to vector<2x1xf32>
    %486 = vector.broadcast %485 : vector<2x1xf32> to vector<2x512xf32>
    %487 = vector.broadcast %0 : vector<1x512xf32> to vector<2x512xf32>
    %488 = arith.mulf %486, %487 : vector<2x512xf32>
    %489 = arith.addf %3, %488 : vector<2x512xf32>
    %c0_132 = arith.constant 0 : index
    %c0_133 = arith.constant 0 : index
    %490 = vector.load %arg1[%c0_132, %c0_133] : memref<384x512xbf16, #tpu.memory_space<vmem>>, vector<128x512xbf16>
    %cst_134 = arith.constant dense<0.000000e+00> : vector<2x512xf32>
    %491 = tpu.matmul %451, %490, %cst_134 {dimension_numbers = #tpu.dot_dimension_numbers<[1], [0], [0], [1], [0, 0, 1, 1], [], []>} : vector<2x128xbf16>, vector<128x512xbf16>, vector<2x512xf32> -> vector<2x512xf32>
    %492 = arith.addf %489, %491 : vector<2x512xf32>
    %493 = vector.extract_strided_slice %492 {offsets = [0, 0], sizes = [2, 128], strides = [1, 1]} : vector<2x512xf32> to vector<2x128xf32>
    %494 = arith.negf %493 : vector<2x128xf32>
    %495 = math.exp %494 : vector<2x128xf32>
    %cst_135 = arith.constant 1.000000e+00 : f32
    %496 = vector.broadcast %cst_135 : f32 to vector<2x128xf32>
    %497 = arith.addf %496, %495 : vector<2x128xf32>
    %498 = arith.divf %496, %497 : vector<2x128xf32>
    %499 = vector.extract_strided_slice %492 {offsets = [0, 128], sizes = [2, 128], strides = [1, 1]} : vector<2x512xf32> to vector<2x128xf32>
    %500 = arith.negf %499 : vector<2x128xf32>
    %501 = math.exp %500 : vector<2x128xf32>
    %cst_136 = arith.constant 1.000000e+00 : f32
    %502 = vector.broadcast %cst_136 : f32 to vector<2x128xf32>
    %503 = arith.addf %502, %501 : vector<2x128xf32>
    %504 = arith.divf %502, %503 : vector<2x128xf32>
    %505 = vector.extract_strided_slice %492 {offsets = [0, 256], sizes = [2, 128], strides = [1, 1]} : vector<2x512xf32> to vector<2x128xf32>
    %506 = math.tanh %505 : vector<2x128xf32>
    %507 = vector.extract_strided_slice %492 {offsets = [0, 384], sizes = [2, 128], strides = [1, 1]} : vector<2x512xf32> to vector<2x128xf32>
    %508 = arith.negf %507 : vector<2x128xf32>
    %509 = math.exp %508 : vector<2x128xf32>
    %cst_137 = arith.constant 1.000000e+00 : f32
    %510 = vector.broadcast %cst_137 : f32 to vector<2x128xf32>
    %511 = arith.addf %510, %509 : vector<2x128xf32>
    %512 = arith.divf %510, %511 : vector<2x128xf32>
    %513 = arith.mulf %504, %448 : vector<2x128xf32>
    %514 = arith.mulf %498, %506 : vector<2x128xf32>
    %515 = arith.addf %513, %514 : vector<2x128xf32>
    %516 = math.tanh %515 : vector<2x128xf32>
    %517 = arith.mulf %512, %516 : vector<2x128xf32>
    %518 = arith.truncf %517 : vector<2x128xf32> to vector<2x128xbf16>
    %c128_138 = arith.constant 128 : index
    %c0_139 = arith.constant 0 : index
    %519 = vector.load %arg1[%c128_138, %c0_139] : memref<384x512xbf16, #tpu.memory_space<vmem>>, vector<128x512xbf16>
    %cst_140 = arith.constant dense<0.000000e+00> : vector<2x512xf32>
    %520 = tpu.matmul %518, %519, %cst_140 {dimension_numbers = #tpu.dot_dimension_numbers<[1], [0], [0], [1], [0, 0, 1, 1], [], []>} : vector<2x128xbf16>, vector<128x512xbf16>, vector<2x512xf32> -> vector<2x512xf32>
    %521 = arith.addf %6, %520 : vector<2x512xf32>
    %c256_141 = arith.constant 256 : index
    %c0_142 = arith.constant 0 : index
    %522 = vector.load %arg1[%c256_141, %c0_142] : memref<384x512xbf16, #tpu.memory_space<vmem>>, vector<128x512xbf16>
    %cst_143 = arith.constant dense<0.000000e+00> : vector<2x512xf32>
    %523 = tpu.matmul %483, %522, %cst_143 {dimension_numbers = #tpu.dot_dimension_numbers<[1], [0], [0], [1], [0, 0, 1, 1], [], []>} : vector<2x128xbf16>, vector<128x512xbf16>, vector<2x512xf32> -> vector<2x512xf32>
    %524 = arith.addf %521, %523 : vector<2x512xf32>
    %525 = vector.extract_strided_slice %524 {offsets = [0, 0], sizes = [2, 128], strides = [1, 1]} : vector<2x512xf32> to vector<2x128xf32>
    %526 = arith.negf %525 : vector<2x128xf32>
    %527 = math.exp %526 : vector<2x128xf32>
    %cst_144 = arith.constant 1.000000e+00 : f32
    %528 = vector.broadcast %cst_144 : f32 to vector<2x128xf32>
    %529 = arith.addf %528, %527 : vector<2x128xf32>
    %530 = arith.divf %528, %529 : vector<2x128xf32>
    %531 = vector.extract_strided_slice %524 {offsets = [0, 128], sizes = [2, 128], strides = [1, 1]} : vector<2x512xf32> to vector<2x128xf32>
    %532 = arith.negf %531 : vector<2x128xf32>
    %533 = math.exp %532 : vector<2x128xf32>
    %cst_145 = arith.constant 1.000000e+00 : f32
    %534 = vector.broadcast %cst_145 : f32 to vector<2x128xf32>
    %535 = arith.addf %534, %533 : vector<2x128xf32>
    %536 = arith.divf %534, %535 : vector<2x128xf32>
    %537 = vector.extract_strided_slice %524 {offsets = [0, 256], sizes = [2, 128], strides = [1, 1]} : vector<2x512xf32> to vector<2x128xf32>
    %538 = math.tanh %537 : vector<2x128xf32>
    %539 = vector.extract_strided_slice %524 {offsets = [0, 384], sizes = [2, 128], strides = [1, 1]} : vector<2x512xf32> to vector<2x128xf32>
    %540 = arith.negf %539 : vector<2x128xf32>
    %541 = math.exp %540 : vector<2x128xf32>
    %cst_146 = arith.constant 1.000000e+00 : f32
    %542 = vector.broadcast %cst_146 : f32 to vector<2x128xf32>
    %543 = arith.addf %542, %541 : vector<2x128xf32>
    %544 = arith.divf %542, %543 : vector<2x128xf32>
    %545 = arith.mulf %536, %480 : vector<2x128xf32>
    %546 = arith.mulf %530, %538 : vector<2x128xf32>
    %547 = arith.addf %545, %546 : vector<2x128xf32>
    %548 = math.tanh %547 : vector<2x128xf32>
    %549 = arith.mulf %544, %548 : vector<2x128xf32>
    %550 = vector.broadcast %7 : vector<1x128xf32> to vector<2x128xf32>
    %551 = arith.mulf %549, %550 : vector<2x128xf32>
    %cst_147 = arith.constant dense<0.000000e+00> : vector<2xf32>
    %552 = vector.multi_reduction <add>, %551, %cst_147 [1] : vector<2x128xf32> to vector<2xf32>
    %553 = vector.shape_cast %552 : vector<2xf32> to vector<2x1xf32>
    %554 = vector.broadcast %8 : vector<1x1xf32> to vector<2x1xf32>
    %555 = arith.addf %553, %554 : vector<2x1xf32>
    %c0_148 = arith.constant 0 : index
    %c0_149 = arith.constant 0 : index
    %556 = vector.load %arg3[%c0_148, %c0_149] : memref<2x1xf32, #tpu.memory_space<vmem>>, vector<2x1xf32>
    tpu.vector_store %arg3[%c0_148, %c0_149], %555 {strides = array<i32>} : memref<2x1xf32, #tpu.memory_space<vmem>>, vector<2x1xf32>,
    return
  }
}

</mosaic_0001>

<llo_original>
// kernel: tpu_custom_call.1
$region0: #{tpu_custom_call.1}
  #allocation0 [shape = 'u32[]', space=smem, size = 0x4, offset = 0x4, fixed_abs, tag = 'smem constant byte address 0x4 - core index']
  #allocation1 [shape = 'u32[144,128]{1,0:T(1,128)}', space=vmem, size = 0x12000, scoped, tag = 'internal scratch']
  %s0 = inlined_call_operand.vmem [shape: f32[8,2,1], index: 0, kind: input, shape index: {}]
  %s1 = inlined_call_operand.hbm [shape: bf16[384,512], index: 1, kind: input, shape index: {}]
  %s2 = inlined_call_operand.hbm [shape: f32[8,512], index: 2, kind: input, shape index: {}]
  %s3 = inlined_call_operand.vmem [shape: f32[2,1], index: 3, kind: output, shape index: {}]
  %s4 = sld [smem:[#allocation0]]
  $region30: #{tpu_custom_call.1} parent=0
    _
  %s6 = ssub.s32 1, %s4
  %s7 = scalar_select 0, %s6, %s4
  $region1: #{tpu_custom_call.1} parent=0
    #allocation2 [shape = 'u8[393216]{0}', space=vmem, size = 0x60000, scoped, tag = 'input window, operand 1, single buffered']
    #allocation3 [shape = 's32[1]{0}', space=sflag, size = 0x4, scoped, tag = 'scoped memory for tpu_custom_call.1']
    #allocation4 [shape = 'u8[16384]{0}', space=vmem, size = 0x4000, scoped, tag = 'input window, operand 2, single buffered']
    #allocation5 [shape = 's32[1]{0}', space=sflag, size = 0x4, scoped, tag = 'scoped memory for tpu_custom_call.1']
    %8 = vsyncpa [#allocation3], 0
    %9 = vsyncpa [#allocation5], 0
    // Predicated region
    $region2: #{tpu_custom_call.1} parent=1 // pred_check
      _
    $region3: #{tpu_custom_call.1} parent=1 // pred_check_branch
      %11 = sbr.rel (0) target = $region5
    $region4: #{tpu_custom_call.1} parent=1 // pred_region
      _
    $region5: #{tpu_custom_call.1} parent=1 // pred_fallthru
      _
    // Predicated region
    $region6: #{tpu_custom_call.1} parent=1 // pred_check
      _
    $region7: #{tpu_custom_call.1} parent=1 // pred_check_branch
      %13 = sbr.rel (0) target = $region9
    $region8: #{tpu_custom_call.1} parent=1 // pred_region
      %s15 = ssub.s32 12288, 12288
      %16 = vsyncadd [#allocation3], %s15
      %s17 = sshll.u32 [#allocation2], 4
      %s18 = int_to_ptr.vmem [resolvable:$true] %s17
      %23 = dma.hbm_to_vmem [thread:$0]  %s1, 12288, %s18, [#allocation3], 256, 256, 16
    $region9: #{tpu_custom_call.1} parent=1 // pred_fallthru
      _
    // Predicated region
    $region10: #{tpu_custom_call.1} parent=1 // pred_check
      _
    $region11: #{tpu_custom_call.1} parent=1 // pred_check_branch
      %25 = sbr.rel (0) target = $region13
    $region12: #{tpu_custom_call.1} parent=1 // pred_region
      %s27 = ssub.s32 512, 512
      %28 = vsyncadd [#allocation5], %s27
      %s30 = sshll.u32 [#allocation4], 4
      %s31 = int_to_ptr.vmem [resolvable:$true] %s30
      %33 = dma.hbm_to_vmem [thread:$0]  %s2, 512, %s31, [#allocation5]
    $region13: #{tpu_custom_call.1} parent=1 // pred_fallthru
      _
    // Predicated region
    $region14: #{tpu_custom_call.1} parent=1 // pred_check
      _
    $region15: #{tpu_custom_call.1} parent=1 // pred_check_branch
      %35 = sbr.rel (0) target = $region17
    $region16: #{tpu_custom_call.1} parent=1 // pred_region
      %36 = dma.done [#allocation3], 12288
    $region17: #{tpu_custom_call.1} parent=1 // pred_fallthru
      _
    // Predicated region
    $region18: #{tpu_custom_call.1} parent=1 // pred_check
      _
    $region19: #{tpu_custom_call.1} parent=1 // pred_check_branch
      %38 = sbr.rel (0) target = $region21
    $region20: #{tpu_custom_call.1} parent=1 // pred_region
      %39 = dma.done [#allocation5], 512
    $region21: #{tpu_custom_call.1} parent=1 // pred_fallthru
      _
    %v41 = vld [vmem:[#allocation4] ss:$8 sm:$0xf]
    %s42 = scalar_lea.vmem [#allocation4], 1
    %v43 = vld [vmem:[%s42] ss:$8 sm:$0xf]
    %v45 = vlaneseq
    %v46 = vshrl.u32 %v45, 7
    %v47 = vsub.s32 0, %v46
    %v48 = vrot.slane %v43, %v47
    %v49 = vlaneseq
    %v50 = vshrl.u32 %v49, 7
    %v51 = vsub.s32 1, %v50
    %v52 = vrot.slane %v43, %v51
    %v53 = vlaneseq
    %v54 = vshrl.u32 %v53, 7
    %v55 = vsub.s32 2, %v54
    %v56 = vrot.slane %v43, %v55
    %v57 = vlaneseq
    %v58 = vshrl.u32 %v57, 7
    %v59 = vsub.s32 3, %v58
    %v60 = vrot.slane %v43, %v59
    %s65 = scalar_lea.vmem [#allocation4], 2
    %v66 = vld [vmem:[%s65] ss:$8 sm:$0xf]
    %v68 = vlaneseq
    %v69 = vshrl.u32 %v68, 7
    %v70 = vsub.s32 0, %v69
    %v71 = vrot.slane %v66, %v70
    %v72 = vlaneseq
    %v73 = vshrl.u32 %v72, 7
    %v74 = vsub.s32 1, %v73
    %v75 = vrot.slane %v66, %v74
    %v76 = vlaneseq
    %v77 = vshrl.u32 %v76, 7
    %v78 = vsub.s32 2, %v77
    %v79 = vrot.slane %v66, %v78
    %v80 = vlaneseq
    %v81 = vshrl.u32 %v80, 7
    %v82 = vsub.s32 3, %v81
    %v83 = vrot.slane %v66, %v82
    %v88 = vld [vmem:[#allocation4 + $0x3] ss:$0 sm:$0xff]
    %v89 = vld [vmem:[#allocation4 + $0x4] ss:$0 sm:$0xff]
    %v90 = vld [vmem:[%s0] sm:$0x3]
    %92 = vset.pattern.permute.xlu0 0
    %93 = vperm.xlu0 %92, %v90
    %v94 = vpop.permute.xlu0 %93
    %v97 = vlaneseq
    %v98 = vshrl.u32 %v97, 7
    %v99 = vsub.s32 0, %v98
    %v100 = vrot.slane %v41, %v99
    %v101 = vlaneseq
    %v102 = vshrl.u32 %v101, 7
    %v103 = vsub.s32 1, %v102
    %v104 = vrot.slane %v41, %v103
    %v105 = vlaneseq
    %v106 = vshrl.u32 %v105, 7
    %v107 = vsub.s32 2, %v106
    %v108 = vrot.slane %v41, %v107
    %v109 = vlaneseq
    %v110 = vshrl.u32 %v109, 7
    %v111 = vsub.s32 3, %v110
    %v112 = vrot.slane %v41, %v111
    %v117 = vmul.f32 %v94, %v100
    %v118 = vmul.f32 %v94, %v104
    %v119 = vmul.f32 %v94, %v108
    %v120 = vmul.f32 %v94, %v112
    %v121 = vadd.f32 %v48, %v117
    %v122 = vadd.f32 %v52, %v118
    %v123 = vadd.f32 %v56, %v119
    %v124 = vadd.f32 %v60, %v120
    %v125 = vld [vmem:[#allocation2] sm:$0xff]
    %v126 = vld [vmem:[#allocation2 + $0x8] sm:$0xff]
    %v127 = vld [vmem:[#allocation2 + $0x10] sm:$0xff]
    %v128 = vld [vmem:[#allocation2 + $0x18] sm:$0xff]
    %v129 = vld [vmem:[#allocation2 + $0x20] sm:$0xff]
    %v130 = vld [vmem:[#allocation2 + $0x28] sm:$0xff]
    %v131 = vld [vmem:[#allocation2 + $0x30] sm:$0xff]
    %v132 = vld [vmem:[#allocation2 + $0x38] sm:$0xff]
    %v133 = vld [vmem:[#allocation2 + $0x40] sm:$0xff]
    %v134 = vld [vmem:[#allocation2 + $0x48] sm:$0xff]
    %v135 = vld [vmem:[#allocation2 + $0x50] sm:$0xff]
    %v136 = vld [vmem:[#allocation2 + $0x58] sm:$0xff]
    %v137 = vld [vmem:[#allocation2 + $0x60] sm:$0xff]
    %v138 = vld [vmem:[#allocation2 + $0x68] sm:$0xff]
    %v139 = vld [vmem:[#allocation2 + $0x70] sm:$0xff]
    %v140 = vld [vmem:[#allocation2 + $0x78] sm:$0xff]
    %v141 = vld [vmem:[#allocation2 + $0x80] sm:$0xff]
    %v142 = vld [vmem:[#allocation2 + $0x88] sm:$0xff]
    %v143 = vld [vmem:[#allocation2 + $0x90] sm:$0xff]
    %v144 = vld [vmem:[#allocation2 + $0x98] sm:$0xff]
    %v145 = vld [vmem:[#allocation2 + $0xa0] sm:$0xff]
    %v146 = vld [vmem:[#allocation2 + $0xa8] sm:$0xff]
    %v147 = vld [vmem:[#allocation2 + $0xb0] sm:$0xff]
    %v148 = vld [vmem:[#allocation2 + $0xb8] sm:$0xff]
    %v149 = vld [vmem:[#allocation2 + $0xc0] sm:$0xff]
    %v150 = vld [vmem:[#allocation2 + $0xc8] sm:$0xff]
    %v151 = vld [vmem:[#allocation2 + $0xd0] sm:$0xff]
    %v152 = vld [vmem:[#allocation2 + $0xd8] sm:$0xff]
    %v153 = vld [vmem:[#allocation2 + $0xe0] sm:$0xff]
    %v154 = vld [vmem:[#allocation2 + $0xe8] sm:$0xff]
    %v155 = vld [vmem:[#allocation2 + $0xf0] sm:$0xff]
    %v156 = vld [vmem:[#allocation2 + $0xf8] sm:$0xff]
    %v189 = vunpack.c.l.b16 %v125
    %v190 = vunpack.c.h.b16 %v125
    %v191 = vunpack.c.l.b16 %v126
    %v192 = vunpack.c.h.b16 %v126
    %v193 = vunpack.c.l.b16 %v127
    %v194 = vunpack.c.h.b16 %v127
    %v195 = vunpack.c.l.b16 %v128
    %v196 = vunpack.c.h.b16 %v128
    %v197 = vunpack.c.l.b16 %v129
    %v198 = vunpack.c.h.b16 %v129
    %v199 = vunpack.c.l.b16 %v130
    %v200 = vunpack.c.h.b16 %v130
    %v201 = vunpack.c.l.b16 %v131
    %v202 = vunpack.c.h.b16 %v131
    %v203 = vunpack.c.l.b16 %v132
    %v204 = vunpack.c.h.b16 %v132
    %v205 = vunpack.c.l.b16 %v133
    %v206 = vunpack.c.h.b16 %v133
    %v207 = vunpack.c.l.b16 %v134
    %v208 = vunpack.c.h.b16 %v134
    %v209 = vunpack.c.l.b16 %v135
    %v210 = vunpack.c.h.b16 %v135
    %v211 = vunpack.c.l.b16 %v136
    %v212 = vunpack.c.h.b16 %v136
    %v213 = vunpack.c.l.b16 %v137
    %v214 = vunpack.c.h.b16 %v137
    %v215 = vunpack.c.l.b16 %v138
    %v216 = vunpack.c.h.b16 %v138
    %v217 = vunpack.c.l.b16 %v139
    %v218 = vunpack.c.h.b16 %v139
    %v219 = vunpack.c.l.b16 %v140
    %v220 = vunpack.c.h.b16 %v140
    %v221 = vunpack.c.l.b16 %v141
    %v222 = vunpack.c.h.b16 %v141
    %v223 = vunpack.c.l.b16 %v142
    %v224 = vunpack.c.h.b16 %v142
    %v225 = vunpack.c.l.b16 %v143
    %v226 = vunpack.c.h.b16 %v143
    %v227 = vunpack.c.l.b16 %v144
    %v228 = vunpack.c.h.b16 %v144
    %v229 = vunpack.c.l.b16 %v145
    %v230 = vunpack.c.h.b16 %v145
    %v231 = vunpack.c.l.b16 %v146
    %v232 = vunpack.c.h.b16 %v146
    %v233 = vunpack.c.l.b16 %v147
    %v234 = vunpack.c.h.b16 %v147
    %v235 = vunpack.c.l.b16 %v148
    %v236 = vunpack.c.h.b16 %v148
    %v237 = vunpack.c.l.b16 %v149
    %v238 = vunpack.c.h.b16 %v149
    %v239 = vunpack.c.l.b16 %v150
    %v240 = vunpack.c.h.b16 %v150
    %v241 = vunpack.c.l.b16 %v151
    %v242 = vunpack.c.h.b16 %v151
    %v243 = vunpack.c.l.b16 %v152
    %v244 = vunpack.c.h.b16 %v152
    %v245 = vunpack.c.l.b16 %v153
    %v246 = vunpack.c.h.b16 %v153
    %v247 = vunpack.c.l.b16 %v154
    %v248 = vunpack.c.h.b16 %v154
    %v249 = vunpack.c.l.b16 %v155
    %v250 = vunpack.c.h.b16 %v155
    %v251 = vunpack.c.l.b16 %v156
    %v252 = vunpack.c.h.b16 %v156
    %v253 = vpack.c.b16 %v193, %v189
    %v254 = vpack.c.b16 %v194, %v190
    %v255 = vpack.c.b16 %v195, %v191
    %v256 = vpack.c.b16 %v196, %v192
    %v257 = vpack.c.b16 %v201, %v197
    %v258 = vpack.c.b16 %v202, %v198
    %v259 = vpack.c.b16 %v203, %v199
    %v260 = vpack.c.b16 %v204, %v200
    %v261 = vpack.c.b16 %v209, %v205
    %v262 = vpack.c.b16 %v210, %v206
    %v263 = vpack.c.b16 %v211, %v207
    %v264 = vpack.c.b16 %v212, %v208
    %v265 = vpack.c.b16 %v217, %v213
    %v266 = vpack.c.b16 %v218, %v214
    %v267 = vpack.c.b16 %v219, %v215
    %v268 = vpack.c.b16 %v220, %v216
    %v269 = vpack.c.b16 %v225, %v221
    %v270 = vpack.c.b16 %v226, %v222
    %v271 = vpack.c.b16 %v227, %v223
    %v272 = vpack.c.b16 %v228, %v224
    %v273 = vpack.c.b16 %v233, %v229
    %v274 = vpack.c.b16 %v234, %v230
    %v275 = vpack.c.b16 %v235, %v231
    %v276 = vpack.c.b16 %v236, %v232
    %v277 = vpack.c.b16 %v241, %v237
    %v278 = vpack.c.b16 %v242, %v238
    %v279 = vpack.c.b16 %v243, %v239
    %v280 = vpack.c.b16 %v244, %v240
    %v281 = vpack.c.b16 %v249, %v245
    %v282 = vpack.c.b16 %v250, %v246
    %v283 = vpack.c.b16 %v251, %v247
    %v284 = vpack.c.b16 %v252, %v248
    %317 = vmatprep.subr.bf16.mxu0 %v254
    %318 = vmatpush1.bf16.msra.mxu0 %v253
    %319 = vmatprep.subr.bf16.mxu0 %v258
    %320 = vmatpush1.bf16.msra.mxu0 %v257
    %321 = vmatprep.subr.bf16.mxu0 %v262
    %322 = vmatpush1.bf16.msra.mxu0 %v261
    %323 = vmatprep.subr.bf16.mxu0 %v266
    %324 = vmatpush1.bf16.msra.mxu0 %v265
    %325 = vmatprep.subr.bf16.mxu0 %v270
    %326 = vmatpush1.bf16.msra.mxu0 %v269
    %327 = vmatprep.subr.bf16.mxu0 %v274
    %328 = vmatpush1.bf16.msra.mxu0 %v273
    %329 = vmatprep.subr.bf16.mxu0 %v278
    %330 = vmatpush1.bf16.msra.mxu0 %v277
    %331 = vmatprep.subr.bf16.mxu0 %v282
    %332 = vmatpush1.bf16.msra.mxu0 %v281
    %333 = vmatprep.subr.bf16.mxu0 0
    %334 = vmatpush1.bf16.msra.mxu0 0
    %335 = vmatprep.subr.bf16.mxu0 0
    %336 = vmatpush1.bf16.msra.mxu0 0
    %337 = vmatprep.subr.bf16.mxu0 0
    %338 = vmatpush1.bf16.msra.mxu0 0
    %339 = vmatprep.subr.bf16.mxu0 0
    %340 = vmatpush1.bf16.msra.mxu0 0
    %341 = vmatprep.subr.bf16.mxu0 0
    %342 = vmatpush1.bf16.msra.mxu0 0
    %343 = vmatprep.subr.bf16.mxu0 0
    %344 = vmatpush1.bf16.msra.mxu0 0
    %345 = vmatprep.subr.bf16.mxu0 0
    %346 = vmatpush1.bf16.msra.mxu0 0
    %347 = vmatprep.subr.bf16.mxu0 0
    %348 = vmatpush1.bf16.msra.mxu0 0
    %349 = vmatprep.mubr.bf16.mxu0 0
    %350 = vmatmul.mubr.bf16.gmra.mrb[0].mxu0 0
    %v351 = vpop.f32.mrb[0].mxu0
    %v352 = vadd.f32 0.0, %v351
    %v353 = vpop.f32.mrb[0].mxu0
    %v354 = vadd.f32 0.0, %v353
    %v355 = vpop.f32.mrb[0].mxu0
    %v356 = vpop.f32.mrb[0].mxu0
    %357 = vdwg.mxu0
    %358 = vmatprep.subr.bf16.mxu0 %v256
    %359 = vmatpush1.bf16.msra.mxu0 %v255
    %360 = vmatprep.subr.bf16.mxu0 %v260
    %361 = vmatpush1.bf16.msra.mxu0 %v259
    %362 = vmatprep.subr.bf16.mxu0 %v264
    %363 = vmatpush1.bf16.msra.mxu0 %v263
    %364 = vmatprep.subr.bf16.mxu0 %v268
    %365 = vmatpush1.bf16.msra.mxu0 %v267
    %366 = vmatprep.subr.bf16.mxu0 %v272
    %367 = vmatpush1.bf16.msra.mxu0 %v271
    %368 = vmatprep.subr.bf16.mxu0 %v276
    %369 = vmatpush1.bf16.msra.mxu0 %v275
    %370 = vmatprep.subr.bf16.mxu0 %v280
    %371 = vmatpush1.bf16.msra.mxu0 %v279
    %372 = vmatprep.subr.bf16.mxu0 %v284
    %373 = vmatpush1.bf16.msra.mxu0 %v283
    %374 = vmatprep.subr.bf16.mxu0 0
    %375 = vmatpush1.bf16.msra.mxu0 0
    %376 = vmatprep.subr.bf16.mxu0 0
    %377 = vmatpush1.bf16.msra.mxu0 0
    %378 = vmatprep.subr.bf16.mxu0 0
    %379 = vmatpush1.bf16.msra.mxu0 0
    %380 = vmatprep.subr.bf16.mxu0 0
    %381 = vmatpush1.bf16.msra.mxu0 0
    %382 = vmatprep.subr.bf16.mxu0 0
    %383 = vmatpush1.bf16.msra.mxu0 0
    %384 = vmatprep.subr.bf16.mxu0 0
    %385 = vmatpush1.bf16.msra.mxu0 0
    %386 = vmatprep.subr.bf16.mxu0 0
    %387 = vmatpush1.bf16.msra.mxu0 0
    %388 = vmatprep.subr.bf16.mxu0 0
    %389 = vmatpush1.bf16.msra.mxu0 0
    %390 = vmatprep.mubr.bf16.mxu0 0
    %391 = vmatmul.mubr.bf16.gmra.mrb[0].mxu0 0
    %v392 = vpop.f32.mrb[0].mxu0
    %v393 = vadd.f32 0.0, %v392
    %v394 = vpop.f32.mrb[0].mxu0
    %v395 = vadd.f32 0.0, %v394
    %v396 = vpop.f32.mrb[0].mxu0
    %v397 = vpop.f32.mrb[0].mxu0
    %398 = vdwg.mxu0
    %v399 = vadd.f32 %v121, %v352
    %v400 = vadd.f32 %v122, %v354
    %v401 = vadd.f32 %v123, %v393
    %v402 = vadd.f32 %v124, %v395
    %v403 = vxor.u32 %v399, 2147483648
    %v404 = vmul.f32 %v403, 1.442695
    %v405 = vpow.pop %v404
    %v406 = vadd.f32 %v405, 1.0
    %v407 = vrcp.pop %v406
    %v408 = vmul.f32 1.0, %v407
    %v409 = vxor.u32 %v400, 2147483648
    %v410 = vmul.f32 %v409, 1.442695
    %v411 = vpow.pop %v410
    %v412 = vadd.f32 %v411, 1.0
    %v413 = vrcp.pop %v412
    %v414 = vmul.f32 1.0, %v413
    %v415 = vtanh.pop %v401
    %v416 = vxor.u32 %v402, 2147483648
    %v417 = vmul.f32 %v416, 1.442695
    %v418 = vpow.pop %v417
    %v419 = vadd.f32 %v418, 1.0
    %v420 = vrcp.pop %v419
    %v421 = vmul.f32 1.0, %v420
    %v422 = vmul.f32 %v414, 0.0
    %v423 = vmul.f32 %v408, %v415
    %v424 = vadd.f32 %v422, %v423
    %v425 = vtanh.pop %v424
    %v426 = vmul.f32 %v421, %v425
    %v427 = vpack.c.bf16 %v426, %v426
    %v428 = vld [vmem:[#allocation2 + $0x100] sm:$0xff]
    %v429 = vld [vmem:[#allocation2 + $0x108] sm:$0xff]
    %v430 = vld [vmem:[#allocation2 + $0x110] sm:$0xff]
    %v431 = vld [vmem:[#allocation2 + $0x118] sm:$0xff]
    %v432 = vld [vmem:[#allocation2 + $0x120] sm:$0xff]
    %v433 = vld [vmem:[#allocation2 + $0x128] sm:$0xff]
    %v434 = vld [vmem:[#allocation2 + $0x130] sm:$0xff]
    %v435 = vld [vmem:[#allocation2 + $0x138] sm:$0xff]
    %v436 = vld [vmem:[#allocation2 + $0x140] sm:$0xff]
    %v437 = vld [vmem:[#allocation2 + $0x148] sm:$0xff]
    %v438 = vld [vmem:[#allocation2 + $0x150] sm:$0xff]
    %v439 = vld [vmem:[#allocation2 + $0x158] sm:$0xff]
    %v440 = vld [vmem:[#allocation2 + $0x160] sm:$0xff]
    %v441 = vld [vmem:[#allocation2 + $0x168] sm:$0xff]
    %v442 = vld [vmem:[#allocation2 + $0x170] sm:$0xff]
    %v443 = vld [vmem:[#allocation2 + $0x178] sm:$0xff]
    %v444 = vld [vmem:[#allocation2 + $0x180] sm:$0xff]
    %v445 = vld [vmem:[#allocation2 + $0x188] sm:$0xff]
    %v446 = vld [vmem:[#allocation2 + $0x190] sm:$0xff]
    %v447 = vld [vmem:[#allocation2 + $0x198] sm:$0xff]
    %v448 = vld [vmem:[#allocation2 + $0x1a0] sm:$0xff]
    %v449 = vld [vmem:[#allocation2 + $0x1a8] sm:$0xff]
    %v450 = vld [vmem:[#allocation2 + $0x1b0] sm:$0xff]
    %v451 = vld [vmem:[#allocation2 + $0x1b8] sm:$0xff]
    %v452 = vld [vmem:[#allocation2 + $0x1c0] sm:$0xff]
    %v453 = vld [vmem:[#allocation2 + $0x1c8] sm:$0xff]
    %v454 = vld [vmem:[#allocation2 + $0x1d0] sm:$0xff]
    %v455 = vld [vmem:[#allocation2 + $0x1d8] sm:$0xff]
    %v456 = vld [vmem:[#allocation2 + $0x1e0] sm:$0xff]
    %v457 = vld [vmem:[#allocation2 + $0x1e8] sm:$0xff]
    %v458 = vld [vmem:[#allocation2 + $0x1f0] sm:$0xff]
    %v459 = vld [vmem:[#allocation2 + $0x1f8] sm:$0xff]
    %v492 = vunpack.c.l.b16 %v428
    %v493 = vunpack.c.h.b16 %v428
    %v494 = vunpack.c.l.b16 %v429
    %v495 = vunpack.c.h.b16 %v429
    %v496 = vunpack.c.l.b16 %v430
    %v497 = vunpack.c.h.b16 %v430
    %v498 = vunpack.c.l.b16 %v431
    %v499 = vunpack.c.h.b16 %v431
    %v500 = vunpack.c.l.b16 %v432
    %v501 = vunpack.c.h.b16 %v432
    %v502 = vunpack.c.l.b16 %v433
    %v503 = vunpack.c.h.b16 %v433
    %v504 = vunpack.c.l.b16 %v434
    %v505 = vunpack.c.h.b16 %v434
    %v506 = vunpack.c.l.b16 %v435
    %v507 = vunpack.c.h.b16 %v435
    %v508 = vunpack.c.l.b16 %v436
    %v509 = vunpack.c.h.b16 %v436
    %v510 = vunpack.c.l.b16 %v437
    %v511 = vunpack.c.h.b16 %v437
    %v512 = vunpack.c.l.b16 %v438
    %v513 = vunpack.c.h.b16 %v438
    %v514 = vunpack.c.l.b16 %v439
    %v515 = vunpack.c.h.b16 %v439
    %v516 = vunpack.c.l.b16 %v440
    %v517 = vunpack.c.h.b16 %v440
    %v518 = vunpack.c.l.b16 %v441
    %v519 = vunpack.c.h.b16 %v441
    %v520 = vunpack.c.l.b16 %v442
    %v521 = vunpack.c.h.b16 %v442
    %v522 = vunpack.c.l.b16 %v443
    %v523 = vunpack.c.h.b16 %v443
    %v524 = vunpack.c.l.b16 %v444
    %v525 = vunpack.c.h.b16 %v444
    %v526 = vunpack.c.l.b16 %v445
    %v527 = vunpack.c.h.b16 %v445
    %v528 = vunpack.c.l.b16 %v446
    %v529 = vunpack.c.h.b16 %v446
    %v530 = vunpack.c.l.b16 %v447
    %v531 = vunpack.c.h.b16 %v447
    %v532 = vunpack.c.l.b16 %v448
    %v533 = vunpack.c.h.b16 %v448
    %v534 = vunpack.c.l.b16 %v449
    %v535 = vunpack.c.h.b16 %v449
    %v536 = vunpack.c.l.b16 %v450
    %v537 = vunpack.c.h.b16 %v450
    %v538 = vunpack.c.l.b16 %v451
    %v539 = vunpack.c.h.b16 %v451
    %v540 = vunpack.c.l.b16 %v452
    %v541 = vunpack.c.h.b16 %v452
    %v542 = vunpack.c.l.b16 %v453
    %v543 = vunpack.c.h.b16 %v453
    %v544 = vunpack.c.l.b16 %v454
    %v545 = vunpack.c.h.b16 %v454
    %v546 = vunpack.c.l.b16 %v455
    %v547 = vunpack.c.h.b16 %v455
    %v548 = vunpack.c.l.b16 %v456
    %v549 = vunpack.c.h.b16 %v456
    %v550 = vunpack.c.l.b16 %v457
    %v551 = vunpack.c.h.b16 %v457
    %v552 = vunpack.c.l.b16 %v458
    %v553 = vunpack.c.h.b16 %v458
    %v554 = vunpack.c.l.b16 %v459
    %v555 = vunpack.c.h.b16 %v459
    %v556 = vpack.c.b16 %v496, %v492
    %v557 = vpack.c.b16 %v497, %v493
    %v558 = vpack.c.b16 %v498, %v494
    %v559 = vpack.c.b16 %v499, %v495
    %v560 = vpack.c.b16 %v504, %v500
    %v561 = vpack.c.b16 %v505, %v501
    %v562 = vpack.c.b16 %v506, %v502
    %v563 = vpack.c.b16 %v507, %v503
    %v564 = vpack.c.b16 %v512, %v508
    %v565 = vpack.c.b16 %v513, %v509
    %v566 = vpack.c.b16 %v514, %v510
    %v567 = vpack.c.b16 %v515, %v511
    %v568 = vpack.c.b16 %v520, %v516
    %v569 = vpack.c.b16 %v521, %v517
    %v570 = vpack.c.b16 %v522, %v518
    %v571 = vpack.c.b16 %v523, %v519
    %v572 = vpack.c.b16 %v528, %v524
    %v573 = vpack.c.b16 %v529, %v525
    %v574 = vpack.c.b16 %v530, %v526
    %v575 = vpack.c.b16 %v531, %v527
    %v576 = vpack.c.b16 %v536, %v532
    %v577 = vpack.c.b16 %v537, %v533
    %v578 = vpack.c.b16 %v538, %v534
    %v579 = vpack.c.b16 %v539, %v535
    %v580 = vpack.c.b16 %v544, %v540
    %v581 = vpack.c.b16 %v545, %v541
    %v582 = vpack.c.b16 %v546, %v542
    %v583 = vpack.c.b16 %v547, %v543
    %v584 = vpack.c.b16 %v552, %v548
    %v585 = vpack.c.b16 %v553, %v549
    %v586 = vpack.c.b16 %v554, %v550
    %v587 = vpack.c.b16 %v555, %v551
    %620 = vmatprep.subr.bf16.mxu0 %v557
    %621 = vmatpush1.bf16.msra.mxu0 %v556
    %622 = vmatprep.subr.bf16.mxu0 %v561
    %623 = vmatpush1.bf16.msra.mxu0 %v560
    %624 = vmatprep.subr.bf16.mxu0 %v565
    %625 = vmatpush1.bf16.msra.mxu0 %v564
    %626 = vmatprep.subr.bf16.mxu0 %v569
    %627 = vmatpush1.bf16.msra.mxu0 %v568
    %628 = vmatprep.subr.bf16.mxu0 %v573
    %629 = vmatpush1.bf16.msra.mxu0 %v572
    %630 = vmatprep.subr.bf16.mxu0 %v577
    %631 = vmatpush1.bf16.msra.mxu0 %v576
    %632 = vmatprep.subr.bf16.mxu0 %v581
    %633 = vmatpush1.bf16.msra.mxu0 %v580
    %634 = vmatprep.subr.bf16.mxu0 %v585
    %635 = vmatpush1.bf16.msra.mxu0 %v584
    %636 = vmatprep.subr.bf16.mxu0 0
    %637 = vmatpush1.bf16.msra.mxu0 0
    %638 = vmatprep.subr.bf16.mxu0 0
    %639 = vmatpush1.bf16.msra.mxu0 0
    %640 = vmatprep.subr.bf16.mxu0 0
    %641 = vmatpush1.bf16.msra.mxu0 0
    %642 = vmatprep.subr.bf16.mxu0 0
    %643 = vmatpush1.bf16.msra.mxu0 0
    %644 = vmatprep.subr.bf16.mxu0 0
    %645 = vmatpush1.bf16.msra.mxu0 0
    %646 = vmatprep.subr.bf16.mxu0 0
    %647 = vmatpush1.bf16.msra.mxu0 0
    %648 = vmatprep.subr.bf16.mxu0 0
    %649 = vmatpush1.bf16.msra.mxu0 0
    %650 = vmatprep.subr.bf16.mxu0 0
    %651 = vmatpush1.bf16.msra.mxu0 0
    %652 = vmatprep.mubr.bf16.mxu0 0
    %653 = vmatmul.mubr.bf16.gmra.mrb[0].mxu0 %v427
    %v654 = vpop.f32.mrb[0].mxu0
    %v655 = vadd.f32 0.0, %v654
    %v656 = vpop.f32.mrb[0].mxu0
    %v657 = vadd.f32 0.0, %v656
    %v658 = vpop.f32.mrb[0].mxu0
    %v659 = vpop.f32.mrb[0].mxu0
    %660 = vdwg.mxu0
    %661 = vmatprep.subr.bf16.mxu0 %v559
    %662 = vmatpush1.bf16.msra.mxu0 %v558
    %663 = vmatprep.subr.bf16.mxu0 %v563
    %664 = vmatpush1.bf16.msra.mxu0 %v562
    %665 = vmatprep.subr.bf16.mxu0 %v567
    %666 = vmatpush1.bf16.msra.mxu0 %v566
    %667 = vmatprep.subr.bf16.mxu0 %v571
    %668 = vmatpush1.bf16.msra.mxu0 %v570
    %669 = vmatprep.subr.bf16.mxu0 %v575
    %670 = vmatpush1.bf16.msra.mxu0 %v574
    %671 = vmatprep.subr.bf16.mxu0 %v579
    %672 = vmatpush1.bf16.msra.mxu0 %v578
    %673 = vmatprep.subr.bf16.mxu0 %v583
    %674 = vmatpush1.bf16.msra.mxu0 %v582
    %675 = vmatprep.subr.bf16.mxu0 %v587
    %676 = vmatpush1.bf16.msra.mxu0 %v586
    %677 = vmatprep.subr.bf16.mxu0 0
    %678 = vmatpush1.bf16.msra.mxu0 0
    %679 = vmatprep.subr.bf16.mxu0 0
    %680 = vmatpush1.bf16.msra.mxu0 0
    %681 = vmatprep.subr.bf16.mxu0 0
    %682 = vmatpush1.bf16.msra.mxu0 0
    %683 = vmatprep.subr.bf16.mxu0 0
    %684 = vmatpush1.bf16.msra.mxu0 0
    %685 = vmatprep.subr.bf16.mxu0 0
    %686 = vmatpush1.bf16.msra.mxu0 0
    %687 = vmatprep.subr.bf16.mxu0 0
    %688 = vmatpush1.bf16.msra.mxu0 0
    %689 = vmatprep.subr.bf16.mxu0 0
    %690 = vmatpush1.bf16.msra.mxu0 0
    %691 = vmatprep.subr.bf16.mxu0 0
    %692 = vmatpush1.bf16.msra.mxu0 0
    %693 = vmatprep.mubr.bf16.mxu0 0
    %694 = vmatmul.mubr.bf16.gmra.mrb[0].mxu0 %v427
    %v695 = vpop.f32.mrb[0].mxu0
    %v696 = vadd.f32 0.0, %v695
    %v697 = vpop.f32.mrb[0].mxu0
    %v698 = vadd.f32 0.0, %v697
    %v699 = vpop.f32.mrb[0].mxu0
    %v700 = vpop.f32.mrb[0].mxu0
    %701 = vdwg.mxu0
    %v702 = vadd.f32 %v71, %v655
    %v703 = vadd.f32 %v75, %v657
    %v704 = vadd.f32 %v79, %v696
    %v705 = vadd.f32 %v83, %v698
    %v706 = vld [vmem:[#allocation2 + $0x200] sm:$0xff]
    %v707 = vld [vmem:[#allocation2 + $0x208] sm:$0xff]
    %v708 = vld [vmem:[#allocation2 + $0x210] sm:$0xff]
    %v709 = vld [vmem:[#allocation2 + $0x218] sm:$0xff]
    %v710 = vld [vmem:[#allocation2 + $0x220] sm:$0xff]
    %v711 = vld [vmem:[#allocation2 + $0x228] sm:$0xff]
    %v712 = vld [vmem:[#allocation2 + $0x230] sm:$0xff]
    %v713 = vld [vmem:[#allocation2 + $0x238] sm:$0xff]
    %v714 = vld [vmem:[#allocation2 + $0x240] sm:$0xff]
    %v715 = vld [vmem:[#allocation2 + $0x248] sm:$0xff]
    %v716 = vld [vmem:[#allocation2 + $0x250] sm:$0xff]
    %v717 = vld [vmem:[#allocation2 + $0x258] sm:$0xff]
    %v718 = vld [vmem:[#allocation2 + $0x260] sm:$0xff]
    %v719 = vld [vmem:[#allocation2 + $0x268] sm:$0xff]
    %v720 = vld [vmem:[#allocation2 + $0x270] sm:$0xff]
    %v721 = vld [vmem:[#allocation2 + $0x278] sm:$0xff]
    %v722 = vld [vmem:[#allocation2 + $0x280] sm:$0xff]
    %v723 = vld [vmem:[#allocation2 + $0x288] sm:$0xff]
    %v724 = vld [vmem:[#allocation2 + $0x290] sm:$0xff]
    %v725 = vld [vmem:[#allocation2 + $0x298] sm:$0xff]
    %v726 = vld [vmem:[#allocation2 + $0x2a0] sm:$0xff]
    %v727 = vld [vmem:[#allocation2 + $0x2a8] sm:$0xff]
    %v728 = vld [vmem:[#allocation2 + $0x2b0] sm:$0xff]
    %v729 = vld [vmem:[#allocation2 + $0x2b8] sm:$0xff]
    %v730 = vld [vmem:[#allocation2 + $0x2c0] sm:$0xff]
    %v731 = vld [vmem:[#allocation2 + $0x2c8] sm:$0xff]
    %v732 = vld [vmem:[#allocation2 + $0x2d0] sm:$0xff]
    %v733 = vld [vmem:[#allocation2 + $0x2d8] sm:$0xff]
    %v734 = vld [vmem:[#allocation2 + $0x2e0] sm:$0xff]
    %v735 = vld [vmem:[#allocation2 + $0x2e8] sm:$0xff]
    %v736 = vld [vmem:[#allocation2 + $0x2f0] sm:$0xff]
    %v737 = vld [vmem:[#allocation2 + $0x2f8] sm:$0xff]
    %v770 = vunpack.c.l.b16 %v706
    %v771 = vunpack.c.h.b16 %v706
    %v772 = vunpack.c.l.b16 %v707
    %v773 = vunpack.c.h.b16 %v707
    %v774 = vunpack.c.l.b16 %v708
    %v775 = vunpack.c.h.b16 %v708
    %v776 = vunpack.c.l.b16 %v709
    %v777 = vunpack.c.h.b16 %v709
    %v778 = vunpack.c.l.b16 %v710
    %v779 = vunpack.c.h.b16 %v710
    %v780 = vunpack.c.l.b16 %v711
    %v781 = vunpack.c.h.b16 %v711
    %v782 = vunpack.c.l.b16 %v712
    %v783 = vunpack.c.h.b16 %v712
    %v784 = vunpack.c.l.b16 %v713
    %v785 = vunpack.c.h.b16 %v713
    %v786 = vunpack.c.l.b16 %v714
    %v787 = vunpack.c.h.b16 %v714
    %v788 = vunpack.c.l.b16 %v715
    %v789 = vunpack.c.h.b16 %v715
    %v790 = vunpack.c.l.b16 %v716
    %v791 = vunpack.c.h.b16 %v716
    %v792 = vunpack.c.l.b16 %v717
    %v793 = vunpack.c.h.b16 %v717
    %v794 = vunpack.c.l.b16 %v718
    %v795 = vunpack.c.h.b16 %v718
    %v796 = vunpack.c.l.b16 %v719
    %v797 = vunpack.c.h.b16 %v719
    %v798 = vunpack.c.l.b16 %v720
    %v799 = vunpack.c.h.b16 %v720
    %v800 = vunpack.c.l.b16 %v721
    %v801 = vunpack.c.h.b16 %v721
    %v802 = vunpack.c.l.b16 %v722
    %v803 = vunpack.c.h.b16 %v722
    %v804 = vunpack.c.l.b16 %v723
    %v805 = vunpack.c.h.b16 %v723
    %v806 = vunpack.c.l.b16 %v724
    %v807 = vunpack.c.h.b16 %v724
    %v808 = vunpack.c.l.b16 %v725
    %v809 = vunpack.c.h.b16 %v725
    %v810 = vunpack.c.l.b16 %v726
    %v811 = vunpack.c.h.b16 %v726
    %v812 = vunpack.c.l.b16 %v727
    %v813 = vunpack.c.h.b16 %v727
    %v814 = vunpack.c.l.b16 %v728
    %v815 = vunpack.c.h.b16 %v728
    %v816 = vunpack.c.l.b16 %v729
    %v817 = vunpack.c.h.b16 %v729
    %v818 = vunpack.c.l.b16 %v730
    %v819 = vunpack.c.h.b16 %v730
    %v820 = vunpack.c.l.b16 %v731
    %v821 = vunpack.c.h.b16 %v731
    %v822 = vunpack.c.l.b16 %v732
    %v823 = vunpack.c.h.b16 %v732
    %v824 = vunpack.c.l.b16 %v733
    %v825 = vunpack.c.h.b16 %v733
    %v826 = vunpack.c.l.b16 %v734
    %v827 = vunpack.c.h.b16 %v734
    %v828 = vunpack.c.l.b16 %v735
    %v829 = vunpack.c.h.b16 %v735
    %v830 = vunpack.c.l.b16 %v736
    %v831 = vunpack.c.h.b16 %v736
    %v832 = vunpack.c.l.b16 %v737
    %v833 = vunpack.c.h.b16 %v737
    %v834 = vpack.c.b16 %v774, %v770
    %v835 = vpack.c.b16 %v775, %v771
    %v836 = vpack.c.b16 %v776, %v772
    %v837 = vpack.c.b16 %v777, %v773
    %v838 = vpack.c.b16 %v782, %v778
    %v839 = vpack.c.b16 %v783, %v779
    %v840 = vpack.c.b16 %v784, %v780
    %v841 = vpack.c.b16 %v785, %v781
    %v842 = vpack.c.b16 %v790, %v786
    %v843 = vpack.c.b16 %v791, %v787
    %v844 = vpack.c.b16 %v792, %v788
    %v845 = vpack.c.b16 %v793, %v789
    %v846 = vpack.c.b16 %v798, %v794
    %v847 = vpack.c.b16 %v799, %v795
    %v848 = vpack.c.b16 %v800, %v796
    %v849 = vpack.c.b16 %v801, %v797
    %v850 = vpack.c.b16 %v806, %v802
    %v851 = vpack.c.b16 %v807, %v803
    %v852 = vpack.c.b16 %v808, %v804
    %v853 = vpack.c.b16 %v809, %v805
    %v854 = vpack.c.b16 %v814, %v810
    %v855 = vpack.c.b16 %v815, %v811
    %v856 = vpack.c.b16 %v816, %v812
    %v857 = vpack.c.b16 %v817, %v813
    %v858 = vpack.c.b16 %v822, %v818
    %v859 = vpack.c.b16 %v823, %v819
    %v860 = vpack.c.b16 %v824, %v820
    %v861 = vpack.c.b16 %v825, %v821
    %v862 = vpack.c.b16 %v830, %v826
    %v863 = vpack.c.b16 %v831, %v827
    %v864 = vpack.c.b16 %v832, %v828
    %v865 = vpack.c.b16 %v833, %v829
    %898 = vmatprep.subr.bf16.mxu0 %v835
    %899 = vmatpush1.bf16.msra.mxu0 %v834
    %900 = vmatprep.subr.bf16.mxu0 %v839
    %901 = vmatpush1.bf16.msra.mxu0 %v838
    %902 = vmatprep.subr.bf16.mxu0 %v843
    %903 = vmatpush1.bf16.msra.mxu0 %v842
    %904 = vmatprep.subr.bf16.mxu0 %v847
    %905 = vmatpush1.bf16.msra.mxu0 %v846
    %906 = vmatprep.subr.bf16.mxu0 %v851
    %907 = vmatpush1.bf16.msra.mxu0 %v850
    %908 = vmatprep.subr.bf16.mxu0 %v855
    %909 = vmatpush1.bf16.msra.mxu0 %v854
    %910 = vmatprep.subr.bf16.mxu0 %v859
    %911 = vmatpush1.bf16.msra.mxu0 %v858
    %912 = vmatprep.subr.bf16.mxu0 %v863
    %913 = vmatpush1.bf16.msra.mxu0 %v862
    %914 = vmatprep.subr.bf16.mxu0 0
    %915 = vmatpush1.bf16.msra.mxu0 0
    %916 = vmatprep.subr.bf16.mxu0 0
    %917 = vmatpush1.bf16.msra.mxu0 0
    %918 = vmatprep.subr.bf16.mxu0 0
    %919 = vmatpush1.bf16.msra.mxu0 0
    %920 = vmatprep.subr.bf16.mxu0 0
    %921 = vmatpush1.bf16.msra.mxu0 0
    %922 = vmatprep.subr.bf16.mxu0 0
    %923 = vmatpush1.bf16.msra.mxu0 0
    %924 = vmatprep.subr.bf16.mxu0 0
    %925 = vmatpush1.bf16.msra.mxu0 0
    %926 = vmatprep.subr.bf16.mxu0 0
    %927 = vmatpush1.bf16.msra.mxu0 0
    %928 = vmatprep.subr.bf16.mxu0 0
    %929 = vmatpush1.bf16.msra.mxu0 0
    %930 = vmatprep.mubr.bf16.mxu0 0
    %931 = vmatmul.mubr.bf16.gmra.mrb[0].mxu0 0
    %v932 = vpop.f32.mrb[0].mxu0
    %v933 = vadd.f32 0.0, %v932
    %v934 = vpop.f32.mrb[0].mxu0
    %v935 = vadd.f32 0.0, %v934
    %v936 = vpop.f32.mrb[0].mxu0
    %v937 = vpop.f32.mrb[0].mxu0
    %938 = vdwg.mxu0
    %939 = vmatprep.subr.bf16.mxu0 %v837
    %940 = vmatpush1.bf16.msra.mxu0 %v836
    %941 = vmatprep.subr.bf16.mxu0 %v841
    %942 = vmatpush1.bf16.msra.mxu0 %v840
    %943 = vmatprep.subr.bf16.mxu0 %v845
    %944 = vmatpush1.bf16.msra.mxu0 %v844
    %945 = vmatprep.subr.bf16.mxu0 %v849
    %946 = vmatpush1.bf16.msra.mxu0 %v848
    %947 = vmatprep.subr.bf16.mxu0 %v853
    %948 = vmatpush1.bf16.msra.mxu0 %v852
    %949 = vmatprep.subr.bf16.mxu0 %v857
    %950 = vmatpush1.bf16.msra.mxu0 %v856
    %951 = vmatprep.subr.bf16.mxu0 %v861
    %952 = vmatpush1.bf16.msra.mxu0 %v860
    %953 = vmatprep.subr.bf16.mxu0 %v865
    %954 = vmatpush1.bf16.msra.mxu0 %v864
    %955 = vmatprep.subr.bf16.mxu0 0
    %956 = vmatpush1.bf16.msra.mxu0 0
    %957 = vmatprep.subr.bf16.mxu0 0
    %958 = vmatpush1.bf16.msra.mxu0 0
    %959 = vmatprep.subr.bf16.mxu0 0
    %960 = vmatpush1.bf16.msra.mxu0 0
    %961 = vmatprep.subr.bf16.mxu0 0
    %962 = vmatpush1.bf16.msra.mxu0 0
    %963 = vmatprep.subr.bf16.mxu0 0
    %964 = vmatpush1.bf16.msra.mxu0 0
    %965 = vmatprep.subr.bf16.mxu0 0
    %966 = vmatpush1.bf16.msra.mxu0 0
    %967 = vmatprep.subr.bf16.mxu0 0
    %968 = vmatpush1.bf16.msra.mxu0 0
    %969 = vmatprep.subr.bf16.mxu0 0
    %970 = vmatpush1.bf16.msra.mxu0 0
    %971 = vmatprep.mubr.bf16.mxu0 0
    %972 = vmatmul.mubr.bf16.gmra.mrb[0].mxu0 0
    %v973 = vpop.f32.mrb[0].mxu0
    %v974 = vadd.f32 0.0, %v973
    %v975 = vpop.f32.mrb[0].mxu0
    %v976 = vadd.f32 0.0, %v975
    %v977 = vpop.f32.mrb[0].mxu0
    %v978 = vpop.f32.mrb[0].mxu0
    %979 = vdwg.mxu0
    %v980 = vadd.f32 %v702, %v933
    %v981 = vadd.f32 %v703, %v935
    %v982 = vadd.f32 %v704, %v974
    %v983 = vadd.f32 %v705, %v976
    %v984 = vxor.u32 %v980, 2147483648
    %v985 = vmul.f32 %v984, 1.442695
    %v986 = vpow.pop %v985
    %v987 = vadd.f32 %v986, 1.0
    %v988 = vrcp.pop %v987
    %v989 = vmul.f32 1.0, %v988
    %v990 = vxor.u32 %v981, 2147483648
    %v991 = vmul.f32 %v990, 1.442695
    %v992 = vpow.pop %v991
    %v993 = vadd.f32 %v992, 1.0
    %v994 = vrcp.pop %v993
    %v995 = vmul.f32 1.0, %v994
    %v996 = vtanh.pop %v982
    %v997 = vxor.u32 %v983, 2147483648
    %v998 = vmul.f32 %v997, 1.442695
    %v999 = vpow.pop %v998
    %v1000 = vadd.f32 %v999, 1.0
    %v1001 = vrcp.pop %v1000
    %v1002 = vmul.f32 1.0, %v1001
    %v1003 = vmul.f32 %v995, 0.0
    %v1004 = vmul.f32 %v989, %v996
    %v1005 = vadd.f32 %v1003, %v1004
    %v1006 = vtanh.pop %v1005
    %v1007 = vmul.f32 %v1002, %v1006
    %v1008 = vpack.c.bf16 %v1007, %v1007
    %s1009 = scalar_lea.vmem %s0, 2
    %v1010 = vld [vmem:[%s1009] sm:$0x3]
    %1012 = vset.pattern.permute.xlu0 0
    %1013 = vperm.xlu0 %1012, %v1010
    %v1014 = vpop.permute.xlu0 %1013
    %v1016 = vmul.f32 %v1014, %v100
    %v1017 = vmul.f32 %v1014, %v104
    %v1018 = vmul.f32 %v1014, %v108
    %v1019 = vmul.f32 %v1014, %v112
    %v1020 = vadd.f32 %v48, %v1016
    %v1021 = vadd.f32 %v52, %v1017
    %v1022 = vadd.f32 %v56, %v1018
    %v1023 = vadd.f32 %v60, %v1019
    %1024 = vmatprep.subr.bf16.mxu0 %v254
    %1025 = vmatpush1.bf16.msra.mxu0 %v253
    %1026 = vmatprep.subr.bf16.mxu0 %v258
    %1027 = vmatpush1.bf16.msra.mxu0 %v257
    %1028 = vmatprep.subr.bf16.mxu0 %v262
    %1029 = vmatpush1.bf16.msra.mxu0 %v261
    %1030 = vmatprep.subr.bf16.mxu0 %v266
    %1031 = vmatpush1.bf16.msra.mxu0 %v265
    %1032 = vmatprep.subr.bf16.mxu0 %v270
    %1033 = vmatpush1.bf16.msra.mxu0 %v269
    %1034 = vmatprep.subr.bf16.mxu0 %v274
    %1035 = vmatpush1.bf16.msra.mxu0 %v273
    %1036 = vmatprep.subr.bf16.mxu0 %v278
    %1037 = vmatpush1.bf16.msra.mxu0 %v277
    %1038 = vmatprep.subr.bf16.mxu0 %v282
    %1039 = vmatpush1.bf16.msra.mxu0 %v281
    %1040 = vmatprep.subr.bf16.mxu0 0
    %1041 = vmatpush1.bf16.msra.mxu0 0
    %1042 = vmatprep.subr.bf16.mxu0 0
    %1043 = vmatpush1.bf16.msra.mxu0 0
    %1044 = vmatprep.subr.bf16.mxu0 0
    %1045 = vmatpush1.bf16.msra.mxu0 0
    %1046 = vmatprep.subr.bf16.mxu0 0
    %1047 = vmatpush1.bf16.msra.mxu0 0
    %1048 = vmatprep.subr.bf16.mxu0 0
    %1049 = vmatpush1.bf16.msra.mxu0 0
    %1050 = vmatprep.subr.bf16.mxu0 0
    %1051 = vmatpush1.bf16.msra.mxu0 0
    %1052 = vmatprep.subr.bf16.mxu0 0
    %1053 = vmatpush1.bf16.msra.mxu0 0
    %1054 = vmatprep.subr.bf16.mxu0 0
    %1055 = vmatpush1.bf16.msra.mxu0 0
    %1056 = vmatprep.mubr.bf16.mxu0 0
    %1057 = vmatmul.mubr.bf16.gmra.mrb[0].mxu0 %v427
    %v1058 = vpop.f32.mrb[0].mxu0
    %v1059 = vadd.f32 0.0, %v1058
    %v1060 = vpop.f32.mrb[0].mxu0
    %v1061 = vadd.f32 0.0, %v1060
    %v1062 = vpop.f32.mrb[0].mxu0
    %v1063 = vpop.f32.mrb[0].mxu0
    %1064 = vdwg.mxu0
    %1065 = vmatprep.subr.bf16.mxu0 %v256
    %1066 = vmatpush1.bf16.msra.mxu0 %v255
    %1067 = vmatprep.subr.bf16.mxu0 %v260
    %1068 = vmatpush1.bf16.msra.mxu0 %v259
    %1069 = vmatprep.subr.bf16.mxu0 %v264
    %1070 = vmatpush1.bf16.msra.mxu0 %v263
    %1071 = vmatprep.subr.bf16.mxu0 %v268
    %1072 = vmatpush1.bf16.msra.mxu0 %v267
    %1073 = vmatprep.subr.bf16.mxu0 %v272
    %1074 = vmatpush1.bf16.msra.mxu0 %v271
    %1075 = vmatprep.subr.bf16.mxu0 %v276
    %1076 = vmatpush1.bf16.msra.mxu0 %v275
    %1077 = vmatprep.subr.bf16.mxu0 %v280
    %1078 = vmatpush1.bf16.msra.mxu0 %v279
    %1079 = vmatprep.subr.bf16.mxu0 %v284
    %1080 = vmatpush1.bf16.msra.mxu0 %v283
    %1081 = vmatprep.subr.bf16.mxu0 0
    %1082 = vmatpush1.bf16.msra.mxu0 0
    %1083 = vmatprep.subr.bf16.mxu0 0
    %1084 = vmatpush1.bf16.msra.mxu0 0
    %1085 = vmatprep.subr.bf16.mxu0 0
    %1086 = vmatpush1.bf16.msra.mxu0 0
    %1087 = vmatprep.subr.bf16.mxu0 0
    %1088 = vmatpush1.bf16.msra.mxu0 0
    %1089 = vmatprep.subr.bf16.mxu0 0
    %1090 = vmatpush1.bf16.msra.mxu0 0
    %1091 = vmatprep.subr.bf16.mxu0 0
    %1092 = vmatpush1.bf16.msra.mxu0 0
    %1093 = vmatprep.subr.bf16.mxu0 0
    %1094 = vmatpush1.bf16.msra.mxu0 0
    %1095 = vmatprep.subr.bf16.mxu0 0
    %1096 = vmatpush1.bf16.msra.mxu0 0
    %1097 = vmatprep.mubr.bf16.mxu0 0
    %1098 = vmatmul.mubr.bf16.gmra.mrb[0].mxu0 %v427
    %v1099 = vpop.f32.mrb[0].mxu0
    %v1100 = vadd.f32 0.0, %v1099
    %v1101 = vpop.f32.mrb[0].mxu0
    %v1102 = vadd.f32 0.0, %v1101
    %v1103 = vpop.f32.mrb[0].mxu0
    %v1104 = vpop.f32.mrb[0].mxu0
    %1105 = vdwg.mxu0
    %v1106 = vadd.f32 %v1020, %v1059
    %v1107 = vadd.f32 %v1021, %v1061
    %v1108 = vadd.f32 %v1022, %v1100
    %v1109 = vadd.f32 %v1023, %v1102
    %v1110 = vxor.u32 %v1106, 2147483648
    %v1111 = vmul.f32 %v1110, 1.442695
    %v1112 = vpow.pop %v1111
    %v1113 = vadd.f32 %v1112, 1.0
    %v1114 = vrcp.pop %v1113
    %v1115 = vmul.f32 1.0, %v1114
    %v1116 = vxor.u32 %v1107, 2147483648
    %v1117 = vmul.f32 %v1116, 1.442695
    %v1118 = vpow.pop %v1117
    %v1119 = vadd.f32 %v1118, 1.0
    %v1120 = vrcp.pop %v1119
    %v1121 = vmul.f32 1.0, %v1120
    %v1122 = vtanh.pop %v1108
    %v1123 = vxor.u32 %v1109, 2147483648
    %v1124 = vmul.f32 %v1123, 1.442695
    %v1125 = vpow.pop %v1124
    %v1126 = vadd.f32 %v1125, 1.0
    %v1127 = vrcp.pop %v1126
    %v1128 = vmul.f32 1.0, %v1127
    %v1129 = vmul.f32 %v1121, %v424
    %v1130 = vmul.f32 %v1115, %v1122
    %v1131 = vadd.f32 %v1129, %v1130
    %v1132 = vtanh.pop %v1131
    %v1133 = vmul.f32 %v1128, %v1132
    %v1134 = vpack.c.bf16 %v1133, %v1133
    %1135 = vmatprep.subr.bf16.mxu0 %v557
    %1136 = vmatpush1.bf16.msra.mxu0 %v556
    %1137 = vmatprep.subr.bf16.mxu0 %v561
    %1138 = vmatpush1.bf16.msra.mxu0 %v560
    %1139 = vmatprep.subr.bf16.mxu0 %v565
    %1140 = vmatpush1.bf16.msra.mxu0 %v564
    %1141 = vmatprep.subr.bf16.mxu0 %v569
    %1142 = vmatpush1.bf16.msra.mxu0 %v568
    %1143 = vmatprep.subr.bf16.mxu0 %v573
    %1144 = vmatpush1.bf16.msra.mxu0 %v572
    %1145 = vmatprep.subr.bf16.mxu0 %v577
    %1146 = vmatpush1.bf16.msra.mxu0 %v576
    %1147 = vmatprep.subr.bf16.mxu0 %v581
    %1148 = vmatpush1.bf16.msra.mxu0 %v580
    %1149 = vmatprep.subr.bf16.mxu0 %v585
    %1150 = vmatpush1.bf16.msra.mxu0 %v584
    %1151 = vmatprep.subr.bf16.mxu0 0
    %1152 = vmatpush1.bf16.msra.mxu0 0
    %1153 = vmatprep.subr.bf16.mxu0 0
    %1154 = vmatpush1.bf16.msra.mxu0 0
    %1155 = vmatprep.subr.bf16.mxu0 0
    %1156 = vmatpush1.bf16.msra.mxu0 0
    %1157 = vmatprep.subr.bf16.mxu0 0
    %1158 = vmatpush1.bf16.msra.mxu0 0
    %1159 = vmatprep.subr.bf16.mxu0 0
    %1160 = vmatpush1.bf16.msra.mxu0 0
    %1161 = vmatprep.subr.bf16.mxu0 0
    %1162 = vmatpush1.bf16.msra.mxu0 0
    %1163 = vmatprep.subr.bf16.mxu0 0
    %1164 = vmatpush1.bf16.msra.mxu0 0
    %1165 = vmatprep.subr.bf16.mxu0 0
    %1166 = vmatpush1.bf16.msra.mxu0 0
    %1167 = vmatprep.mubr.bf16.mxu0 0
    %1168 = vmatmul.mubr.bf16.gmra.mrb[0].mxu0 %v1134
    %v1169 = vpop.f32.mrb[0].mxu0
    %v1170 = vadd.f32 0.0, %v1169
    %v1171 = vpop.f32.mrb[0].mxu0
    %v1172 = vadd.f32 0.0, %v1171
    %v1173 = vpop.f32.mrb[0].mxu0
    %v1174 = vpop.f32.mrb[0].mxu0
    %1175 = vdwg.mxu0
    %1176 = vmatprep.subr.bf16.mxu0 %v559
    %1177 = vmatpush1.bf16.msra.mxu0 %v558
    %1178 = vmatprep.subr.bf16.mxu0 %v563
    %1179 = vmatpush1.bf16.msra.mxu0 %v562
    %1180 = vmatprep.subr.bf16.mxu0 %v567
    %1181 = vmatpush1.bf16.msra.mxu0 %v566
    %1182 = vmatprep.subr.bf16.mxu0 %v571
    %1183 = vmatpush1.bf16.msra.mxu0 %v570
    %1184 = vmatprep.subr.bf16.mxu0 %v575
    %1185 = vmatpush1.bf16.msra.mxu0 %v574
    %1186 = vmatprep.subr.bf16.mxu0 %v579
    %1187 = vmatpush1.bf16.msra.mxu0 %v578
    %1188 = vmatprep.subr.bf16.mxu0 %v583
    %1189 = vmatpush1.bf16.msra.mxu0 %v582
    %1190 = vmatprep.subr.bf16.mxu0 %v587
    %1191 = vmatpush1.bf16.msra.mxu0 %v586
    %1192 = vmatprep.subr.bf16.mxu0 0
    %1193 = vmatpush1.bf16.msra.mxu0 0
    %1194 = vmatprep.subr.bf16.mxu0 0
    %1195 = vmatpush1.bf16.msra.mxu0 0
    %1196 = vmatprep.subr.bf16.mxu0 0
    %1197 = vmatpush1.bf16.msra.mxu0 0
    %1198 = vmatprep.subr.bf16.mxu0 0
    %1199 = vmatpush1.bf16.msra.mxu0 0
    %1200 = vmatprep.subr.bf16.mxu0 0
    %1201 = vmatpush1.bf16.msra.mxu0 0
    %1202 = vmatprep.subr.bf16.mxu0 0
    %1203 = vmatpush1.bf16.msra.mxu0 0
    %1204 = vmatprep.subr.bf16.mxu0 0
    %1205 = vmatpush1.bf16.msra.mxu0 0
    %1206 = vmatprep.subr.bf16.mxu0 0
    %1207 = vmatpush1.bf16.msra.mxu0 0
    %1208 = vmatprep.mubr.bf16.mxu0 0
    %1209 = vmatmul.mubr.bf16.gmra.mrb[0].mxu0 %v1134
    %v1210 = vpop.f32.mrb[0].mxu0
    %v1211 = vadd.f32 0.0, %v1210
    %v1212 = vpop.f32.mrb[0].mxu0
    %v1213 = vadd.f32 0.0, %v1212
    %v1214 = vpop.f32.mrb[0].mxu0
    %v1215 = vpop.f32.mrb[0].mxu0
    %1216 = vdwg.mxu0
    %v1217 = vadd.f32 %v71, %v1170
    %v1218 = vadd.f32 %v75, %v1172
    %v1219 = vadd.f32 %v79, %v1211
    %v1220 = vadd.f32 %v83, %v1213
    %1221 = vmatprep.subr.bf16.mxu0 %v835
    %1222 = vmatpush1.bf16.msra.mxu0 %v834
    %1223 = vmatprep.subr.bf16.mxu0 %v839
    %1224 = vmatpush1.bf16.msra.mxu0 %v838
    %1225 = vmatprep.subr.bf16.mxu0 %v843
    %1226 = vmatpush1.bf16.msra.mxu0 %v842
    %1227 = vmatprep.subr.bf16.mxu0 %v847
    %1228 = vmatpush1.bf16.msra.mxu0 %v846
    %1229 = vmatprep.subr.bf16.mxu0 %v851
    %1230 = vmatpush1.bf16.msra.mxu0 %v850
    %1231 = vmatprep.subr.bf16.mxu0 %v855
    %1232 = vmatpush1.bf16.msra.mxu0 %v854
    %1233 = vmatprep.subr.bf16.mxu0 %v859
    %1234 = vmatpush1.bf16.msra.mxu0 %v858
    %1235 = vmatprep.subr.bf16.mxu0 %v863
    %1236 = vmatpush1.bf16.msra.mxu0 %v862
    %1237 = vmatprep.subr.bf16.mxu0 0
    %1238 = vmatpush1.bf16.msra.mxu0 0
    %1239 = vmatprep.subr.bf16.mxu0 0
    %1240 = vmatpush1.bf16.msra.mxu0 0
    %1241 = vmatprep.subr.bf16.mxu0 0
    %1242 = vmatpush1.bf16.msra.mxu0 0
    %1243 = vmatprep.subr.bf16.mxu0 0
    %1244 = vmatpush1.bf16.msra.mxu0 0
    %1245 = vmatprep.subr.bf16.mxu0 0
    %1246 = vmatpush1.bf16.msra.mxu0 0
    %1247 = vmatprep.subr.bf16.mxu0 0
    %1248 = vmatpush1.bf16.msra.mxu0 0
    %1249 = vmatprep.subr.bf16.mxu0 0
    %1250 = vmatpush1.bf16.msra.mxu0 0
    %1251 = vmatprep.subr.bf16.mxu0 0
    %1252 = vmatpush1.bf16.msra.mxu0 0
    %1253 = vmatprep.mubr.bf16.mxu0 0
    %1254 = vmatmul.mubr.bf16.gmra.mrb[0].mxu0 %v1008
    %v1255 = vpop.f32.mrb[0].mxu0
    %v1256 = vadd.f32 0.0, %v1255
    %v1257 = vpop.f32.mrb[0].mxu0
    %v1258 = vadd.f32 0.0, %v1257
    %v1259 = vpop.f32.mrb[0].mxu0
    %v1260 = vpop.f32.mrb[0].mxu0
    %1261 = vdwg.mxu0
    %1262 = vmatprep.subr.bf16.mxu0 %v837
    %1263 = vmatpush1.bf16.msra.mxu0 %v836
    %1264 = vmatprep.subr.bf16.mxu0 %v841
    %1265 = vmatpush1.bf16.msra.mxu0 %v840
    %1266 = vmatprep.subr.bf16.mxu0 %v845
    %1267 = vmatpush1.bf16.msra.mxu0 %v844
    %1268 = vmatprep.subr.bf16.mxu0 %v849
    %1269 = vmatpush1.bf16.msra.mxu0 %v848
    %1270 = vmatprep.subr.bf16.mxu0 %v853
    %1271 = vmatpush1.bf16.msra.mxu0 %v852
    %1272 = vmatprep.subr.bf16.mxu0 %v857
    %1273 = vmatpush1.bf16.msra.mxu0 %v856
    %1274 = vmatprep.subr.bf16.mxu0 %v861
    %1275 = vmatpush1.bf16.msra.mxu0 %v860
    %1276 = vmatprep.subr.bf16.mxu0 %v865
    %1277 = vmatpush1.bf16.msra.mxu0 %v864
    %1278 = vmatprep.subr.bf16.mxu0 0
    %1279 = vmatpush1.bf16.msra.mxu0 0
    %1280 = vmatprep.subr.bf16.mxu0 0
    %1281 = vmatpush1.bf16.msra.mxu0 0
    %1282 = vmatprep.subr.bf16.mxu0 0
    %1283 = vmatpush1.bf16.msra.mxu0 0
    %1284 = vmatprep.subr.bf16.mxu0 0
    %1285 = vmatpush1.bf16.msra.mxu0 0
    %1286 = vmatprep.subr.bf16.mxu0 0
    %1287 = vmatpush1.bf16.msra.mxu0 0
    %1288 = vmatprep.subr.bf16.mxu0 0
    %1289 = vmatpush1.bf16.msra.mxu0 0
    %1290 = vmatprep.subr.bf16.mxu0 0
    %1291 = vmatpush1.bf16.msra.mxu0 0
    %1292 = vmatprep.subr.bf16.mxu0 0
    %1293 = vmatpush1.bf16.msra.mxu0 0
    %1294 = vmatprep.mubr.bf16.mxu0 0
    %1295 = vmatmul.mubr.bf16.gmra.mrb[0].mxu0 %v1008
    %v1296 = vpop.f32.mrb[0].mxu0
    %v1297 = vadd.f32 0.0, %v1296
    %v1298 = vpop.f32.mrb[0].mxu0
    %v1299 = vadd.f32 0.0, %v1298
    %v1300 = vpop.f32.mrb[0].mxu0
    %v1301 = vpop.f32.mrb[0].mxu0
    %1302 = vdwg.mxu0
    %v1303 = vadd.f32 %v1217, %v1256
    %v1304 = vadd.f32 %v1218, %v1258
    %v1305 = vadd.f32 %v1219, %v1297
    %v1306 = vadd.f32 %v1220, %v1299
    %v1307 = vxor.u32 %v1303, 2147483648
    %v1308 = vmul.f32 %v1307, 1.442695
    %v1309 = vpow.pop %v1308
    %v1310 = vadd.f32 %v1309, 1.0
    %v1311 = vrcp.pop %v1310
    %v1312 = vmul.f32 1.0, %v1311
    %v1313 = vxor.u32 %v1304, 2147483648
    %v1314 = vmul.f32 %v1313, 1.442695
    %v1315 = vpow.pop %v1314
    %v1316 = vadd.f32 %v1315, 1.0
    %v1317 = vrcp.pop %v1316
    %v1318 = vmul.f32 1.0, %v1317
    %v1319 = vtanh.pop %v1305
    %v1320 = vxor.u32 %v1306, 2147483648
    %v1321 = vmul.f32 %v1320, 1.442695
    %v1322 = vpow.pop %v1321
    %v1323 = vadd.f32 %v1322, 1.0
    %v1324 = vrcp.pop %v1323
    %v1325 = vmul.f32 1.0, %v1324
    %v1326 = vmul.f32 %v1318, %v1005
    %v1327 = vmul.f32 %v1312, %v1319
    %v1328 = vadd.f32 %v1326, %v1327
    %v1329 = vtanh.pop %v1328
    %v1330 = vmul.f32 %v1325, %v1329
    %v1331 = vpack.c.bf16 %v1330, %v1330
    %s1332 = scalar_lea.vmem %s0, 4
    %v1333 = vld [vmem:[%s1332] sm:$0x3]
    %1335 = vset.pattern.permute.xlu0 0
    %1336 = vperm.xlu0 %1335, %v1333
    %v1337 = vpop.permute.xlu0 %1336
    %v1339 = vmul.f32 %v1337, %v100
    %v1340 = vmul.f32 %v1337, %v104
    %v1341 = vmul.f32 %v1337, %v108
    %v1342 = vmul.f32 %v1337, %v112
    %v1343 = vadd.f32 %v48, %v1339
    %v1344 = vadd.f32 %v52, %v1340
    %v1345 = vadd.f32 %v56, %v1341
    %v1346 = vadd.f32 %v60, %v1342
    %1347 = vmatprep.subr.bf16.mxu0 %v254
    %1348 = vmatpush1.bf16.msra.mxu0 %v253
    %1349 = vmatprep.subr.bf16.mxu0 %v258
    %1350 = vmatpush1.bf16.msra.mxu0 %v257
    %1351 = vmatprep.subr.bf16.mxu0 %v262
    %1352 = vmatpush1.bf16.msra.mxu0 %v261
    %1353 = vmatprep.subr.bf16.mxu0 %v266
    %1354 = vmatpush1.bf16.msra.mxu0 %v265
    %1355 = vmatprep.subr.bf16.mxu0 %v270
    %1356 = vmatpush1.bf16.msra.mxu0 %v269
    %1357 = vmatprep.subr.bf16.mxu0 %v274
    %1358 = vmatpush1.bf16.msra.mxu0 %v273
    %1359 = vmatprep.subr.bf16.mxu0 %v278
    %1360 = vmatpush1.bf16.msra.mxu0 %v277
    %1361 = vmatprep.subr.bf16.mxu0 %v282
    %1362 = vmatpush1.bf16.msra.mxu0 %v281
    %1363 = vmatprep.subr.bf16.mxu0 0
    %1364 = vmatpush1.bf16.msra.mxu0 0
    %1365 = vmatprep.subr.bf16.mxu0 0
    %1366 = vmatpush1.bf16.msra.mxu0 0
    %1367 = vmatprep.subr.bf16.mxu0 0
    %1368 = vmatpush1.bf16.msra.mxu0 0
    %1369 = vmatprep.subr.bf16.mxu0 0
    %1370 = vmatpush1.bf16.msra.mxu0 0
    %1371 = vmatprep.subr.bf16.mxu0 0
    %1372 = vmatpush1.bf16.msra.mxu0 0
    %1373 = vmatprep.subr.bf16.mxu0 0
    %1374 = vmatpush1.bf16.msra.mxu0 0
    %1375 = vmatprep.subr.bf16.mxu0 0
    %1376 = vmatpush1.bf16.msra.mxu0 0
    %1377 = vmatprep.subr.bf16.mxu0 0
    %1378 = vmatpush1.bf16.msra.mxu0 0
    %1379 = vmatprep.mubr.bf16.mxu0 0
    %1380 = vmatmul.mubr.bf16.gmra.mrb[0].mxu0 %v1134
    %v1381 = vpop.f32.mrb[0].mxu0
    %v1382 = vadd.f32 0.0, %v1381
    %v1383 = vpop.f32.mrb[0].mxu0
    %v1384 = vadd.f32 0.0, %v1383
    %v1385 = vpop.f32.mrb[0].mxu0
    %v1386 = vpop.f32.mrb[0].mxu0
    %1387 = vdwg.mxu0
    %1388 = vmatprep.subr.bf16.mxu0 %v256
    %1389 = vmatpush1.bf16.msra.mxu0 %v255
    %1390 = vmatprep.subr.bf16.mxu0 %v260
    %1391 = vmatpush1.bf16.msra.mxu0 %v259
    %1392 = vmatprep.subr.bf16.mxu0 %v264
    %1393 = vmatpush1.bf16.msra.mxu0 %v263
    %1394 = vmatprep.subr.bf16.mxu0 %v268
    %1395 = vmatpush1.bf16.msra.mxu0 %v267
    %1396 = vmatprep.subr.bf16.mxu0 %v272
    %1397 = vmatpush1.bf16.msra.mxu0 %v271
    %1398 = vmatprep.subr.bf16.mxu0 %v276
    %1399 = vmatpush1.bf16.msra.mxu0 %v275
    %1400 = vmatprep.subr.bf16.mxu0 %v280
    %1401 = vmatpush1.bf16.msra.mxu0 %v279
    %1402 = vmatprep.subr.bf16.mxu0 %v284
    %1403 = vmatpush1.bf16.msra.mxu0 %v283
    %1404 = vmatprep.subr.bf16.mxu0 0
    %1405 = vmatpush1.bf16.msra.mxu0 0
    %1406 = vmatprep.subr.bf16.mxu0 0
    %1407 = vmatpush1.bf16.msra.mxu0 0
    %1408 = vmatprep.subr.bf16.mxu0 0
    %1409 = vmatpush1.bf16.msra.mxu0 0
    %1410 = vmatprep.subr.bf16.mxu0 0
    %1411 = vmatpush1.bf16.msra.mxu0 0
    %1412 = vmatprep.subr.bf16.mxu0 0
    %1413 = vmatpush1.bf16.msra.mxu0 0
    %1414 = vmatprep.subr.bf16.mxu0 0
    %1415 = vmatpush1.bf16.msra.mxu0 0
    %1416 = vmatprep.subr.bf16.mxu0 0
    %1417 = vmatpush1.bf16.msra.mxu0 0
    %1418 = vmatprep.subr.bf16.mxu0 0
    %1419 = vmatpush1.bf16.msra.mxu0 0
    %1420 = vmatprep.mubr.bf16.mxu0 0
    %1421 = vmatmul.mubr.bf16.gmra.mrb[0].mxu0 %v1134
    %v1422 = vpop.f32.mrb[0].mxu0
    %v1423 = vadd.f32 0.0, %v1422
    %v1424 = vpop.f32.mrb[0].mxu0
    %v1425 = vadd.f32 0.0, %v1424
    %v1426 = vpop.f32.mrb[0].mxu0
    %v1427 = vpop.f32.mrb[0].mxu0
    %1428 = vdwg.mxu0
    %v1429 = vadd.f32 %v1343, %v1382
    %v1430 = vadd.f32 %v1344, %v1384
    %v1431 = vadd.f32 %v1345, %v1423
    %v1432 = vadd.f32 %v1346, %v1425
    %v1433 = vxor.u32 %v1429, 2147483648
    %v1434 = vmul.f32 %v1433, 1.442695
    %v1435 = vpow.pop %v1434
    %v1436 = vadd.f32 %v1435, 1.0
    %v1437 = vrcp.pop %v1436
    %v1438 = vmul.f32 1.0, %v1437
    %v1439 = vxor.u32 %v1430, 2147483648
    %v1440 = vmul.f32 %v1439, 1.442695
    %v1441 = vpow.pop %v1440
    %v1442 = vadd.f32 %v1441, 1.0
    %v1443 = vrcp.pop %v1442
    %v1444 = vmul.f32 1.0, %v1443
    %v1445 = vtanh.pop %v1431
    %v1446 = vxor.u32 %v1432, 2147483648
    %v1447 = vmul.f32 %v1446, 1.442695
    %v1448 = vpow.pop %v1447
    %v1449 = vadd.f32 %v1448, 1.0
    %v1450 = vrcp.pop %v1449
    %v1451 = vmul.f32 1.0, %v1450
    %v1452 = vmul.f32 %v1444, %v1131
    %v1453 = vmul.f32 %v1438, %v1445
    %v1454 = vadd.f32 %v1452, %v1453
    %v1455 = vtanh.pop %v1454
    %v1456 = vmul.f32 %v1451, %v1455
    %v1457 = vpack.c.bf16 %v1456, %v1456
    %1458 = vmatprep.subr.bf16.mxu0 %v557
    %1459 = vmatpush1.bf16.msra.mxu0 %v556
    %1460 = vmatprep.subr.bf16.mxu0 %v561
    %1461 = vmatpush1.bf16.msra.mxu0 %v560
    %1462 = vmatprep.subr.bf16.mxu0 %v565
    %1463 = vmatpush1.bf16.msra.mxu0 %v564
    %1464 = vmatprep.subr.bf16.mxu0 %v569
    %1465 = vmatpush1.bf16.msra.mxu0 %v568
    %1466 = vmatprep.subr.bf16.mxu0 %v573
    %1467 = vmatpush1.bf16.msra.mxu0 %v572
    %1468 = vmatprep.subr.bf16.mxu0 %v577
    %1469 = vmatpush1.bf16.msra.mxu0 %v576
    %1470 = vmatprep.subr.bf16.mxu0 %v581
    %1471 = vmatpush1.bf16.msra.mxu0 %v580
    %1472 = vmatprep.subr.bf16.mxu0 %v585
    %1473 = vmatpush1.bf16.msra.mxu0 %v584
    %1474 = vmatprep.subr.bf16.mxu0 0
    %1475 = vmatpush1.bf16.msra.mxu0 0
    %1476 = vmatprep.subr.bf16.mxu0 0
    %1477 = vmatpush1.bf16.msra.mxu0 0
    %1478 = vmatprep.subr.bf16.mxu0 0
    %1479 = vmatpush1.bf16.msra.mxu0 0
    %1480 = vmatprep.subr.bf16.mxu0 0
    %1481 = vmatpush1.bf16.msra.mxu0 0
    %1482 = vmatprep.subr.bf16.mxu0 0
    %1483 = vmatpush1.bf16.msra.mxu0 0
    %1484 = vmatprep.subr.bf16.mxu0 0
    %1485 = vmatpush1.bf16.msra.mxu0 0
    %1486 = vmatprep.subr.bf16.mxu0 0
    %1487 = vmatpush1.bf16.msra.mxu0 0
    %1488 = vmatprep.subr.bf16.mxu0 0
    %1489 = vmatpush1.bf16.msra.mxu0 0
    %1490 = vmatprep.mubr.bf16.mxu0 0
    %1491 = vmatmul.mubr.bf16.gmra.mrb[0].mxu0 %v1457
    %v1492 = vpop.f32.mrb[0].mxu0
    %v1493 = vadd.f32 0.0, %v1492
    %v1494 = vpop.f32.mrb[0].mxu0
    %v1495 = vadd.f32 0.0, %v1494
    %v1496 = vpop.f32.mrb[0].mxu0
    %v1497 = vpop.f32.mrb[0].mxu0
    %1498 = vdwg.mxu0
    %1499 = vmatprep.subr.bf16.mxu0 %v559
    %1500 = vmatpush1.bf16.msra.mxu0 %v558
    %1501 = vmatprep.subr.bf16.mxu0 %v563
    %1502 = vmatpush1.bf16.msra.mxu0 %v562
    %1503 = vmatprep.subr.bf16.mxu0 %v567
    %1504 = vmatpush1.bf16.msra.mxu0 %v566
    %1505 = vmatprep.subr.bf16.mxu0 %v571
    %1506 = vmatpush1.bf16.msra.mxu0 %v570
    %1507 = vmatprep.subr.bf16.mxu0 %v575
    %1508 = vmatpush1.bf16.msra.mxu0 %v574
    %1509 = vmatprep.subr.bf16.mxu0 %v579
    %1510 = vmatpush1.bf16.msra.mxu0 %v578
    %1511 = vmatprep.subr.bf16.mxu0 %v583
    %1512 = vmatpush1.bf16.msra.mxu0 %v582
    %1513 = vmatprep.subr.bf16.mxu0 %v587
    %1514 = vmatpush1.bf16.msra.mxu0 %v586
    %1515 = vmatprep.subr.bf16.mxu0 0
    %1516 = vmatpush1.bf16.msra.mxu0 0
    %1517 = vmatprep.subr.bf16.mxu0 0
    %1518 = vmatpush1.bf16.msra.mxu0 0
    %1519 = vmatprep.subr.bf16.mxu0 0
    %1520 = vmatpush1.bf16.msra.mxu0 0
    %1521 = vmatprep.subr.bf16.mxu0 0
    %1522 = vmatpush1.bf16.msra.mxu0 0
    %1523 = vmatprep.subr.bf16.mxu0 0
    %1524 = vmatpush1.bf16.msra.mxu0 0
    %1525 = vmatprep.subr.bf16.mxu0 0
    %1526 = vmatpush1.bf16.msra.mxu0 0
    %1527 = vmatprep.subr.bf16.mxu0 0
    %1528 = vmatpush1.bf16.msra.mxu0 0
    %1529 = vmatprep.subr.bf16.mxu0 0
    %1530 = vmatpush1.bf16.msra.mxu0 0
    %1531 = vmatprep.mubr.bf16.mxu0 0
    %1532 = vmatmul.mubr.bf16.gmra.mrb[0].mxu0 %v1457
    %v1533 = vpop.f32.mrb[0].mxu0
    %v1534 = vadd.f32 0.0, %v1533
    %v1535 = vpop.f32.mrb[0].mxu0
    %v1536 = vadd.f32 0.0, %v1535
    %v1537 = vpop.f32.mrb[0].mxu0
    %v1538 = vpop.f32.mrb[0].mxu0
    %1539 = vdwg.mxu0
    %v1540 = vadd.f32 %v71, %v1493
    %v1541 = vadd.f32 %v75, %v1495
    %v1542 = vadd.f32 %v79, %v1534
    %v1543 = vadd.f32 %v83, %v1536
    %1544 = vmatprep.subr.bf16.mxu0 %v835
    %1545 = vmatpush1.bf16.msra.mxu0 %v834
    %1546 = vmatprep.subr.bf16.mxu0 %v839
    %1547 = vmatpush1.bf16.msra.mxu0 %v838
    %1548 = vmatprep.subr.bf16.mxu0 %v843
    %1549 = vmatpush1.bf16.msra.mxu0 %v842
    %1550 = vmatprep.subr.bf16.mxu0 %v847
    %1551 = vmatpush1.bf16.msra.mxu0 %v846
    %1552 = vmatprep.subr.bf16.mxu0 %v851
    %1553 = vmatpush1.bf16.msra.mxu0 %v850
    %1554 = vmatprep.subr.bf16.mxu0 %v855
    %1555 = vmatpush1.bf16.msra.mxu0 %v854
    %1556 = vmatprep.subr.bf16.mxu0 %v859
    %1557 = vmatpush1.bf16.msra.mxu0 %v858
    %1558 = vmatprep.subr.bf16.mxu0 %v863
    %1559 = vmatpush1.bf16.msra.mxu0 %v862
    %1560 = vmatprep.subr.bf16.mxu0 0
    %1561 = vmatpush1.bf16.msra.mxu0 0
    %1562 = vmatprep.subr.bf16.mxu0 0
    %1563 = vmatpush1.bf16.msra.mxu0 0
    %1564 = vmatprep.subr.bf16.mxu0 0
    %1565 = vmatpush1.bf16.msra.mxu0 0
    %1566 = vmatprep.subr.bf16.mxu0 0
    %1567 = vmatpush1.bf16.msra.mxu0 0
    %1568 = vmatprep.subr.bf16.mxu0 0
    %1569 = vmatpush1.bf16.msra.mxu0 0
    %1570 = vmatprep.subr.bf16.mxu0 0
    %1571 = vmatpush1.bf16.msra.mxu0 0
    %1572 = vmatprep.subr.bf16.mxu0 0
    %1573 = vmatpush1.bf16.msra.mxu0 0
    %1574 = vmatprep.subr.bf16.mxu0 0
    %1575 = vmatpush1.bf16.msra.mxu0 0
    %1576 = vmatprep.mubr.bf16.mxu0 0
    %1577 = vmatmul.mubr.bf16.gmra.mrb[0].mxu0 %v1331
    %v1578 = vpop.f32.mrb[0].mxu0
    %v1579 = vadd.f32 0.0, %v1578
    %v1580 = vpop.f32.mrb[0].mxu0
    %v1581 = vadd.f32 0.0, %v1580
    %v1582 = vpop.f32.mrb[0].mxu0
    %v1583 = vpop.f32.mrb[0].mxu0
    %1584 = vdwg.mxu0
    %1585 = vmatprep.subr.bf16.mxu0 %v837
    %1586 = vmatpush1.bf16.msra.mxu0 %v836
    %1587 = vmatprep.subr.bf16.mxu0 %v841
    %1588 = vmatpush1.bf16.msra.mxu0 %v840
    %1589 = vmatprep.subr.bf16.mxu0 %v845
    %1590 = vmatpush1.bf16.msra.mxu0 %v844
    %1591 = vmatprep.subr.bf16.mxu0 %v849
    %1592 = vmatpush1.bf16.msra.mxu0 %v848
    %1593 = vmatprep.subr.bf16.mxu0 %v853
    %1594 = vmatpush1.bf16.msra.mxu0 %v852
    %1595 = vmatprep.subr.bf16.mxu0 %v857
    %1596 = vmatpush1.bf16.msra.mxu0 %v856
    %1597 = vmatprep.subr.bf16.mxu0 %v861
    %1598 = vmatpush1.bf16.msra.mxu0 %v860
    %1599 = vmatprep.subr.bf16.mxu0 %v865
    %1600 = vmatpush1.bf16.msra.mxu0 %v864
    %1601 = vmatprep.subr.bf16.mxu0 0
    %1602 = vmatpush1.bf16.msra.mxu0 0
    %1603 = vmatprep.subr.bf16.mxu0 0
    %1604 = vmatpush1.bf16.msra.mxu0 0
    %1605 = vmatprep.subr.bf16.mxu0 0
    %1606 = vmatpush1.bf16.msra.mxu0 0
    %1607 = vmatprep.subr.bf16.mxu0 0
    %1608 = vmatpush1.bf16.msra.mxu0 0
    %1609 = vmatprep.subr.bf16.mxu0 0
    %1610 = vmatpush1.bf16.msra.mxu0 0
    %1611 = vmatprep.subr.bf16.mxu0 0
    %1612 = vmatpush1.bf16.msra.mxu0 0
    %1613 = vmatprep.subr.bf16.mxu0 0
    %1614 = vmatpush1.bf16.msra.mxu0 0
    %1615 = vmatprep.subr.bf16.mxu0 0
    %1616 = vmatpush1.bf16.msra.mxu0 0
    %1617 = vmatprep.mubr.bf16.mxu0 0
    %1618 = vmatmul.mubr.bf16.gmra.mrb[0].mxu0 %v1331
    %v1619 = vpop.f32.mrb[0].mxu0
    %v1620 = vadd.f32 0.0, %v1619
    %v1621 = vpop.f32.mrb[0].mxu0
    %v1622 = vadd.f32 0.0, %v1621
    %v1623 = vpop.f32.mrb[0].mxu0
    %v1624 = vpop.f32.mrb[0].mxu0
    %1625 = vdwg.mxu0
    %v1626 = vadd.f32 %v1540, %v1579
    %v1627 = vadd.f32 %v1541, %v1581
    %v1628 = vadd.f32 %v1542, %v1620
    %v1629 = vadd.f32 %v1543, %v1622
    %v1630 = vxor.u32 %v1626, 2147483648
    %v1631 = vmul.f32 %v1630, 1.442695
    %v1632 = vpow.pop %v1631
    %v1633 = vadd.f32 %v1632, 1.0
    %v1634 = vrcp.pop %v1633
    %v1635 = vmul.f32 1.0, %v1634
    %v1636 = vxor.u32 %v1627, 2147483648
    %v1637 = vmul.f32 %v1636, 1.442695
    %v1638 = vpow.pop %v1637
    %v1639 = vadd.f32 %v1638, 1.0
    %v1640 = vrcp.pop %v1639
    %v1641 = vmul.f32 1.0, %v1640
    %v1642 = vtanh.pop %v1628
    %v1643 = vxor.u32 %v1629, 2147483648
    %v1644 = vmul.f32 %v1643, 1.442695
    %v1645 = vpow.pop %v1644
    %v1646 = vadd.f32 %v1645, 1.0
    %v1647 = vrcp.pop %v1646
    %v1648 = vmul.f32 1.0, %v1647
    %v1649 = vmul.f32 %v1641, %v1328
    %v1650 = vmul.f32 %v1635, %v1642
    %v1651 = vadd.f32 %v1649, %v1650
    %v1652 = vtanh.pop %v1651
    %v1653 = vmul.f32 %v1648, %v1652
    %v1654 = vpack.c.bf16 %v1653, %v1653
    %s1655 = scalar_lea.vmem %s0, 6
    %v1656 = vld [vmem:[%s1655] sm:$0x3]
    %1658 = vset.pattern.permute.xlu0 0
    %1659 = vperm.xlu0 %1658, %v1656
    %v1660 = vpop.permute.xlu0 %1659
    %v1662 = vmul.f32 %v1660, %v100
    %v1663 = vmul.f32 %v1660, %v104
    %v1664 = vmul.f32 %v1660, %v108
    %v1665 = vmul.f32 %v1660, %v112
    %v1666 = vadd.f32 %v48, %v1662
    %v1667 = vadd.f32 %v52, %v1663
    %v1668 = vadd.f32 %v56, %v1664
    %v1669 = vadd.f32 %v60, %v1665
    %1670 = vmatprep.subr.bf16.mxu0 %v254
    %1671 = vmatpush1.bf16.msra.mxu0 %v253
    %1672 = vmatprep.subr.bf16.mxu0 %v258
    %1673 = vmatpush1.bf16.msra.mxu0 %v257
    %1674 = vmatprep.subr.bf16.mxu0 %v262
    %1675 = vmatpush1.bf16.msra.mxu0 %v261
    %1676 = vmatprep.subr.bf16.mxu0 %v266
    %1677 = vmatpush1.bf16.msra.mxu0 %v265
    %1678 = vmatprep.subr.bf16.mxu0 %v270
    %1679 = vmatpush1.bf16.msra.mxu0 %v269
    %1680 = vmatprep.subr.bf16.mxu0 %v274
    %1681 = vmatpush1.bf16.msra.mxu0 %v273
    %1682 = vmatprep.subr.bf16.mxu0 %v278
    %1683 = vmatpush1.bf16.msra.mxu0 %v277
    %1684 = vmatprep.subr.bf16.mxu0 %v282
    %1685 = vmatpush1.bf16.msra.mxu0 %v281
    %1686 = vmatprep.subr.bf16.mxu0 0
    %1687 = vmatpush1.bf16.msra.mxu0 0
    %1688 = vmatprep.subr.bf16.mxu0 0
    %1689 = vmatpush1.bf16.msra.mxu0 0
    %1690 = vmatprep.subr.bf16.mxu0 0
    %1691 = vmatpush1.bf16.msra.mxu0 0
    %1692 = vmatprep.subr.bf16.mxu0 0
    %1693 = vmatpush1.bf16.msra.mxu0 0
    %1694 = vmatprep.subr.bf16.mxu0 0
    %1695 = vmatpush1.bf16.msra.mxu0 0
    %1696 = vmatprep.subr.bf16.mxu0 0
    %1697 = vmatpush1.bf16.msra.mxu0 0
    %1698 = vmatprep.subr.bf16.mxu0 0
    %1699 = vmatpush1.bf16.msra.mxu0 0
    %1700 = vmatprep.subr.bf16.mxu0 0
    %1701 = vmatpush1.bf16.msra.mxu0 0
    %1702 = vmatprep.mubr.bf16.mxu0 0
    %1703 = vmatmul.mubr.bf16.gmra.mrb[0].mxu0 %v1457
    %v1704 = vpop.f32.mrb[0].mxu0
    %v1705 = vadd.f32 0.0, %v1704
    %v1706 = vpop.f32.mrb[0].mxu0
    %v1707 = vadd.f32 0.0, %v1706
    %v1708 = vpop.f32.mrb[0].mxu0
    %v1709 = vpop.f32.mrb[0].mxu0
    %1710 = vdwg.mxu0
    %1711 = vmatprep.subr.bf16.mxu0 %v256
    %1712 = vmatpush1.bf16.msra.mxu0 %v255
    %1713 = vmatprep.subr.bf16.mxu0 %v260
    %1714 = vmatpush1.bf16.msra.mxu0 %v259
    %1715 = vmatprep.subr.bf16.mxu0 %v264
    %1716 = vmatpush1.bf16.msra.mxu0 %v263
    %1717 = vmatprep.subr.bf16.mxu0 %v268
    %1718 = vmatpush1.bf16.msra.mxu0 %v267
    %1719 = vmatprep.subr.bf16.mxu0 %v272
    %1720 = vmatpush1.bf16.msra.mxu0 %v271
    %1721 = vmatprep.subr.bf16.mxu0 %v276
    %1722 = vmatpush1.bf16.msra.mxu0 %v275
    %1723 = vmatprep.subr.bf16.mxu0 %v280
    %1724 = vmatpush1.bf16.msra.mxu0 %v279
    %1725 = vmatprep.subr.bf16.mxu0 %v284
    %1726 = vmatpush1.bf16.msra.mxu0 %v283
    %1727 = vmatprep.subr.bf16.mxu0 0
    %1728 = vmatpush1.bf16.msra.mxu0 0
    %1729 = vmatprep.subr.bf16.mxu0 0
    %1730 = vmatpush1.bf16.msra.mxu0 0
    %1731 = vmatprep.subr.bf16.mxu0 0
    %1732 = vmatpush1.bf16.msra.mxu0 0
    %1733 = vmatprep.subr.bf16.mxu0 0
    %1734 = vmatpush1.bf16.msra.mxu0 0
    %1735 = vmatprep.subr.bf16.mxu0 0
    %1736 = vmatpush1.bf16.msra.mxu0 0
    %1737 = vmatprep.subr.bf16.mxu0 0
    %1738 = vmatpush1.bf16.msra.mxu0 0
    %1739 = vmatprep.subr.bf16.mxu0 0
    %1740 = vmatpush1.bf16.msra.mxu0 0
    %1741 = vmatprep.subr.bf16.mxu0 0
    %1742 = vmatpush1.bf16.msra.mxu0 0
    %1743 = vmatprep.mubr.bf16.mxu0 0
    %1744 = vmatmul.mubr.bf16.gmra.mrb[0].mxu0 %v1457
    %v1745 = vpop.f32.mrb[0].mxu0
    %v1746 = vadd.f32 0.0, %v1745
    %v1747 = vpop.f32.mrb[0].mxu0
    %v1748 = vadd.f32 0.0, %v1747
    %v1749 = vpop.f32.mrb[0].mxu0
    %v1750 = vpop.f32.mrb[0].mxu0
    %1751 = vdwg.mxu0
    %v1752 = vadd.f32 %v1666, %v1705
    %v1753 = vadd.f32 %v1667, %v1707
    %v1754 = vadd.f32 %v1668, %v1746
    %v1755 = vadd.f32 %v1669, %v1748
    %v1756 = vxor.u32 %v1752, 2147483648
    %v1757 = vmul.f32 %v1756, 1.442695
    %v1758 = vpow.pop %v1757
    %v1759 = vadd.f32 %v1758, 1.0
    %v1760 = vrcp.pop %v1759
    %v1761 = vmul.f32 1.0, %v1760
    %v1762 = vxor.u32 %v1753, 2147483648
    %v1763 = vmul.f32 %v1762, 1.442695
    %v1764 = vpow.pop %v1763
    %v1765 = vadd.f32 %v1764, 1.0
    %v1766 = vrcp.pop %v1765
    %v1767 = vmul.f32 1.0, %v1766
    %v1768 = vtanh.pop %v1754
    %v1769 = vxor.u32 %v1755, 2147483648
    %v1770 = vmul.f32 %v1769, 1.442695
    %v1771 = vpow.pop %v1770
    %v1772 = vadd.f32 %v1771, 1.0
    %v1773 = vrcp.pop %v1772
    %v1774 = vmul.f32 1.0, %v1773
    %v1775 = vmul.f32 %v1767, %v1454
    %v1776 = vmul.f32 %v1761, %v1768
    %v1777 = vadd.f32 %v1775, %v1776
    %v1778 = vtanh.pop %v1777
    %v1779 = vmul.f32 %v1774, %v1778
    %v1780 = vpack.c.bf16 %v1779, %v1779
    %1781 = vmatprep.subr.bf16.mxu0 %v557
    %1782 = vmatpush1.bf16.msra.mxu0 %v556
    %1783 = vmatprep.subr.bf16.mxu0 %v561
    %1784 = vmatpush1.bf16.msra.mxu0 %v560
    %1785 = vmatprep.subr.bf16.mxu0 %v565
    %1786 = vmatpush1.bf16.msra.mxu0 %v564
    %1787 = vmatprep.subr.bf16.mxu0 %v569
    %1788 = vmatpush1.bf16.msra.mxu0 %v568
    %1789 = vmatprep.subr.bf16.mxu0 %v573
    %1790 = vmatpush1.bf16.msra.mxu0 %v572
    %1791 = vmatprep.subr.bf16.mxu0 %v577
    %1792 = vmatpush1.bf16.msra.mxu0 %v576
    %1793 = vmatprep.subr.bf16.mxu0 %v581
    %1794 = vmatpush1.bf16.msra.mxu0 %v580
    %1795 = vmatprep.subr.bf16.mxu0 %v585
    %1796 = vmatpush1.bf16.msra.mxu0 %v584
    %1797 = vmatprep.subr.bf16.mxu0 0
    %1798 = vmatpush1.bf16.msra.mxu0 0
    %1799 = vmatprep.subr.bf16.mxu0 0
    %1800 = vmatpush1.bf16.msra.mxu0 0
    %1801 = vmatprep.subr.bf16.mxu0 0
    %1802 = vmatpush1.bf16.msra.mxu0 0
    %1803 = vmatprep.subr.bf16.mxu0 0
    %1804 = vmatpush1.bf16.msra.mxu0 0
    %1805 = vmatprep.subr.bf16.mxu0 0
    %1806 = vmatpush1.bf16.msra.mxu0 0
    %1807 = vmatprep.subr.bf16.mxu0 0
    %1808 = vmatpush1.bf16.msra.mxu0 0
    %1809 = vmatprep.subr.bf16.mxu0 0
    %1810 = vmatpush1.bf16.msra.mxu0 0
    %1811 = vmatprep.subr.bf16.mxu0 0
    %1812 = vmatpush1.bf16.msra.mxu0 0
    %1813 = vmatprep.mubr.bf16.mxu0 0
    %1814 = vmatmul.mubr.bf16.gmra.mrb[0].mxu0 %v1780
    %v1815 = vpop.f32.mrb[0].mxu0
    %v1816 = vadd.f32 0.0, %v1815
    %v1817 = vpop.f32.mrb[0].mxu0
    %v1818 = vadd.f32 0.0, %v1817
    %v1819 = vpop.f32.mrb[0].mxu0
    %v1820 = vpop.f32.mrb[0].mxu0
    %1821 = vdwg.mxu0
    %1822 = vmatprep.subr.bf16.mxu0 %v559
    %1823 = vmatpush1.bf16.msra.mxu0 %v558
    %1824 = vmatprep.subr.bf16.mxu0 %v563
    %1825 = vmatpush1.bf16.msra.mxu0 %v562
    %1826 = vmatprep.subr.bf16.mxu0 %v567
    %1827 = vmatpush1.bf16.msra.mxu0 %v566
    %1828 = vmatprep.subr.bf16.mxu0 %v571
    %1829 = vmatpush1.bf16.msra.mxu0 %v570
    %1830 = vmatprep.subr.bf16.mxu0 %v575
    %1831 = vmatpush1.bf16.msra.mxu0 %v574
    %1832 = vmatprep.subr.bf16.mxu0 %v579
    %1833 = vmatpush1.bf16.msra.mxu0 %v578
    %1834 = vmatprep.subr.bf16.mxu0 %v583
    %1835 = vmatpush1.bf16.msra.mxu0 %v582
    %1836 = vmatprep.subr.bf16.mxu0 %v587
    %1837 = vmatpush1.bf16.msra.mxu0 %v586
    %1838 = vmatprep.subr.bf16.mxu0 0
    %1839 = vmatpush1.bf16.msra.mxu0 0
    %1840 = vmatprep.subr.bf16.mxu0 0
    %1841 = vmatpush1.bf16.msra.mxu0 0
    %1842 = vmatprep.subr.bf16.mxu0 0
    %1843 = vmatpush1.bf16.msra.mxu0 0
    %1844 = vmatprep.subr.bf16.mxu0 0
    %1845 = vmatpush1.bf16.msra.mxu0 0
    %1846 = vmatprep.subr.bf16.mxu0 0
    %1847 = vmatpush1.bf16.msra.mxu0 0
    %1848 = vmatprep.subr.bf16.mxu0 0
    %1849 = vmatpush1.bf16.msra.mxu0 0
    %1850 = vmatprep.subr.bf16.mxu0 0
    %1851 = vmatpush1.bf16.msra.mxu0 0
    %1852 = vmatprep.subr.bf16.mxu0 0
    %1853 = vmatpush1.bf16.msra.mxu0 0
    %1854 = vmatprep.mubr.bf16.mxu0 0
    %1855 = vmatmul.mubr.bf16.gmra.mrb[0].mxu0 %v1780
    %v1856 = vpop.f32.mrb[0].mxu0
    %v1857 = vadd.f32 0.0, %v1856
    %v1858 = vpop.f32.mrb[0].mxu0
    %v1859 = vadd.f32 0.0, %v1858
    %v1860 = vpop.f32.mrb[0].mxu0
    %v1861 = vpop.f32.mrb[0].mxu0
    %1862 = vdwg.mxu0
    %v1863 = vadd.f32 %v71, %v1816
    %v1864 = vadd.f32 %v75, %v1818
    %v1865 = vadd.f32 %v79, %v1857
    %v1866 = vadd.f32 %v83, %v1859
    %1867 = vmatprep.subr.bf16.mxu0 %v835
    %1868 = vmatpush1.bf16.msra.mxu0 %v834
    %1869 = vmatprep.subr.bf16.mxu0 %v839
    %1870 = vmatpush1.bf16.msra.mxu0 %v838
    %1871 = vmatprep.subr.bf16.mxu0 %v843
    %1872 = vmatpush1.bf16.msra.mxu0 %v842
    %1873 = vmatprep.subr.bf16.mxu0 %v847
    %1874 = vmatpush1.bf16.msra.mxu0 %v846
    %1875 = vmatprep.subr.bf16.mxu0 %v851
    %1876 = vmatpush1.bf16.msra.mxu0 %v850
    %1877 = vmatprep.subr.bf16.mxu0 %v855
    %1878 = vmatpush1.bf16.msra.mxu0 %v854
    %1879 = vmatprep.subr.bf16.mxu0 %v859
    %1880 = vmatpush1.bf16.msra.mxu0 %v858
    %1881 = vmatprep.subr.bf16.mxu0 %v863
    %1882 = vmatpush1.bf16.msra.mxu0 %v862
    %1883 = vmatprep.subr.bf16.mxu0 0
    %1884 = vmatpush1.bf16.msra.mxu0 0
    %1885 = vmatprep.subr.bf16.mxu0 0
    %1886 = vmatpush1.bf16.msra.mxu0 0
    %1887 = vmatprep.subr.bf16.mxu0 0
    %1888 = vmatpush1.bf16.msra.mxu0 0
    %1889 = vmatprep.subr.bf16.mxu0 0
    %1890 = vmatpush1.bf16.msra.mxu0 0
    %1891 = vmatprep.subr.bf16.mxu0 0
    %1892 = vmatpush1.bf16.msra.mxu0 0
    %1893 = vmatprep.subr.bf16.mxu0 0
    %1894 = vmatpush1.bf16.msra.mxu0 0
    %1895 = vmatprep.subr.bf16.mxu0 0
    %1896 = vmatpush1.bf16.msra.mxu0 0
    %1897 = vmatprep.subr.bf16.mxu0 0
    %1898 = vmatpush1.bf16.msra.mxu0 0
    %1899 = vmatprep.mubr.bf16.mxu0 0
    %1900 = vmatmul.mubr.bf16.gmra.mrb[0].mxu0 %v1654
    %v1901 = vpop.f32.mrb[0].mxu0
    %v1902 = vadd.f32 0.0, %v1901
    %v1903 = vpop.f32.mrb[0].mxu0
    %v1904 = vadd.f32 0.0, %v1903
    %v1905 = vpop.f32.mrb[0].mxu0
    %v1906 = vpop.f32.mrb[0].mxu0
    %1907 = vdwg.mxu0
    %1908 = vmatprep.subr.bf16.mxu0 %v837
    %1909 = vmatpush1.bf16.msra.mxu0 %v836
    %1910 = vmatprep.subr.bf16.mxu0 %v841
    %1911 = vmatpush1.bf16.msra.mxu0 %v840
    %1912 = vmatprep.subr.bf16.mxu0 %v845
    %1913 = vmatpush1.bf16.msra.mxu0 %v844
    %1914 = vmatprep.subr.bf16.mxu0 %v849
    %1915 = vmatpush1.bf16.msra.mxu0 %v848
    %1916 = vmatprep.subr.bf16.mxu0 %v853
    %1917 = vmatpush1.bf16.msra.mxu0 %v852
    %1918 = vmatprep.subr.bf16.mxu0 %v857
    %1919 = vmatpush1.bf16.msra.mxu0 %v856
    %1920 = vmatprep.subr.bf16.mxu0 %v861
    %1921 = vmatpush1.bf16.msra.mxu0 %v860
    %1922 = vmatprep.subr.bf16.mxu0 %v865
    %1923 = vmatpush1.bf16.msra.mxu0 %v864
    %1924 = vmatprep.subr.bf16.mxu0 0
    %1925 = vmatpush1.bf16.msra.mxu0 0
    %1926 = vmatprep.subr.bf16.mxu0 0
    %1927 = vmatpush1.bf16.msra.mxu0 0
    %1928 = vmatprep.subr.bf16.mxu0 0
    %1929 = vmatpush1.bf16.msra.mxu0 0
    %1930 = vmatprep.subr.bf16.mxu0 0
    %1931 = vmatpush1.bf16.msra.mxu0 0
    %1932 = vmatprep.subr.bf16.mxu0 0
    %1933 = vmatpush1.bf16.msra.mxu0 0
    %1934 = vmatprep.subr.bf16.mxu0 0
    %1935 = vmatpush1.bf16.msra.mxu0 0
    %1936 = vmatprep.subr.bf16.mxu0 0
    %1937 = vmatpush1.bf16.msra.mxu0 0
    %1938 = vmatprep.subr.bf16.mxu0 0
    %1939 = vmatpush1.bf16.msra.mxu0 0
    %1940 = vmatprep.mubr.bf16.mxu0 0
    %1941 = vmatmul.mubr.bf16.gmra.mrb[0].mxu0 %v1654
    %v1942 = vpop.f32.mrb[0].mxu0
    %v1943 = vadd.f32 0.0, %v1942
    %v1944 = vpop.f32.mrb[0].mxu0
    %v1945 = vadd.f32 0.0, %v1944
    %v1946 = vpop.f32.mrb[0].mxu0
    %v1947 = vpop.f32.mrb[0].mxu0
    %1948 = vdwg.mxu0
    %v1949 = vadd.f32 %v1863, %v1902
    %v1950 = vadd.f32 %v1864, %v1904
    %v1951 = vadd.f32 %v1865, %v1943
    %v1952 = vadd.f32 %v1866, %v1945
    %v1953 = vxor.u32 %v1949, 2147483648
    %v1954 = vmul.f32 %v1953, 1.442695
    %v1955 = vpow.pop %v1954
    %v1956 = vadd.f32 %v1955, 1.0
    %v1957 = vrcp.pop %v1956
    %v1958 = vmul.f32 1.0, %v1957
    %v1959 = vxor.u32 %v1950, 2147483648
    %v1960 = vmul.f32 %v1959, 1.442695
    %v1961 = vpow.pop %v1960
    %v1962 = vadd.f32 %v1961, 1.0
    %v1963 = vrcp.pop %v1962
    %v1964 = vmul.f32 1.0, %v1963
    %v1965 = vtanh.pop %v1951
    %v1966 = vxor.u32 %v1952, 2147483648
    %v1967 = vmul.f32 %v1966, 1.442695
    %v1968 = vpow.pop %v1967
    %v1969 = vadd.f32 %v1968, 1.0
    %v1970 = vrcp.pop %v1969
    %v1971 = vmul.f32 1.0, %v1970
    %v1972 = vmul.f32 %v1964, %v1651
    %v1973 = vmul.f32 %v1958, %v1965
    %v1974 = vadd.f32 %v1972, %v1973
    %v1975 = vtanh.pop %v1974
    %v1976 = vmul.f32 %v1971, %v1975
    %v1977 = vpack.c.bf16 %v1976, %v1976
    %s1978 = scalar_lea.vmem %s0, 8
    %v1979 = vld [vmem:[%s1978] sm:$0x3]
    %1981 = vset.pattern.permute.xlu0 0
    %1982 = vperm.xlu0 %1981, %v1979
    %v1983 = vpop.permute.xlu0 %1982
    %v1985 = vmul.f32 %v1983, %v100
    %v1986 = vmul.f32 %v1983, %v104
    %v1987 = vmul.f32 %v1983, %v108
    %v1988 = vmul.f32 %v1983, %v112
    %v1989 = vadd.f32 %v48, %v1985
    %v1990 = vadd.f32 %v52, %v1986
    %v1991 = vadd.f32 %v56, %v1987
    %v1992 = vadd.f32 %v60, %v1988
    %1993 = vmatprep.subr.bf16.mxu0 %v254
    %1994 = vmatpush1.bf16.msra.mxu0 %v253
    %1995 = vmatprep.subr.bf16.mxu0 %v258
    %1996 = vmatpush1.bf16.msra.mxu0 %v257
    %1997 = vmatprep.subr.bf16.mxu0 %v262
    %1998 = vmatpush1.bf16.msra.mxu0 %v261
    %1999 = vmatprep.subr.bf16.mxu0 %v266
    %2000 = vmatpush1.bf16.msra.mxu0 %v265
    %2001 = vmatprep.subr.bf16.mxu0 %v270
    %2002 = vmatpush1.bf16.msra.mxu0 %v269
    %2003 = vmatprep.subr.bf16.mxu0 %v274
    %2004 = vmatpush1.bf16.msra.mxu0 %v273
    %2005 = vmatprep.subr.bf16.mxu0 %v278
    %2006 = vmatpush1.bf16.msra.mxu0 %v277
    %2007 = vmatprep.subr.bf16.mxu0 %v282
    %2008 = vmatpush1.bf16.msra.mxu0 %v281
    %2009 = vmatprep.subr.bf16.mxu0 0
    %2010 = vmatpush1.bf16.msra.mxu0 0
    %2011 = vmatprep.subr.bf16.mxu0 0
    %2012 = vmatpush1.bf16.msra.mxu0 0
    %2013 = vmatprep.subr.bf16.mxu0 0
    %2014 = vmatpush1.bf16.msra.mxu0 0
    %2015 = vmatprep.subr.bf16.mxu0 0
    %2016 = vmatpush1.bf16.msra.mxu0 0
    %2017 = vmatprep.subr.bf16.mxu0 0
    %2018 = vmatpush1.bf16.msra.mxu0 0
    %2019 = vmatprep.subr.bf16.mxu0 0
    %2020 = vmatpush1.bf16.msra.mxu0 0
    %2021 = vmatprep.subr.bf16.mxu0 0
    %2022 = vmatpush1.bf16.msra.mxu0 0
    %2023 = vmatprep.subr.bf16.mxu0 0
    %2024 = vmatpush1.bf16.msra.mxu0 0
    %2025 = vmatprep.mubr.bf16.mxu0 0
    %2026 = vmatmul.mubr.bf16.gmra.mrb[0].mxu0 %v1780
    %v2027 = vpop.f32.mrb[0].mxu0
    %v2028 = vadd.f32 0.0, %v2027
    %v2029 = vpop.f32.mrb[0].mxu0
    %v2030 = vadd.f32 0.0, %v2029
    %v2031 = vpop.f32.mrb[0].mxu0
    %v2032 = vpop.f32.mrb[0].mxu0
    %2033 = vdwg.mxu0
    %2034 = vmatprep.subr.bf16.mxu0 %v256
    %2035 = vmatpush1.bf16.msra.mxu0 %v255
    %2036 = vmatprep.subr.bf16.mxu0 %v260
    %2037 = vmatpush1.bf16.msra.mxu0 %v259
    %2038 = vmatprep.subr.bf16.mxu0 %v264
    %2039 = vmatpush1.bf16.msra.mxu0 %v263
    %2040 = vmatprep.subr.bf16.mxu0 %v268
    %2041 = vmatpush1.bf16.msra.mxu0 %v267
    %2042 = vmatprep.subr.bf16.mxu0 %v272
    %2043 = vmatpush1.bf16.msra.mxu0 %v271
    %2044 = vmatprep.subr.bf16.mxu0 %v276
    %2045 = vmatpush1.bf16.msra.mxu0 %v275
    %2046 = vmatprep.subr.bf16.mxu0 %v280
    %2047 = vmatpush1.bf16.msra.mxu0 %v279
    %2048 = vmatprep.subr.bf16.mxu0 %v284
    %2049 = vmatpush1.bf16.msra.mxu0 %v283
    %2050 = vmatprep.subr.bf16.mxu0 0
    %2051 = vmatpush1.bf16.msra.mxu0 0
    %2052 = vmatprep.subr.bf16.mxu0 0
    %2053 = vmatpush1.bf16.msra.mxu0 0
    %2054 = vmatprep.subr.bf16.mxu0 0
    %2055 = vmatpush1.bf16.msra.mxu0 0
    %2056 = vmatprep.subr.bf16.mxu0 0
    %2057 = vmatpush1.bf16.msra.mxu0 0
    %2058 = vmatprep.subr.bf16.mxu0 0
    %2059 = vmatpush1.bf16.msra.mxu0 0
    %2060 = vmatprep.subr.bf16.mxu0 0
    %2061 = vmatpush1.bf16.msra.mxu0 0
    %2062 = vmatprep.subr.bf16.mxu0 0
    %2063 = vmatpush1.bf16.msra.mxu0 0
    %2064 = vmatprep.subr.bf16.mxu0 0
    %2065 = vmatpush1.bf16.msra.mxu0 0
    %2066 = vmatprep.mubr.bf16.mxu0 0
    %2067 = vmatmul.mubr.bf16.gmra.mrb[0].mxu0 %v1780
    %v2068 = vpop.f32.mrb[0].mxu0
    %v2069 = vadd.f32 0.0, %v2068
    %v2070 = vpop.f32.mrb[0].mxu0
    %v2071 = vadd.f32 0.0, %v2070
    %v2072 = vpop.f32.mrb[0].mxu0
    %v2073 = vpop.f32.mrb[0].mxu0
    %2074 = vdwg.mxu0
    %v2075 = vadd.f32 %v1989, %v2028
    %v2076 = vadd.f32 %v1990, %v2030
    %v2077 = vadd.f32 %v1991, %v2069
    %v2078 = vadd.f32 %v1992, %v2071
    %v2079 = vxor.u32 %v2075, 2147483648
    %v2080 = vmul.f32 %v2079, 1.442695
    %v2081 = vpow.pop %v2080
    %v2082 = vadd.f32 %v2081, 1.0
    %v2083 = vrcp.pop %v2082
    %v2084 = vmul.f32 1.0, %v2083
    %v2085 = vxor.u32 %v2076, 2147483648
    %v2086 = vmul.f32 %v2085, 1.442695
    %v2087 = vpow.pop %v2086
    %v2088 = vadd.f32 %v2087, 1.0
    %v2089 = vrcp.pop %v2088
    %v2090 = vmul.f32 1.0, %v2089
    %v2091 = vtanh.pop %v2077
    %v2092 = vxor.u32 %v2078, 2147483648
    %v2093 = vmul.f32 %v2092, 1.442695
    %v2094 = vpow.pop %v2093
    %v2095 = vadd.f32 %v2094, 1.0
    %v2096 = vrcp.pop %v2095
    %v2097 = vmul.f32 1.0, %v2096
    %v2098 = vmul.f32 %v2090, %v1777
    %v2099 = vmul.f32 %v2084, %v2091
    %v2100 = vadd.f32 %v2098, %v2099
    %v2101 = vtanh.pop %v2100
    %v2102 = vmul.f32 %v2097, %v2101
    %v2103 = vpack.c.bf16 %v2102, %v2102
    %2104 = vmatprep.subr.bf16.mxu0 %v557
    %2105 = vmatpush1.bf16.msra.mxu0 %v556
    %2106 = vmatprep.subr.bf16.mxu0 %v561
    %2107 = vmatpush1.bf16.msra.mxu0 %v560
    %2108 = vmatprep.subr.bf16.mxu0 %v565
    %2109 = vmatpush1.bf16.msra.mxu0 %v564
    %2110 = vmatprep.subr.bf16.mxu0 %v569
    %2111 = vmatpush1.bf16.msra.mxu0 %v568
    %2112 = vmatprep.subr.bf16.mxu0 %v573
    %2113 = vmatpush1.bf16.msra.mxu0 %v572
    %2114 = vmatprep.subr.bf16.mxu0 %v577
    %2115 = vmatpush1.bf16.msra.mxu0 %v576
    %2116 = vmatprep.subr.bf16.mxu0 %v581
    %2117 = vmatpush1.bf16.msra.mxu0 %v580
    %2118 = vmatprep.subr.bf16.mxu0 %v585
    %2119 = vmatpush1.bf16.msra.mxu0 %v584
    %2120 = vmatprep.subr.bf16.mxu0 0
    %2121 = vmatpush1.bf16.msra.mxu0 0
    %2122 = vmatprep.subr.bf16.mxu0 0
    %2123 = vmatpush1.bf16.msra.mxu0 0
    %2124 = vmatprep.subr.bf16.mxu0 0
    %2125 = vmatpush1.bf16.msra.mxu0 0
    %2126 = vmatprep.subr.bf16.mxu0 0
    %2127 = vmatpush1.bf16.msra.mxu0 0
    %2128 = vmatprep.subr.bf16.mxu0 0
    %2129 = vmatpush1.bf16.msra.mxu0 0
    %2130 = vmatprep.subr.bf16.mxu0 0
    %2131 = vmatpush1.bf16.msra.mxu0 0
    %2132 = vmatprep.subr.bf16.mxu0 0
    %2133 = vmatpush1.bf16.msra.mxu0 0
    %2134 = vmatprep.subr.bf16.mxu0 0
    %2135 = vmatpush1.bf16.msra.mxu0 0
    %2136 = vmatprep.mubr.bf16.mxu0 0
    %2137 = vmatmul.mubr.bf16.gmra.mrb[0].mxu0 %v2103
    %v2138 = vpop.f32.mrb[0].mxu0
    %v2139 = vadd.f32 0.0, %v2138
    %v2140 = vpop.f32.mrb[0].mxu0
    %v2141 = vadd.f32 0.0, %v2140
    %v2142 = vpop.f32.mrb[0].mxu0
    %v2143 = vpop.f32.mrb[0].mxu0
    %2144 = vdwg.mxu0
    %2145 = vmatprep.subr.bf16.mxu0 %v559
    %2146 = vmatpush1.bf16.msra.mxu0 %v558
    %2147 = vmatprep.subr.bf16.mxu0 %v563
    %2148 = vmatpush1.bf16.msra.mxu0 %v562
    %2149 = vmatprep.subr.bf16.mxu0 %v567
    %2150 = vmatpush1.bf16.msra.mxu0 %v566
    %2151 = vmatprep.subr.bf16.mxu0 %v571
    %2152 = vmatpush1.bf16.msra.mxu0 %v570
    %2153 = vmatprep.subr.bf16.mxu0 %v575
    %2154 = vmatpush1.bf16.msra.mxu0 %v574
    %2155 = vmatprep.subr.bf16.mxu0 %v579
    %2156 = vmatpush1.bf16.msra.mxu0 %v578
    %2157 = vmatprep.subr.bf16.mxu0 %v583
    %2158 = vmatpush1.bf16.msra.mxu0 %v582
    %2159 = vmatprep.subr.bf16.mxu0 %v587
    %2160 = vmatpush1.bf16.msra.mxu0 %v586
    %2161 = vmatprep.subr.bf16.mxu0 0
    %2162 = vmatpush1.bf16.msra.mxu0 0
    %2163 = vmatprep.subr.bf16.mxu0 0
    %2164 = vmatpush1.bf16.msra.mxu0 0
    %2165 = vmatprep.subr.bf16.mxu0 0
    %2166 = vmatpush1.bf16.msra.mxu0 0
    %2167 = vmatprep.subr.bf16.mxu0 0
    %2168 = vmatpush1.bf16.msra.mxu0 0
    %2169 = vmatprep.subr.bf16.mxu0 0
    %2170 = vmatpush1.bf16.msra.mxu0 0
    %2171 = vmatprep.subr.bf16.mxu0 0
    %2172 = vmatpush1.bf16.msra.mxu0 0
    %2173 = vmatprep.subr.bf16.mxu0 0
    %2174 = vmatpush1.bf16.msra.mxu0 0
    %2175 = vmatprep.subr.bf16.mxu0 0
    %2176 = vmatpush1.bf16.msra.mxu0 0
    %2177 = vmatprep.mubr.bf16.mxu0 0
    %2178 = vmatmul.mubr.bf16.gmra.mrb[0].mxu0 %v2103
    %v2179 = vpop.f32.mrb[0].mxu0
    %v2180 = vadd.f32 0.0, %v2179
    %v2181 = vpop.f32.mrb[0].mxu0
    %v2182 = vadd.f32 0.0, %v2181
    %v2183 = vpop.f32.mrb[0].mxu0
    %v2184 = vpop.f32.mrb[0].mxu0
    %2185 = vdwg.mxu0
    %v2186 = vadd.f32 %v71, %v2139
    %v2187 = vadd.f32 %v75, %v2141
    %v2188 = vadd.f32 %v79, %v2180
    %v2189 = vadd.f32 %v83, %v2182
    %2190 = vmatprep.subr.bf16.mxu0 %v835
    %2191 = vmatpush1.bf16.msra.mxu0 %v834
    %2192 = vmatprep.subr.bf16.mxu0 %v839
    %2193 = vmatpush1.bf16.msra.mxu0 %v838
    %2194 = vmatprep.subr.bf16.mxu0 %v843
    %2195 = vmatpush1.bf16.msra.mxu0 %v842
    %2196 = vmatprep.subr.bf16.mxu0 %v847
    %2197 = vmatpush1.bf16.msra.mxu0 %v846
    %2198 = vmatprep.subr.bf16.mxu0 %v851
    %2199 = vmatpush1.bf16.msra.mxu0 %v850
    %2200 = vmatprep.subr.bf16.mxu0 %v855
    %2201 = vmatpush1.bf16.msra.mxu0 %v854
    %2202 = vmatprep.subr.bf16.mxu0 %v859
    %2203 = vmatpush1.bf16.msra.mxu0 %v858
    %2204 = vmatprep.subr.bf16.mxu0 %v863
    %2205 = vmatpush1.bf16.msra.mxu0 %v862
    %2206 = vmatprep.subr.bf16.mxu0 0
    %2207 = vmatpush1.bf16.msra.mxu0 0
    %2208 = vmatprep.subr.bf16.mxu0 0
    %2209 = vmatpush1.bf16.msra.mxu0 0
    %2210 = vmatprep.subr.bf16.mxu0 0
    %2211 = vmatpush1.bf16.msra.mxu0 0
    %2212 = vmatprep.subr.bf16.mxu0 0
    %2213 = vmatpush1.bf16.msra.mxu0 0
    %2214 = vmatprep.subr.bf16.mxu0 0
    %2215 = vmatpush1.bf16.msra.mxu0 0
    %2216 = vmatprep.subr.bf16.mxu0 0
    %2217 = vmatpush1.bf16.msra.mxu0 0
    %2218 = vmatprep.subr.bf16.mxu0 0
    %2219 = vmatpush1.bf16.msra.mxu0 0
    %2220 = vmatprep.subr.bf16.mxu0 0
    %2221 = vmatpush1.bf16.msra.mxu0 0
    %2222 = vmatprep.mubr.bf16.mxu0 0
    %2223 = vmatmul.mubr.bf16.gmra.mrb[0].mxu0 %v1977
    %v2224 = vpop.f32.mrb[0].mxu0
    %v2225 = vadd.f32 0.0, %v2224
    %v2226 = vpop.f32.mrb[0].mxu0
    %v2227 = vadd.f32 0.0, %v2226
    %v2228 = vpop.f32.mrb[0].mxu0
    %v2229 = vpop.f32.mrb[0].mxu0
    %2230 = vdwg.mxu0
    %2231 = vmatprep.subr.bf16.mxu0 %v837
    %2232 = vmatpush1.bf16.msra.mxu0 %v836
    %2233 = vmatprep.subr.bf16.mxu0 %v841
    %2234 = vmatpush1.bf16.msra.mxu0 %v840
    %2235 = vmatprep.subr.bf16.mxu0 %v845
    %2236 = vmatpush1.bf16.msra.mxu0 %v844
    %2237 = vmatprep.subr.bf16.mxu0 %v849
    %2238 = vmatpush1.bf16.msra.mxu0 %v848
    %2239 = vmatprep.subr.bf16.mxu0 %v853
    %2240 = vmatpush1.bf16.msra.mxu0 %v852
    %2241 = vmatprep.subr.bf16.mxu0 %v857
    %2242 = vmatpush1.bf16.msra.mxu0 %v856
    %2243 = vmatprep.subr.bf16.mxu0 %v861
    %2244 = vmatpush1.bf16.msra.mxu0 %v860
    %2245 = vmatprep.subr.bf16.mxu0 %v865
    %2246 = vmatpush1.bf16.msra.mxu0 %v864
    %2247 = vmatprep.subr.bf16.mxu0 0
    %2248 = vmatpush1.bf16.msra.mxu0 0
    %2249 = vmatprep.subr.bf16.mxu0 0
    %2250 = vmatpush1.bf16.msra.mxu0 0
    %2251 = vmatprep.subr.bf16.mxu0 0
    %2252 = vmatpush1.bf16.msra.mxu0 0
    %2253 = vmatprep.subr.bf16.mxu0 0
    %2254 = vmatpush1.bf16.msra.mxu0 0
    %2255 = vmatprep.subr.bf16.mxu0 0
    %2256 = vmatpush1.bf16.msra.mxu0 0
    %2257 = vmatprep.subr.bf16.mxu0 0
    %2258 = vmatpush1.bf16.msra.mxu0 0
    %2259 = vmatprep.subr.bf16.mxu0 0
    %2260 = vmatpush1.bf16.msra.mxu0 0
    %2261 = vmatprep.subr.bf16.mxu0 0
    %2262 = vmatpush1.bf16.msra.mxu0 0
    %2263 = vmatprep.mubr.bf16.mxu0 0
    %2264 = vmatmul.mubr.bf16.gmra.mrb[0].mxu0 %v1977
    %v2265 = vpop.f32.mrb[0].mxu0
    %v2266 = vadd.f32 0.0, %v2265
    %v2267 = vpop.f32.mrb[0].mxu0
    %v2268 = vadd.f32 0.0, %v2267
    %v2269 = vpop.f32.mrb[0].mxu0
    %v2270 = vpop.f32.mrb[0].mxu0
    %2271 = vdwg.mxu0
    %v2272 = vadd.f32 %v2186, %v2225
    %v2273 = vadd.f32 %v2187, %v2227
    %v2274 = vadd.f32 %v2188, %v2266
    %v2275 = vadd.f32 %v2189, %v2268
    %v2276 = vxor.u32 %v2272, 2147483648
    %v2277 = vmul.f32 %v2276, 1.442695
    %v2278 = vpow.pop %v2277
    %v2279 = vadd.f32 %v2278, 1.0
    %v2280 = vrcp.pop %v2279
    %v2281 = vmul.f32 1.0, %v2280
    %v2282 = vxor.u32 %v2273, 2147483648
    %v2283 = vmul.f32 %v2282, 1.442695
    %v2284 = vpow.pop %v2283
    %v2285 = vadd.f32 %v2284, 1.0
    %v2286 = vrcp.pop %v2285
    %v2287 = vmul.f32 1.0, %v2286
    %v2288 = vtanh.pop %v2274
    %v2289 = vxor.u32 %v2275, 2147483648
    %v2290 = vmul.f32 %v2289, 1.442695
    %v2291 = vpow.pop %v2290
    %v2292 = vadd.f32 %v2291, 1.0
    %v2293 = vrcp.pop %v2292
    %v2294 = vmul.f32 1.0, %v2293
    %v2295 = vmul.f32 %v2287, %v1974
    %v2296 = vmul.f32 %v2281, %v2288
    %v2297 = vadd.f32 %v2295, %v2296
    %v2298 = vtanh.pop %v2297
    %v2299 = vmul.f32 %v2294, %v2298
    %v2300 = vpack.c.bf16 %v2299, %v2299
    %s2301 = scalar_lea.vmem %s0, 10
    %v2302 = vld [vmem:[%s2301] sm:$0x3]
    %2304 = vset.pattern.permute.xlu0 0
    %2305 = vperm.xlu0 %2304, %v2302
    %v2306 = vpop.permute.xlu0 %2305
    %v2308 = vmul.f32 %v2306, %v100
    %v2309 = vmul.f32 %v2306, %v104
    %v2310 = vmul.f32 %v2306, %v108
    %v2311 = vmul.f32 %v2306, %v112
    %v2312 = vadd.f32 %v48, %v2308
    %v2313 = vadd.f32 %v52, %v2309
    %v2314 = vadd.f32 %v56, %v2310
    %v2315 = vadd.f32 %v60, %v2311
    %2316 = vmatprep.subr.bf16.mxu0 %v254
    %2317 = vmatpush1.bf16.msra.mxu0 %v253
    %2318 = vmatprep.subr.bf16.mxu0 %v258
    %2319 = vmatpush1.bf16.msra.mxu0 %v257
    %2320 = vmatprep.subr.bf16.mxu0 %v262
    %2321 = vmatpush1.bf16.msra.mxu0 %v261
    %2322 = vmatprep.subr.bf16.mxu0 %v266
    %2323 = vmatpush1.bf16.msra.mxu0 %v265
    %2324 = vmatprep.subr.bf16.mxu0 %v270
    %2325 = vmatpush1.bf16.msra.mxu0 %v269
    %2326 = vmatprep.subr.bf16.mxu0 %v274
    %2327 = vmatpush1.bf16.msra.mxu0 %v273
    %2328 = vmatprep.subr.bf16.mxu0 %v278
    %2329 = vmatpush1.bf16.msra.mxu0 %v277
    %2330 = vmatprep.subr.bf16.mxu0 %v282
    %2331 = vmatpush1.bf16.msra.mxu0 %v281
    %2332 = vmatprep.subr.bf16.mxu0 0
    %2333 = vmatpush1.bf16.msra.mxu0 0
    %2334 = vmatprep.subr.bf16.mxu0 0
    %2335 = vmatpush1.bf16.msra.mxu0 0
    %2336 = vmatprep.subr.bf16.mxu0 0
    %2337 = vmatpush1.bf16.msra.mxu0 0
    %2338 = vmatprep.subr.bf16.mxu0 0
    %2339 = vmatpush1.bf16.msra.mxu0 0
    %2340 = vmatprep.subr.bf16.mxu0 0
    %2341 = vmatpush1.bf16.msra.mxu0 0
    %2342 = vmatprep.subr.bf16.mxu0 0
    %2343 = vmatpush1.bf16.msra.mxu0 0
    %2344 = vmatprep.subr.bf16.mxu0 0
    %2345 = vmatpush1.bf16.msra.mxu0 0
    %2346 = vmatprep.subr.bf16.mxu0 0
    %2347 = vmatpush1.bf16.msra.mxu0 0
    %2348 = vmatprep.mubr.bf16.mxu0 0
    %2349 = vmatmul.mubr.bf16.gmra.mrb[0].mxu0 %v2103
    %v2350 = vpop.f32.mrb[0].mxu0
    %v2351 = vadd.f32 0.0, %v2350
    %v2352 = vpop.f32.mrb[0].mxu0
    %v2353 = vadd.f32 0.0, %v2352
    %v2354 = vpop.f32.mrb[0].mxu0
    %v2355 = vpop.f32.mrb[0].mxu0
    %2356 = vdwg.mxu0
    %2357 = vmatprep.subr.bf16.mxu0 %v256
    %2358 = vmatpush1.bf16.msra.mxu0 %v255
    %2359 = vmatprep.subr.bf16.mxu0 %v260
    %2360 = vmatpush1.bf16.msra.mxu0 %v259
    %2361 = vmatprep.subr.bf16.mxu0 %v264
    %2362 = vmatpush1.bf16.msra.mxu0 %v263
    %2363 = vmatprep.subr.bf16.mxu0 %v268
    %2364 = vmatpush1.bf16.msra.mxu0 %v267
    %2365 = vmatprep.subr.bf16.mxu0 %v272
    %2366 = vmatpush1.bf16.msra.mxu0 %v271
    %2367 = vmatprep.subr.bf16.mxu0 %v276
    %2368 = vmatpush1.bf16.msra.mxu0 %v275
    %2369 = vmatprep.subr.bf16.mxu0 %v280
    %2370 = vmatpush1.bf16.msra.mxu0 %v279
    %2371 = vmatprep.subr.bf16.mxu0 %v284
    %2372 = vmatpush1.bf16.msra.mxu0 %v283
    %2373 = vmatprep.subr.bf16.mxu0 0
    %2374 = vmatpush1.bf16.msra.mxu0 0
    %2375 = vmatprep.subr.bf16.mxu0 0
    %2376 = vmatpush1.bf16.msra.mxu0 0
    %2377 = vmatprep.subr.bf16.mxu0 0
    %2378 = vmatpush1.bf16.msra.mxu0 0
    %2379 = vmatprep.subr.bf16.mxu0 0
    %2380 = vmatpush1.bf16.msra.mxu0 0
    %2381 = vmatprep.subr.bf16.mxu0 0
    %2382 = vmatpush1.bf16.msra.mxu0 0
    %2383 = vmatprep.subr.bf16.mxu0 0
    %2384 = vmatpush1.bf16.msra.mxu0 0
    %2385 = vmatprep.subr.bf16.mxu0 0
    %2386 = vmatpush1.bf16.msra.mxu0 0
    %2387 = vmatprep.subr.bf16.mxu0 0
    %2388 = vmatpush1.bf16.msra.mxu0 0
    %2389 = vmatprep.mubr.bf16.mxu0 0
    %2390 = vmatmul.mubr.bf16.gmra.mrb[0].mxu0 %v2103
    %v2391 = vpop.f32.mrb[0].mxu0
    %v2392 = vadd.f32 0.0, %v2391
    %v2393 = vpop.f32.mrb[0].mxu0
    %v2394 = vadd.f32 0.0, %v2393
    %v2395 = vpop.f32.mrb[0].mxu0
    %v2396 = vpop.f32.mrb[0].mxu0
    %2397 = vdwg.mxu0
    %v2398 = vadd.f32 %v2312, %v2351
    %v2399 = vadd.f32 %v2313, %v2353
    %v2400 = vadd.f32 %v2314, %v2392
    %v2401 = vadd.f32 %v2315, %v2394
    %v2402 = vxor.u32 %v2398, 2147483648
    %v2403 = vmul.f32 %v2402, 1.442695
    %v2404 = vpow.pop %v2403
    %v2405 = vadd.f32 %v2404, 1.0
    %v2406 = vrcp.pop %v2405
    %v2407 = vmul.f32 1.0, %v2406
    %v2408 = vxor.u32 %v2399, 2147483648
    %v2409 = vmul.f32 %v2408, 1.442695
    %v2410 = vpow.pop %v2409
    %v2411 = vadd.f32 %v2410, 1.0
    %v2412 = vrcp.pop %v2411
    %v2413 = vmul.f32 1.0, %v2412
    %v2414 = vtanh.pop %v2400
    %v2415 = vxor.u32 %v2401, 2147483648
    %v2416 = vmul.f32 %v2415, 1.442695
    %v2417 = vpow.pop %v2416
    %v2418 = vadd.f32 %v2417, 1.0
    %v2419 = vrcp.pop %v2418
    %v2420 = vmul.f32 1.0, %v2419
    %v2421 = vmul.f32 %v2413, %v2100
    %v2422 = vmul.f32 %v2407, %v2414
    %v2423 = vadd.f32 %v2421, %v2422
    %v2424 = vtanh.pop %v2423
    %v2425 = vmul.f32 %v2420, %v2424
    %v2426 = vpack.c.bf16 %v2425, %v2425
    %2427 = vmatprep.subr.bf16.mxu0 %v557
    %2428 = vmatpush1.bf16.msra.mxu0 %v556
    %2429 = vmatprep.subr.bf16.mxu0 %v561
    %2430 = vmatpush1.bf16.msra.mxu0 %v560
    %2431 = vmatprep.subr.bf16.mxu0 %v565
    %2432 = vmatpush1.bf16.msra.mxu0 %v564
    %2433 = vmatprep.subr.bf16.mxu0 %v569
    %2434 = vmatpush1.bf16.msra.mxu0 %v568
    %2435 = vmatprep.subr.bf16.mxu0 %v573
    %2436 = vmatpush1.bf16.msra.mxu0 %v572
    %2437 = vmatprep.subr.bf16.mxu0 %v577
    %2438 = vmatpush1.bf16.msra.mxu0 %v576
    %2439 = vmatprep.subr.bf16.mxu0 %v581
    %2440 = vmatpush1.bf16.msra.mxu0 %v580
    %2441 = vmatprep.subr.bf16.mxu0 %v585
    %2442 = vmatpush1.bf16.msra.mxu0 %v584
    %2443 = vmatprep.subr.bf16.mxu0 0
    %2444 = vmatpush1.bf16.msra.mxu0 0
    %2445 = vmatprep.subr.bf16.mxu0 0
    %2446 = vmatpush1.bf16.msra.mxu0 0
    %2447 = vmatprep.subr.bf16.mxu0 0
    %2448 = vmatpush1.bf16.msra.mxu0 0
    %2449 = vmatprep.subr.bf16.mxu0 0
    %2450 = vmatpush1.bf16.msra.mxu0 0
    %2451 = vmatprep.subr.bf16.mxu0 0
    %2452 = vmatpush1.bf16.msra.mxu0 0
    %2453 = vmatprep.subr.bf16.mxu0 0
    %2454 = vmatpush1.bf16.msra.mxu0 0
    %2455 = vmatprep.subr.bf16.mxu0 0
    %2456 = vmatpush1.bf16.msra.mxu0 0
    %2457 = vmatprep.subr.bf16.mxu0 0
    %2458 = vmatpush1.bf16.msra.mxu0 0
    %2459 = vmatprep.mubr.bf16.mxu0 0
    %2460 = vmatmul.mubr.bf16.gmra.mrb[0].mxu0 %v2426
    %v2461 = vpop.f32.mrb[0].mxu0
    %v2462 = vadd.f32 0.0, %v2461
    %v2463 = vpop.f32.mrb[0].mxu0
    %v2464 = vadd.f32 0.0, %v2463
    %v2465 = vpop.f32.mrb[0].mxu0
    %v2466 = vpop.f32.mrb[0].mxu0
    %2467 = vdwg.mxu0
    %2468 = vmatprep.subr.bf16.mxu0 %v559
    %2469 = vmatpush1.bf16.msra.mxu0 %v558
    %2470 = vmatprep.subr.bf16.mxu0 %v563
    %2471 = vmatpush1.bf16.msra.mxu0 %v562
    %2472 = vmatprep.subr.bf16.mxu0 %v567
    %2473 = vmatpush1.bf16.msra.mxu0 %v566
    %2474 = vmatprep.subr.bf16.mxu0 %v571
    %2475 = vmatpush1.bf16.msra.mxu0 %v570
    %2476 = vmatprep.subr.bf16.mxu0 %v575
    %2477 = vmatpush1.bf16.msra.mxu0 %v574
    %2478 = vmatprep.subr.bf16.mxu0 %v579
    %2479 = vmatpush1.bf16.msra.mxu0 %v578
    %2480 = vmatprep.subr.bf16.mxu0 %v583
    %2481 = vmatpush1.bf16.msra.mxu0 %v582
    %2482 = vmatprep.subr.bf16.mxu0 %v587
    %2483 = vmatpush1.bf16.msra.mxu0 %v586
    %2484 = vmatprep.subr.bf16.mxu0 0
    %2485 = vmatpush1.bf16.msra.mxu0 0
    %2486 = vmatprep.subr.bf16.mxu0 0
    %2487 = vmatpush1.bf16.msra.mxu0 0
    %2488 = vmatprep.subr.bf16.mxu0 0
    %2489 = vmatpush1.bf16.msra.mxu0 0
    %2490 = vmatprep.subr.bf16.mxu0 0
    %2491 = vmatpush1.bf16.msra.mxu0 0
    %2492 = vmatprep.subr.bf16.mxu0 0
    %2493 = vmatpush1.bf16.msra.mxu0 0
    %2494 = vmatprep.subr.bf16.mxu0 0
    %2495 = vmatpush1.bf16.msra.mxu0 0
    %2496 = vmatprep.subr.bf16.mxu0 0
    %2497 = vmatpush1.bf16.msra.mxu0 0
    %2498 = vmatprep.subr.bf16.mxu0 0
    %2499 = vmatpush1.bf16.msra.mxu0 0
    %2500 = vmatprep.mubr.bf16.mxu0 0
    %2501 = vmatmul.mubr.bf16.gmra.mrb[0].mxu0 %v2426
    %v2502 = vpop.f32.mrb[0].mxu0
    %v2503 = vadd.f32 0.0, %v2502
    %v2504 = vpop.f32.mrb[0].mxu0
    %v2505 = vadd.f32 0.0, %v2504
    %v2506 = vpop.f32.mrb[0].mxu0
    %v2507 = vpop.f32.mrb[0].mxu0
    %2508 = vdwg.mxu0
    %v2509 = vadd.f32 %v71, %v2462
    %v2510 = vadd.f32 %v75, %v2464
    %v2511 = vadd.f32 %v79, %v2503
    %v2512 = vadd.f32 %v83, %v2505
    %2513 = vmatprep.subr.bf16.mxu0 %v835
    %2514 = vmatpush1.bf16.msra.mxu0 %v834
    %2515 = vmatprep.subr.bf16.mxu0 %v839
    %2516 = vmatpush1.bf16.msra.mxu0 %v838
    %2517 = vmatprep.subr.bf16.mxu0 %v843
    %2518 = vmatpush1.bf16.msra.mxu0 %v842
    %2519 = vmatprep.subr.bf16.mxu0 %v847
    %2520 = vmatpush1.bf16.msra.mxu0 %v846
    %2521 = vmatprep.subr.bf16.mxu0 %v851
    %2522 = vmatpush1.bf16.msra.mxu0 %v850
    %2523 = vmatprep.subr.bf16.mxu0 %v855
    %2524 = vmatpush1.bf16.msra.mxu0 %v854
    %2525 = vmatprep.subr.bf16.mxu0 %v859
    %2526 = vmatpush1.bf16.msra.mxu0 %v858
    %2527 = vmatprep.subr.bf16.mxu0 %v863
    %2528 = vmatpush1.bf16.msra.mxu0 %v862
    %2529 = vmatprep.subr.bf16.mxu0 0
    %2530 = vmatpush1.bf16.msra.mxu0 0
    %2531 = vmatprep.subr.bf16.mxu0 0
    %2532 = vmatpush1.bf16.msra.mxu0 0
    %2533 = vmatprep.subr.bf16.mxu0 0
    %2534 = vmatpush1.bf16.msra.mxu0 0
    %2535 = vmatprep.subr.bf16.mxu0 0
    %2536 = vmatpush1.bf16.msra.mxu0 0
    %2537 = vmatprep.subr.bf16.mxu0 0
    %2538 = vmatpush1.bf16.msra.mxu0 0
    %2539 = vmatprep.subr.bf16.mxu0 0
    %2540 = vmatpush1.bf16.msra.mxu0 0
    %2541 = vmatprep.subr.bf16.mxu0 0
    %2542 = vmatpush1.bf16.msra.mxu0 0
    %2543 = vmatprep.subr.bf16.mxu0 0
    %2544 = vmatpush1.bf16.msra.mxu0 0
    %2545 = vmatprep.mubr.bf16.mxu0 0
    %2546 = vmatmul.mubr.bf16.gmra.mrb[0].mxu0 %v2300
    %v2547 = vpop.f32.mrb[0].mxu0
    %v2548 = vadd.f32 0.0, %v2547
    %v2549 = vpop.f32.mrb[0].mxu0
    %v2550 = vadd.f32 0.0, %v2549
    %v2551 = vpop.f32.mrb[0].mxu0
    %v2552 = vpop.f32.mrb[0].mxu0
    %2553 = vdwg.mxu0
    %2554 = vmatprep.subr.bf16.mxu0 %v837
    %2555 = vmatpush1.bf16.msra.mxu0 %v836
    %2556 = vmatprep.subr.bf16.mxu0 %v841
    %2557 = vmatpush1.bf16.msra.mxu0 %v840
    %2558 = vmatprep.subr.bf16.mxu0 %v845
    %2559 = vmatpush1.bf16.msra.mxu0 %v844
    %2560 = vmatprep.subr.bf16.mxu0 %v849
    %2561 = vmatpush1.bf16.msra.mxu0 %v848
    %2562 = vmatprep.subr.bf16.mxu0 %v853
    %2563 = vmatpush1.bf16.msra.mxu0 %v852
    %2564 = vmatprep.subr.bf16.mxu0 %v857
    %2565 = vmatpush1.bf16.msra.mxu0 %v856
    %2566 = vmatprep.subr.bf16.mxu0 %v861
    %2567 = vmatpush1.bf16.msra.mxu0 %v860
    %2568 = vmatprep.subr.bf16.mxu0 %v865
    %2569 = vmatpush1.bf16.msra.mxu0 %v864
    %2570 = vmatprep.subr.bf16.mxu0 0
    %2571 = vmatpush1.bf16.msra.mxu0 0
    %2572 = vmatprep.subr.bf16.mxu0 0
    %2573 = vmatpush1.bf16.msra.mxu0 0
    %2574 = vmatprep.subr.bf16.mxu0 0
    %2575 = vmatpush1.bf16.msra.mxu0 0
    %2576 = vmatprep.subr.bf16.mxu0 0
    %2577 = vmatpush1.bf16.msra.mxu0 0
    %2578 = vmatprep.subr.bf16.mxu0 0
    %2579 = vmatpush1.bf16.msra.mxu0 0
    %2580 = vmatprep.subr.bf16.mxu0 0
    %2581 = vmatpush1.bf16.msra.mxu0 0
    %2582 = vmatprep.subr.bf16.mxu0 0
    %2583 = vmatpush1.bf16.msra.mxu0 0
    %2584 = vmatprep.subr.bf16.mxu0 0
    %2585 = vmatpush1.bf16.msra.mxu0 0
    %2586 = vmatprep.mubr.bf16.mxu0 0
    %2587 = vmatmul.mubr.bf16.gmra.mrb[0].mxu0 %v2300
    %v2588 = vpop.f32.mrb[0].mxu0
    %v2589 = vadd.f32 0.0, %v2588
    %v2590 = vpop.f32.mrb[0].mxu0
    %v2591 = vadd.f32 0.0, %v2590
    %v2592 = vpop.f32.mrb[0].mxu0
    %v2593 = vpop.f32.mrb[0].mxu0
    %2594 = vdwg.mxu0
    %v2595 = vadd.f32 %v2509, %v2548
    %v2596 = vadd.f32 %v2510, %v2550
    %v2597 = vadd.f32 %v2511, %v2589
    %v2598 = vadd.f32 %v2512, %v2591
    %v2599 = vxor.u32 %v2595, 2147483648
    %v2600 = vmul.f32 %v2599, 1.442695
    %v2601 = vpow.pop %v2600
    %v2602 = vadd.f32 %v2601, 1.0
    %v2603 = vrcp.pop %v2602
    %v2604 = vmul.f32 1.0, %v2603
    %v2605 = vxor.u32 %v2596, 2147483648
    %v2606 = vmul.f32 %v2605, 1.442695
    %v2607 = vpow.pop %v2606
    %v2608 = vadd.f32 %v2607, 1.0
    %v2609 = vrcp.pop %v2608
    %v2610 = vmul.f32 1.0, %v2609
    %v2611 = vtanh.pop %v2597
    %v2612 = vxor.u32 %v2598, 2147483648
    %v2613 = vmul.f32 %v2612, 1.442695
    %v2614 = vpow.pop %v2613
    %v2615 = vadd.f32 %v2614, 1.0
    %v2616 = vrcp.pop %v2615
    %v2617 = vmul.f32 1.0, %v2616
    %v2618 = vmul.f32 %v2610, %v2297
    %v2619 = vmul.f32 %v2604, %v2611
    %v2620 = vadd.f32 %v2618, %v2619
    %v2621 = vtanh.pop %v2620
    %v2622 = vmul.f32 %v2617, %v2621
    %v2623 = vpack.c.bf16 %v2622, %v2622
    %s2624 = scalar_lea.vmem %s0, 12
    %v2625 = vld [vmem:[%s2624] sm:$0x3]
    %2627 = vset.pattern.permute.xlu0 0
    %2628 = vperm.xlu0 %2627, %v2625
    %v2629 = vpop.permute.xlu0 %2628
    %v2631 = vmul.f32 %v2629, %v100
    %v2632 = vmul.f32 %v2629, %v104
    %v2633 = vmul.f32 %v2629, %v108
    %v2634 = vmul.f32 %v2629, %v112
    %v2635 = vadd.f32 %v48, %v2631
    %v2636 = vadd.f32 %v52, %v2632
    %v2637 = vadd.f32 %v56, %v2633
    %v2638 = vadd.f32 %v60, %v2634
    %2639 = vmatprep.subr.bf16.mxu0 %v254
    %2640 = vmatpush1.bf16.msra.mxu0 %v253
    %2641 = vmatprep.subr.bf16.mxu0 %v258
    %2642 = vmatpush1.bf16.msra.mxu0 %v257
    %2643 = vmatprep.subr.bf16.mxu0 %v262
    %2644 = vmatpush1.bf16.msra.mxu0 %v261
    %2645 = vmatprep.subr.bf16.mxu0 %v266
    %2646 = vmatpush1.bf16.msra.mxu0 %v265
    %2647 = vmatprep.subr.bf16.mxu0 %v270
    %2648 = vmatpush1.bf16.msra.mxu0 %v269
    %2649 = vmatprep.subr.bf16.mxu0 %v274
    %2650 = vmatpush1.bf16.msra.mxu0 %v273
    %2651 = vmatprep.subr.bf16.mxu0 %v278
    %2652 = vmatpush1.bf16.msra.mxu0 %v277
    %2653 = vmatprep.subr.bf16.mxu0 %v282
    %2654 = vmatpush1.bf16.msra.mxu0 %v281
    %2655 = vmatprep.subr.bf16.mxu0 0
    %2656 = vmatpush1.bf16.msra.mxu0 0
    %2657 = vmatprep.subr.bf16.mxu0 0
    %2658 = vmatpush1.bf16.msra.mxu0 0
    %2659 = vmatprep.subr.bf16.mxu0 0
    %2660 = vmatpush1.bf16.msra.mxu0 0
    %2661 = vmatprep.subr.bf16.mxu0 0
    %2662 = vmatpush1.bf16.msra.mxu0 0
    %2663 = vmatprep.subr.bf16.mxu0 0
    %2664 = vmatpush1.bf16.msra.mxu0 0
    %2665 = vmatprep.subr.bf16.mxu0 0
    %2666 = vmatpush1.bf16.msra.mxu0 0
    %2667 = vmatprep.subr.bf16.mxu0 0
    %2668 = vmatpush1.bf16.msra.mxu0 0
    %2669 = vmatprep.subr.bf16.mxu0 0
    %2670 = vmatpush1.bf16.msra.mxu0 0
    %2671 = vmatprep.mubr.bf16.mxu0 0
    %2672 = vmatmul.mubr.bf16.gmra.mrb[0].mxu0 %v2426
    %v2673 = vpop.f32.mrb[0].mxu0
    %v2674 = vadd.f32 0.0, %v2673
    %v2675 = vpop.f32.mrb[0].mxu0
    %v2676 = vadd.f32 0.0, %v2675
    %v2677 = vpop.f32.mrb[0].mxu0
    %v2678 = vpop.f32.mrb[0].mxu0
    %2679 = vdwg.mxu0
    %2680 = vmatprep.subr.bf16.mxu0 %v256
    %2681 = vmatpush1.bf16.msra.mxu0 %v255
    %2682 = vmatprep.subr.bf16.mxu0 %v260
    %2683 = vmatpush1.bf16.msra.mxu0 %v259
    %2684 = vmatprep.subr.bf16.mxu0 %v264
    %2685 = vmatpush1.bf16.msra.mxu0 %v263
    %2686 = vmatprep.subr.bf16.mxu0 %v268
    %2687 = vmatpush1.bf16.msra.mxu0 %v267
    %2688 = vmatprep.subr.bf16.mxu0 %v272
    %2689 = vmatpush1.bf16.msra.mxu0 %v271
    %2690 = vmatprep.subr.bf16.mxu0 %v276
    %2691 = vmatpush1.bf16.msra.mxu0 %v275
    %2692 = vmatprep.subr.bf16.mxu0 %v280
    %2693 = vmatpush1.bf16.msra.mxu0 %v279
    %2694 = vmatprep.subr.bf16.mxu0 %v284
    %2695 = vmatpush1.bf16.msra.mxu0 %v283
    %2696 = vmatprep.subr.bf16.mxu0 0
    %2697 = vmatpush1.bf16.msra.mxu0 0
    %2698 = vmatprep.subr.bf16.mxu0 0
    %2699 = vmatpush1.bf16.msra.mxu0 0
    %2700 = vmatprep.subr.bf16.mxu0 0
    %2701 = vmatpush1.bf16.msra.mxu0 0
    %2702 = vmatprep.subr.bf16.mxu0 0
    %2703 = vmatpush1.bf16.msra.mxu0 0
    %2704 = vmatprep.subr.bf16.mxu0 0
    %2705 = vmatpush1.bf16.msra.mxu0 0
    %2706 = vmatprep.subr.bf16.mxu0 0
    %2707 = vmatpush1.bf16.msra.mxu0 0
    %2708 = vmatprep.subr.bf16.mxu0 0
    %2709 = vmatpush1.bf16.msra.mxu0 0
    %2710 = vmatprep.subr.bf16.mxu0 0
    %2711 = vmatpush1.bf16.msra.mxu0 0
    %2712 = vmatprep.mubr.bf16.mxu0 0
    %2713 = vmatmul.mubr.bf16.gmra.mrb[0].mxu0 %v2426
    %v2714 = vpop.f32.mrb[0].mxu0
    %v2715 = vadd.f32 0.0, %v2714
    %v2716 = vpop.f32.mrb[0].mxu0
    %v2717 = vadd.f32 0.0, %v2716
    %v2718 = vpop.f32.mrb[0].mxu0
    %v2719 = vpop.f32.mrb[0].mxu0
    %2720 = vdwg.mxu0
    %v2721 = vadd.f32 %v2635, %v2674
    %v2722 = vadd.f32 %v2636, %v2676
    %v2723 = vadd.f32 %v2637, %v2715
    %v2724 = vadd.f32 %v2638, %v2717
    %v2725 = vxor.u32 %v2721, 2147483648
    %v2726 = vmul.f32 %v2725, 1.442695
    %v2727 = vpow.pop %v2726
    %v2728 = vadd.f32 %v2727, 1.0
    %v2729 = vrcp.pop %v2728
    %v2730 = vmul.f32 1.0, %v2729
    %v2731 = vxor.u32 %v2722, 2147483648
    %v2732 = vmul.f32 %v2731, 1.442695
    %v2733 = vpow.pop %v2732
    %v2734 = vadd.f32 %v2733, 1.0
    %v2735 = vrcp.pop %v2734
    %v2736 = vmul.f32 1.0, %v2735
    %v2737 = vtanh.pop %v2723
    %v2738 = vxor.u32 %v2724, 2147483648
    %v2739 = vmul.f32 %v2738, 1.442695
    %v2740 = vpow.pop %v2739
    %v2741 = vadd.f32 %v2740, 1.0
    %v2742 = vrcp.pop %v2741
    %v2743 = vmul.f32 1.0, %v2742
    %v2744 = vmul.f32 %v2736, %v2423
    %v2745 = vmul.f32 %v2730, %v2737
    %v2746 = vadd.f32 %v2744, %v2745
    %v2747 = vtanh.pop %v2746
    %v2748 = vmul.f32 %v2743, %v2747
    %v2749 = vpack.c.bf16 %v2748, %v2748
    %2750 = vmatprep.subr.bf16.mxu0 %v557
    %2751 = vmatpush1.bf16.msra.mxu0 %v556
    %2752 = vmatprep.subr.bf16.mxu0 %v561
    %2753 = vmatpush1.bf16.msra.mxu0 %v560
    %2754 = vmatprep.subr.bf16.mxu0 %v565
    %2755 = vmatpush1.bf16.msra.mxu0 %v564
    %2756 = vmatprep.subr.bf16.mxu0 %v569
    %2757 = vmatpush1.bf16.msra.mxu0 %v568
    %2758 = vmatprep.subr.bf16.mxu0 %v573
    %2759 = vmatpush1.bf16.msra.mxu0 %v572
    %2760 = vmatprep.subr.bf16.mxu0 %v577
    %2761 = vmatpush1.bf16.msra.mxu0 %v576
    %2762 = vmatprep.subr.bf16.mxu0 %v581
    %2763 = vmatpush1.bf16.msra.mxu0 %v580
    %2764 = vmatprep.subr.bf16.mxu0 %v585
    %2765 = vmatpush1.bf16.msra.mxu0 %v584
    %2766 = vmatprep.subr.bf16.mxu0 0
    %2767 = vmatpush1.bf16.msra.mxu0 0
    %2768 = vmatprep.subr.bf16.mxu0 0
    %2769 = vmatpush1.bf16.msra.mxu0 0
    %2770 = vmatprep.subr.bf16.mxu0 0
    %2771 = vmatpush1.bf16.msra.mxu0 0
    %2772 = vmatprep.subr.bf16.mxu0 0
    %2773 = vmatpush1.bf16.msra.mxu0 0
    %2774 = vmatprep.subr.bf16.mxu0 0
    %2775 = vmatpush1.bf16.msra.mxu0 0
    %2776 = vmatprep.subr.bf16.mxu0 0
    %2777 = vmatpush1.bf16.msra.mxu0 0
    %2778 = vmatprep.subr.bf16.mxu0 0
    %2779 = vmatpush1.bf16.msra.mxu0 0
    %2780 = vmatprep.subr.bf16.mxu0 0
    %2781 = vmatpush1.bf16.msra.mxu0 0
    %2782 = vmatprep.mubr.bf16.mxu0 0
    %2783 = vmatmul.mubr.bf16.gmra.mrb[0].mxu0 %v2749
    %v2784 = vpop.f32.mrb[0].mxu0
    %v2785 = vadd.f32 0.0, %v2784
    %v2786 = vpop.f32.mrb[0].mxu0
    %v2787 = vadd.f32 0.0, %v2786
    %v2788 = vpop.f32.mrb[0].mxu0
    %v2789 = vpop.f32.mrb[0].mxu0
    %2790 = vdwg.mxu0
    %2791 = vmatprep.subr.bf16.mxu0 %v559
    %2792 = vmatpush1.bf16.msra.mxu0 %v558
    %2793 = vmatprep.subr.bf16.mxu0 %v563
    %2794 = vmatpush1.bf16.msra.mxu0 %v562
    %2795 = vmatprep.subr.bf16.mxu0 %v567
    %2796 = vmatpush1.bf16.msra.mxu0 %v566
    %2797 = vmatprep.subr.bf16.mxu0 %v571
    %2798 = vmatpush1.bf16.msra.mxu0 %v570
    %2799 = vmatprep.subr.bf16.mxu0 %v575
    %2800 = vmatpush1.bf16.msra.mxu0 %v574
    %2801 = vmatprep.subr.bf16.mxu0 %v579
    %2802 = vmatpush1.bf16.msra.mxu0 %v578
    %2803 = vmatprep.subr.bf16.mxu0 %v583
    %2804 = vmatpush1.bf16.msra.mxu0 %v582
    %2805 = vmatprep.subr.bf16.mxu0 %v587
    %2806 = vmatpush1.bf16.msra.mxu0 %v586
    %2807 = vmatprep.subr.bf16.mxu0 0
    %2808 = vmatpush1.bf16.msra.mxu0 0
    %2809 = vmatprep.subr.bf16.mxu0 0
    %2810 = vmatpush1.bf16.msra.mxu0 0
    %2811 = vmatprep.subr.bf16.mxu0 0
    %2812 = vmatpush1.bf16.msra.mxu0 0
    %2813 = vmatprep.subr.bf16.mxu0 0
    %2814 = vmatpush1.bf16.msra.mxu0 0
    %2815 = vmatprep.subr.bf16.mxu0 0
    %2816 = vmatpush1.bf16.msra.mxu0 0
    %2817 = vmatprep.subr.bf16.mxu0 0
    %2818 = vmatpush1.bf16.msra.mxu0 0
    %2819 = vmatprep.subr.bf16.mxu0 0
    %2820 = vmatpush1.bf16.msra.mxu0 0
    %2821 = vmatprep.subr.bf16.mxu0 0
    %2822 = vmatpush1.bf16.msra.mxu0 0
    %2823 = vmatprep.mubr.bf16.mxu0 0
    %2824 = vmatmul.mubr.bf16.gmra.mrb[0].mxu0 %v2749
    %v2825 = vpop.f32.mrb[0].mxu0
    %v2826 = vadd.f32 0.0, %v2825
    %v2827 = vpop.f32.mrb[0].mxu0
    %v2828 = vadd.f32 0.0, %v2827
    %v2829 = vpop.f32.mrb[0].mxu0
    %v2830 = vpop.f32.mrb[0].mxu0
    %2831 = vdwg.mxu0
    %v2832 = vadd.f32 %v71, %v2785
    %v2833 = vadd.f32 %v75, %v2787
    %v2834 = vadd.f32 %v79, %v2826
    %v2835 = vadd.f32 %v83, %v2828
    %2836 = vmatprep.subr.bf16.mxu0 %v835
    %2837 = vmatpush1.bf16.msra.mxu0 %v834
    %2838 = vmatprep.subr.bf16.mxu0 %v839
    %2839 = vmatpush1.bf16.msra.mxu0 %v838
    %2840 = vmatprep.subr.bf16.mxu0 %v843
    %2841 = vmatpush1.bf16.msra.mxu0 %v842
    %2842 = vmatprep.subr.bf16.mxu0 %v847
    %2843 = vmatpush1.bf16.msra.mxu0 %v846
    %2844 = vmatprep.subr.bf16.mxu0 %v851
    %2845 = vmatpush1.bf16.msra.mxu0 %v850
    %2846 = vmatprep.subr.bf16.mxu0 %v855
    %2847 = vmatpush1.bf16.msra.mxu0 %v854
    %2848 = vmatprep.subr.bf16.mxu0 %v859
    %2849 = vmatpush1.bf16.msra.mxu0 %v858
    %2850 = vmatprep.subr.bf16.mxu0 %v863
    %2851 = vmatpush1.bf16.msra.mxu0 %v862
    %2852 = vmatprep.subr.bf16.mxu0 0
    %2853 = vmatpush1.bf16.msra.mxu0 0
    %2854 = vmatprep.subr.bf16.mxu0 0
    %2855 = vmatpush1.bf16.msra.mxu0 0
    %2856 = vmatprep.subr.bf16.mxu0 0
    %2857 = vmatpush1.bf16.msra.mxu0 0
    %2858 = vmatprep.subr.bf16.mxu0 0
    %2859 = vmatpush1.bf16.msra.mxu0 0
    %2860 = vmatprep.subr.bf16.mxu0 0
    %2861 = vmatpush1.bf16.msra.mxu0 0
    %2862 = vmatprep.subr.bf16.mxu0 0
    %2863 = vmatpush1.bf16.msra.mxu0 0
    %2864 = vmatprep.subr.bf16.mxu0 0
    %2865 = vmatpush1.bf16.msra.mxu0 0
    %2866 = vmatprep.subr.bf16.mxu0 0
    %2867 = vmatpush1.bf16.msra.mxu0 0
    %2868 = vmatprep.mubr.bf16.mxu0 0
    %2869 = vmatmul.mubr.bf16.gmra.mrb[0].mxu0 %v2623
    %v2870 = vpop.f32.mrb[0].mxu0
    %v2871 = vadd.f32 0.0, %v2870
    %v2872 = vpop.f32.mrb[0].mxu0
    %v2873 = vadd.f32 0.0, %v2872
    %v2874 = vpop.f32.mrb[0].mxu0
    %v2875 = vpop.f32.mrb[0].mxu0
    %2876 = vdwg.mxu0
    %2877 = vmatprep.subr.bf16.mxu0 %v837
    %2878 = vmatpush1.bf16.msra.mxu0 %v836
    %2879 = vmatprep.subr.bf16.mxu0 %v841
    %2880 = vmatpush1.bf16.msra.mxu0 %v840
    %2881 = vmatprep.subr.bf16.mxu0 %v845
    %2882 = vmatpush1.bf16.msra.mxu0 %v844
    %2883 = vmatprep.subr.bf16.mxu0 %v849
    %2884 = vmatpush1.bf16.msra.mxu0 %v848
    %2885 = vmatprep.subr.bf16.mxu0 %v853
    %2886 = vmatpush1.bf16.msra.mxu0 %v852
    %2887 = vmatprep.subr.bf16.mxu0 %v857
    %2888 = vmatpush1.bf16.msra.mxu0 %v856
    %2889 = vmatprep.subr.bf16.mxu0 %v861
    %2890 = vmatpush1.bf16.msra.mxu0 %v860
    %2891 = vmatprep.subr.bf16.mxu0 %v865
    %2892 = vmatpush1.bf16.msra.mxu0 %v864
    %2893 = vmatprep.subr.bf16.mxu0 0
    %2894 = vmatpush1.bf16.msra.mxu0 0
    %2895 = vmatprep.subr.bf16.mxu0 0
    %2896 = vmatpush1.bf16.msra.mxu0 0
    %2897 = vmatprep.subr.bf16.mxu0 0
    %2898 = vmatpush1.bf16.msra.mxu0 0
    %2899 = vmatprep.subr.bf16.mxu0 0
    %2900 = vmatpush1.bf16.msra.mxu0 0
    %2901 = vmatprep.subr.bf16.mxu0 0
    %2902 = vmatpush1.bf16.msra.mxu0 0
    %2903 = vmatprep.subr.bf16.mxu0 0
    %2904 = vmatpush1.bf16.msra.mxu0 0
    %2905 = vmatprep.subr.bf16.mxu0 0
    %2906 = vmatpush1.bf16.msra.mxu0 0
    %2907 = vmatprep.subr.bf16.mxu0 0
    %2908 = vmatpush1.bf16.msra.mxu0 0
    %2909 = vmatprep.mubr.bf16.mxu0 0
    %2910 = vmatmul.mubr.bf16.gmra.mrb[0].mxu0 %v2623
    %v2911 = vpop.f32.mrb[0].mxu0
    %v2912 = vadd.f32 0.0, %v2911
    %v2913 = vpop.f32.mrb[0].mxu0
    %v2914 = vadd.f32 0.0, %v2913
    %v2915 = vpop.f32.mrb[0].mxu0
    %v2916 = vpop.f32.mrb[0].mxu0
    %2917 = vdwg.mxu0
    %v2918 = vadd.f32 %v2832, %v2871
    %v2919 = vadd.f32 %v2833, %v2873
    %v2920 = vadd.f32 %v2834, %v2912
    %v2921 = vadd.f32 %v2835, %v2914
    %v2922 = vxor.u32 %v2918, 2147483648
    %v2923 = vmul.f32 %v2922, 1.442695
    %v2924 = vpow.pop %v2923
    %v2925 = vadd.f32 %v2924, 1.0
    %v2926 = vrcp.pop %v2925
    %v2927 = vmul.f32 1.0, %v2926
    %v2928 = vxor.u32 %v2919, 2147483648
    %v2929 = vmul.f32 %v2928, 1.442695
    %v2930 = vpow.pop %v2929
    %v2931 = vadd.f32 %v2930, 1.0
    %v2932 = vrcp.pop %v2931
    %v2933 = vmul.f32 1.0, %v2932
    %v2934 = vtanh.pop %v2920
    %v2935 = vxor.u32 %v2921, 2147483648
    %v2936 = vmul.f32 %v2935, 1.442695
    %v2937 = vpow.pop %v2936
    %v2938 = vadd.f32 %v2937, 1.0
    %v2939 = vrcp.pop %v2938
    %v2940 = vmul.f32 1.0, %v2939
    %v2941 = vmul.f32 %v2933, %v2620
    %v2942 = vmul.f32 %v2927, %v2934
    %v2943 = vadd.f32 %v2941, %v2942
    %v2944 = vtanh.pop %v2943
    %v2945 = vmul.f32 %v2940, %v2944
    %v2946 = vpack.c.bf16 %v2945, %v2945
    %s2947 = scalar_lea.vmem %s0, 14
    %v2948 = vld [vmem:[%s2947] sm:$0x3]
    %2950 = vset.pattern.permute.xlu0 0
    %2951 = vperm.xlu0 %2950, %v2948
    %v2952 = vpop.permute.xlu0 %2951
    %v2954 = vmul.f32 %v2952, %v100
    %v2955 = vmul.f32 %v2952, %v104
    %v2956 = vmul.f32 %v2952, %v108
    %v2957 = vmul.f32 %v2952, %v112
    %v2958 = vadd.f32 %v48, %v2954
    %v2959 = vadd.f32 %v52, %v2955
    %v2960 = vadd.f32 %v56, %v2956
    %v2961 = vadd.f32 %v60, %v2957
    %2962 = vmatprep.subr.bf16.mxu0 %v254
    %2963 = vmatpush1.bf16.msra.mxu0 %v253
    %2964 = vmatprep.subr.bf16.mxu0 %v258
    %2965 = vmatpush1.bf16.msra.mxu0 %v257
    %2966 = vmatprep.subr.bf16.mxu0 %v262
    %2967 = vmatpush1.bf16.msra.mxu0 %v261
    %2968 = vmatprep.subr.bf16.mxu0 %v266
    %2969 = vmatpush1.bf16.msra.mxu0 %v265
    %2970 = vmatprep.subr.bf16.mxu0 %v270
    %2971 = vmatpush1.bf16.msra.mxu0 %v269
    %2972 = vmatprep.subr.bf16.mxu0 %v274
    %2973 = vmatpush1.bf16.msra.mxu0 %v273
    %2974 = vmatprep.subr.bf16.mxu0 %v278
    %2975 = vmatpush1.bf16.msra.mxu0 %v277
    %2976 = vmatprep.subr.bf16.mxu0 %v282
    %2977 = vmatpush1.bf16.msra.mxu0 %v281
    %2978 = vmatprep.subr.bf16.mxu0 0
    %2979 = vmatpush1.bf16.msra.mxu0 0
    %2980 = vmatprep.subr.bf16.mxu0 0
    %2981 = vmatpush1.bf16.msra.mxu0 0
    %2982 = vmatprep.subr.bf16.mxu0 0
    %2983 = vmatpush1.bf16.msra.mxu0 0
    %2984 = vmatprep.subr.bf16.mxu0 0
    %2985 = vmatpush1.bf16.msra.mxu0 0
    %2986 = vmatprep.subr.bf16.mxu0 0
    %2987 = vmatpush1.bf16.msra.mxu0 0
    %2988 = vmatprep.subr.bf16.mxu0 0
    %2989 = vmatpush1.bf16.msra.mxu0 0
    %2990 = vmatprep.subr.bf16.mxu0 0
    %2991 = vmatpush1.bf16.msra.mxu0 0
    %2992 = vmatprep.subr.bf16.mxu0 0
    %2993 = vmatpush1.bf16.msra.mxu0 0
    %2994 = vmatprep.mubr.bf16.mxu0 0
    %2995 = vmatmul.mubr.bf16.gmra.mrb[0].mxu0 %v2749
    %v2996 = vpop.f32.mrb[0].mxu0
    %v2997 = vadd.f32 0.0, %v2996
    %v2998 = vpop.f32.mrb[0].mxu0
    %v2999 = vadd.f32 0.0, %v2998
    %v3000 = vpop.f32.mrb[0].mxu0
    %v3001 = vpop.f32.mrb[0].mxu0
    %3002 = vdwg.mxu0
    %3003 = vmatprep.subr.bf16.mxu0 %v256
    %3004 = vmatpush1.bf16.msra.mxu0 %v255
    %3005 = vmatprep.subr.bf16.mxu0 %v260
    %3006 = vmatpush1.bf16.msra.mxu0 %v259
    %3007 = vmatprep.subr.bf16.mxu0 %v264
    %3008 = vmatpush1.bf16.msra.mxu0 %v263
    %3009 = vmatprep.subr.bf16.mxu0 %v268
    %3010 = vmatpush1.bf16.msra.mxu0 %v267
    %3011 = vmatprep.subr.bf16.mxu0 %v272
    %3012 = vmatpush1.bf16.msra.mxu0 %v271
    %3013 = vmatprep.subr.bf16.mxu0 %v276
    %3014 = vmatpush1.bf16.msra.mxu0 %v275
    %3015 = vmatprep.subr.bf16.mxu0 %v280
    %3016 = vmatpush1.bf16.msra.mxu0 %v279
    %3017 = vmatprep.subr.bf16.mxu0 %v284
    %3018 = vmatpush1.bf16.msra.mxu0 %v283
    %3019 = vmatprep.subr.bf16.mxu0 0
    %3020 = vmatpush1.bf16.msra.mxu0 0
    %3021 = vmatprep.subr.bf16.mxu0 0
    %3022 = vmatpush1.bf16.msra.mxu0 0
    %3023 = vmatprep.subr.bf16.mxu0 0
    %3024 = vmatpush1.bf16.msra.mxu0 0
    %3025 = vmatprep.subr.bf16.mxu0 0
    %3026 = vmatpush1.bf16.msra.mxu0 0
    %3027 = vmatprep.subr.bf16.mxu0 0
    %3028 = vmatpush1.bf16.msra.mxu0 0
    %3029 = vmatprep.subr.bf16.mxu0 0
    %3030 = vmatpush1.bf16.msra.mxu0 0
    %3031 = vmatprep.subr.bf16.mxu0 0
    %3032 = vmatpush1.bf16.msra.mxu0 0
    %3033 = vmatprep.subr.bf16.mxu0 0
    %3034 = vmatpush1.bf16.msra.mxu0 0
    %3035 = vmatprep.mubr.bf16.mxu0 0
    %3036 = vmatmul.mubr.bf16.gmra.mrb[0].mxu0 %v2749
    %v3037 = vpop.f32.mrb[0].mxu0
    %v3038 = vadd.f32 0.0, %v3037
    %v3039 = vpop.f32.mrb[0].mxu0
    %v3040 = vadd.f32 0.0, %v3039
    %v3041 = vpop.f32.mrb[0].mxu0
    %v3042 = vpop.f32.mrb[0].mxu0
    %3043 = vdwg.mxu0
    %v3044 = vadd.f32 %v2958, %v2997
    %v3045 = vadd.f32 %v2959, %v2999
    %v3046 = vadd.f32 %v2960, %v3038
    %v3047 = vadd.f32 %v2961, %v3040
    %v3048 = vxor.u32 %v3044, 2147483648
    %v3049 = vmul.f32 %v3048, 1.442695
    %v3050 = vpow.pop %v3049
    %v3051 = vadd.f32 %v3050, 1.0
    %v3052 = vrcp.pop %v3051
    %v3053 = vmul.f32 1.0, %v3052
    %v3054 = vxor.u32 %v3045, 2147483648
    %v3055 = vmul.f32 %v3054, 1.442695
    %v3056 = vpow.pop %v3055
    %v3057 = vadd.f32 %v3056, 1.0
    %v3058 = vrcp.pop %v3057
    %v3059 = vmul.f32 1.0, %v3058
    %v3060 = vtanh.pop %v3046
    %v3061 = vxor.u32 %v3047, 2147483648
    %v3062 = vmul.f32 %v3061, 1.442695
    %v3063 = vpow.pop %v3062
    %v3064 = vadd.f32 %v3063, 1.0
    %v3065 = vrcp.pop %v3064
    %v3066 = vmul.f32 1.0, %v3065
    %v3067 = vmul.f32 %v3059, %v2746
    %v3068 = vmul.f32 %v3053, %v3060
    %v3069 = vadd.f32 %v3067, %v3068
    %v3070 = vtanh.pop %v3069
    %v3071 = vmul.f32 %v3066, %v3070
    %v3072 = vpack.c.bf16 %v3071, %v3071
    %3073 = vmatprep.subr.bf16.mxu0 %v557
    %3074 = vmatpush1.bf16.msra.mxu0 %v556
    %3075 = vmatprep.subr.bf16.mxu0 %v561
    %3076 = vmatpush1.bf16.msra.mxu0 %v560
    %3077 = vmatprep.subr.bf16.mxu0 %v565
    %3078 = vmatpush1.bf16.msra.mxu0 %v564
    %3079 = vmatprep.subr.bf16.mxu0 %v569
    %3080 = vmatpush1.bf16.msra.mxu0 %v568
    %3081 = vmatprep.subr.bf16.mxu0 %v573
    %3082 = vmatpush1.bf16.msra.mxu0 %v572
    %3083 = vmatprep.subr.bf16.mxu0 %v577
    %3084 = vmatpush1.bf16.msra.mxu0 %v576
    %3085 = vmatprep.subr.bf16.mxu0 %v581
    %3086 = vmatpush1.bf16.msra.mxu0 %v580
    %3087 = vmatprep.subr.bf16.mxu0 %v585
    %3088 = vmatpush1.bf16.msra.mxu0 %v584
    %3089 = vmatprep.subr.bf16.mxu0 0
    %3090 = vmatpush1.bf16.msra.mxu0 0
    %3091 = vmatprep.subr.bf16.mxu0 0
    %3092 = vmatpush1.bf16.msra.mxu0 0
    %3093 = vmatprep.subr.bf16.mxu0 0
    %3094 = vmatpush1.bf16.msra.mxu0 0
    %3095 = vmatprep.subr.bf16.mxu0 0
    %3096 = vmatpush1.bf16.msra.mxu0 0
    %3097 = vmatprep.subr.bf16.mxu0 0
    %3098 = vmatpush1.bf16.msra.mxu0 0
    %3099 = vmatprep.subr.bf16.mxu0 0
    %3100 = vmatpush1.bf16.msra.mxu0 0
    %3101 = vmatprep.subr.bf16.mxu0 0
    %3102 = vmatpush1.bf16.msra.mxu0 0
    %3103 = vmatprep.subr.bf16.mxu0 0
    %3104 = vmatpush1.bf16.msra.mxu0 0
    %3105 = vmatprep.mubr.bf16.mxu0 0
    %3106 = vmatmul.mubr.bf16.gmra.mrb[0].mxu0 %v3072
    %v3107 = vpop.f32.mrb[0].mxu0
    %v3108 = vadd.f32 0.0, %v3107
    %v3109 = vpop.f32.mrb[0].mxu0
    %v3110 = vadd.f32 0.0, %v3109
    %v3111 = vpop.f32.mrb[0].mxu0
    %v3112 = vpop.f32.mrb[0].mxu0
    %3113 = vdwg.mxu0
    %3114 = vmatprep.subr.bf16.mxu0 %v559
    %3115 = vmatpush1.bf16.msra.mxu0 %v558
    %3116 = vmatprep.subr.bf16.mxu0 %v563
    %3117 = vmatpush1.bf16.msra.mxu0 %v562
    %3118 = vmatprep.subr.bf16.mxu0 %v567
    %3119 = vmatpush1.bf16.msra.mxu0 %v566
    %3120 = vmatprep.subr.bf16.mxu0 %v571
    %3121 = vmatpush1.bf16.msra.mxu0 %v570
    %3122 = vmatprep.subr.bf16.mxu0 %v575
    %3123 = vmatpush1.bf16.msra.mxu0 %v574
    %3124 = vmatprep.subr.bf16.mxu0 %v579
    %3125 = vmatpush1.bf16.msra.mxu0 %v578
    %3126 = vmatprep.subr.bf16.mxu0 %v583
    %3127 = vmatpush1.bf16.msra.mxu0 %v582
    %3128 = vmatprep.subr.bf16.mxu0 %v587
    %3129 = vmatpush1.bf16.msra.mxu0 %v586
    %3130 = vmatprep.subr.bf16.mxu0 0
    %3131 = vmatpush1.bf16.msra.mxu0 0
    %3132 = vmatprep.subr.bf16.mxu0 0
    %3133 = vmatpush1.bf16.msra.mxu0 0
    %3134 = vmatprep.subr.bf16.mxu0 0
    %3135 = vmatpush1.bf16.msra.mxu0 0
    %3136 = vmatprep.subr.bf16.mxu0 0
    %3137 = vmatpush1.bf16.msra.mxu0 0
    %3138 = vmatprep.subr.bf16.mxu0 0
    %3139 = vmatpush1.bf16.msra.mxu0 0
    %3140 = vmatprep.subr.bf16.mxu0 0
    %3141 = vmatpush1.bf16.msra.mxu0 0
    %3142 = vmatprep.subr.bf16.mxu0 0
    %3143 = vmatpush1.bf16.msra.mxu0 0
    %3144 = vmatprep.subr.bf16.mxu0 0
    %3145 = vmatpush1.bf16.msra.mxu0 0
    %3146 = vmatprep.mubr.bf16.mxu0 0
    %3147 = vmatmul.mubr.bf16.gmra.mrb[0].mxu0 %v3072
    %v3148 = vpop.f32.mrb[0].mxu0
    %v3149 = vadd.f32 0.0, %v3148
    %v3150 = vpop.f32.mrb[0].mxu0
    %v3151 = vadd.f32 0.0, %v3150
    %v3152 = vpop.f32.mrb[0].mxu0
    %v3153 = vpop.f32.mrb[0].mxu0
    %3154 = vdwg.mxu0
    %v3155 = vadd.f32 %v71, %v3108
    %v3156 = vadd.f32 %v75, %v3110
    %v3157 = vadd.f32 %v79, %v3149
    %v3158 = vadd.f32 %v83, %v3151
    %3159 = vmatprep.subr.bf16.mxu0 %v835
    %3160 = vmatpush1.bf16.msra.mxu0 %v834
    %3161 = vmatprep.subr.bf16.mxu0 %v839
    %3162 = vmatpush1.bf16.msra.mxu0 %v838
    %3163 = vmatprep.subr.bf16.mxu0 %v843
    %3164 = vmatpush1.bf16.msra.mxu0 %v842
    %3165 = vmatprep.subr.bf16.mxu0 %v847
    %3166 = vmatpush1.bf16.msra.mxu0 %v846
    %3167 = vmatprep.subr.bf16.mxu0 %v851
    %3168 = vmatpush1.bf16.msra.mxu0 %v850
    %3169 = vmatprep.subr.bf16.mxu0 %v855
    %3170 = vmatpush1.bf16.msra.mxu0 %v854
    %3171 = vmatprep.subr.bf16.mxu0 %v859
    %3172 = vmatpush1.bf16.msra.mxu0 %v858
    %3173 = vmatprep.subr.bf16.mxu0 %v863
    %3174 = vmatpush1.bf16.msra.mxu0 %v862
    %3175 = vmatprep.subr.bf16.mxu0 0
    %3176 = vmatpush1.bf16.msra.mxu0 0
    %3177 = vmatprep.subr.bf16.mxu0 0
    %3178 = vmatpush1.bf16.msra.mxu0 0
    %3179 = vmatprep.subr.bf16.mxu0 0
    %3180 = vmatpush1.bf16.msra.mxu0 0
    %3181 = vmatprep.subr.bf16.mxu0 0
    %3182 = vmatpush1.bf16.msra.mxu0 0
    %3183 = vmatprep.subr.bf16.mxu0 0
    %3184 = vmatpush1.bf16.msra.mxu0 0
    %3185 = vmatprep.subr.bf16.mxu0 0
    %3186 = vmatpush1.bf16.msra.mxu0 0
    %3187 = vmatprep.subr.bf16.mxu0 0
    %3188 = vmatpush1.bf16.msra.mxu0 0
    %3189 = vmatprep.subr.bf16.mxu0 0
    %3190 = vmatpush1.bf16.msra.mxu0 0
    %3191 = vmatprep.mubr.bf16.mxu0 0
    %3192 = vmatmul.mubr.bf16.gmra.mrb[0].mxu0 %v2946
    %v3193 = vpop.f32.mrb[0].mxu0
    %v3194 = vadd.f32 0.0, %v3193
    %v3195 = vpop.f32.mrb[0].mxu0
    %v3196 = vadd.f32 0.0, %v3195
    %v3197 = vpop.f32.mrb[0].mxu0
    %v3198 = vpop.f32.mrb[0].mxu0
    %3199 = vdwg.mxu0
    %3200 = vmatprep.subr.bf16.mxu0 %v837
    %3201 = vmatpush1.bf16.msra.mxu0 %v836
    %3202 = vmatprep.subr.bf16.mxu0 %v841
    %3203 = vmatpush1.bf16.msra.mxu0 %v840
    %3204 = vmatprep.subr.bf16.mxu0 %v845
    %3205 = vmatpush1.bf16.msra.mxu0 %v844
    %3206 = vmatprep.subr.bf16.mxu0 %v849
    %3207 = vmatpush1.bf16.msra.mxu0 %v848
    %3208 = vmatprep.subr.bf16.mxu0 %v853
    %3209 = vmatpush1.bf16.msra.mxu0 %v852
    %3210 = vmatprep.subr.bf16.mxu0 %v857
    %3211 = vmatpush1.bf16.msra.mxu0 %v856
    %3212 = vmatprep.subr.bf16.mxu0 %v861
    %3213 = vmatpush1.bf16.msra.mxu0 %v860
    %3214 = vmatprep.subr.bf16.mxu0 %v865
    %3215 = vmatpush1.bf16.msra.mxu0 %v864
    %3216 = vmatprep.subr.bf16.mxu0 0
    %3217 = vmatpush1.bf16.msra.mxu0 0
    %3218 = vmatprep.subr.bf16.mxu0 0
    %3219 = vmatpush1.bf16.msra.mxu0 0
    %3220 = vmatprep.subr.bf16.mxu0 0
    %3221 = vmatpush1.bf16.msra.mxu0 0
    %3222 = vmatprep.subr.bf16.mxu0 0
    %3223 = vmatpush1.bf16.msra.mxu0 0
    %3224 = vmatprep.subr.bf16.mxu0 0
    %3225 = vmatpush1.bf16.msra.mxu0 0
    %3226 = vmatprep.subr.bf16.mxu0 0
    %3227 = vmatpush1.bf16.msra.mxu0 0
    %3228 = vmatprep.subr.bf16.mxu0 0
    %3229 = vmatpush1.bf16.msra.mxu0 0
    %3230 = vmatprep.subr.bf16.mxu0 0
    %3231 = vmatpush1.bf16.msra.mxu0 0
    %3232 = vmatprep.mubr.bf16.mxu0 0
    %3233 = vmatmul.mubr.bf16.gmra.mrb[0].mxu0 %v2946
    %v3234 = vpop.f32.mrb[0].mxu0
    %v3235 = vadd.f32 0.0, %v3234
    %v3236 = vpop.f32.mrb[0].mxu0
    %v3237 = vadd.f32 0.0, %v3236
    %v3238 = vpop.f32.mrb[0].mxu0
    %v3239 = vpop.f32.mrb[0].mxu0
    %3240 = vdwg.mxu0
    %v3241 = vadd.f32 %v3155, %v3194
    %v3242 = vadd.f32 %v3156, %v3196
    %v3243 = vadd.f32 %v3157, %v3235
    %v3244 = vadd.f32 %v3158, %v3237
    %v3245 = vxor.u32 %v3241, 2147483648
    %v3246 = vmul.f32 %v3245, 1.442695
    %v3247 = vpow.pop %v3246
    %v3248 = vadd.f32 %v3247, 1.0
    %v3249 = vrcp.pop %v3248
    %v3250 = vmul.f32 1.0, %v3249
    %v3251 = vxor.u32 %v3242, 2147483648
    %v3252 = vmul.f32 %v3251, 1.442695
    %v3253 = vpow.pop %v3252
    %v3254 = vadd.f32 %v3253, 1.0
    %v3255 = vrcp.pop %v3254
    %v3256 = vmul.f32 1.0, %v3255
    %v3257 = vtanh.pop %v3243
    %v3258 = vxor.u32 %v3244, 2147483648
    %v3259 = vmul.f32 %v3258, 1.442695
    %v3260 = vpow.pop %v3259
    %v3261 = vadd.f32 %v3260, 1.0
    %v3262 = vrcp.pop %v3261
    %v3263 = vmul.f32 1.0, %v3262
    %v3264 = vmul.f32 %v3256, %v2943
    %v3265 = vmul.f32 %v3250, %v3257
    %v3266 = vadd.f32 %v3264, %v3265
    %v3267 = vtanh.pop %v3266
    %v3268 = vmul.f32 %v3263, %v3267
    %v3269 = vmul.f32 %v3268, %v88
    %vm3270 = vcmask 1041408
    %v3271 = vsel %vm3270, %v3269, 0.0
    %3272 = vadd.xlane.f32.xlu0 %v3271
    %v3273 = vpop.xlane.xlu0 %3272
    %v3274 = vadd.f32 %v3273, %v89
    %vm3275 = vcmask 1024
    %3276 = vst.msk [vmem:[%s3] sm:$0x3] %vm3275, %v3274
    // Predicated region
    $region22: #{tpu_custom_call.1} parent=1 // pred_check
      _
    $region23: #{tpu_custom_call.1} parent=1 // pred_check_branch
      %3278 = sbr.rel (0) target = $region25
    $region24: #{tpu_custom_call.1} parent=1 // pred_region
      _
    $region25: #{tpu_custom_call.1} parent=1 // pred_fallthru
      _
    // Predicated region
    $region26: #{tpu_custom_call.1} parent=1 // pred_check
      _
    $region27: #{tpu_custom_call.1} parent=1 // pred_check_branch
      %3280 = sbr.rel (0) target = $region29
    $region28: #{tpu_custom_call.1} parent=1 // pred_region
      _
    $region29: #{tpu_custom_call.1} parent=1 // pred_fallthru
      _
    %3281 = vsyncpa [#allocation3], 1
    %3282 = vsyncpa [#allocation5], 1

</llo_original>
